<compile_context>
chip_gen: v5e
topology: v5e:2x2
jax: 0.10.0
libtpu: 0.0.40
codegen_flags: <defaults>
</compile_context>

<pallas_src>
import jax
import jax.numpy as jnp
from jax.experimental import pallas as pl
from jax.experimental.pallas import tpu as pltpu

_LANE = 128


def _convblock_kernel(x_ref, w1_ref, b1_ref, w2_ref, b2_ref, o_ref,
                      xpad_ref, ypad_ref):
    """Fused ConvBlock for one batch tile.

    x_ref  : (B, H, W, Cin)            input block (compute dtype)
    w1_ref : (3, 3*Cin,  Cp)           conv1 taps per dy, BN1 scale folded
    b1_ref : (1, Cp)                   folded BN1 bias (f32)
    w2_ref : (3, 3*Cp,   Cp)           conv2 taps per dy, BN2 scale folded
    b2_ref : (1, Cp)                   folded BN2 bias (f32)
    o_ref  : (B, H//2, W//2, Cp)       pooled output (lane-dense, f32)
    xpad_ref : VMEM (B, H+2, W+2, Cin) zero-halo'd input          (compute dtype)
    ypad_ref : VMEM (B, H+2, W+2, Cp)  zero-halo'd conv1 activation (compute dtype)
    """
    B, H, W, _ = x_ref.shape
    Cp = o_ref.shape[-1]
    Hp, Wp = H // 2, W // 2
    M = B * H * W

    # ---- zero only the 1-pixel halo strips (interior is fully overwritten).
    # Done every grid step (megacore-safe: each core owns its own scratch).
    def zero_halo(ref):
        b, h2, w2, c = ref.shape
        z_row = jnp.zeros((b, 1, w2, c), ref.dtype)
        z_col = jnp.zeros((b, h2, 1, c), ref.dtype)
        ref[:, 0:1, :, :] = z_row
        ref[:, h2 - 1:h2, :, :] = z_row
        ref[:, :, 0:1, :] = z_col
        ref[:, :, w2 - 1:w2, :] = z_col

    zero_halo(xpad_ref)
    zero_halo(ypad_ref)

    # Input is already in compute dtype (cast once in the wrapper).
    xpad_ref[:, 1:H + 1, 1:W + 1, :] = x_ref[...].astype(xpad_ref.dtype)

    def conv3x3_bn_relu(src_ref, w_ref, b_ref):
        """3x3 'same' conv + folded-BN bias + ReLU -> (M, Cp) f32."""
        c = src_ref.shape[-1]
        lane_aligned = (c % _LANE == 0)
        acc = None
        for dy in range(3):                         # unrolled, 3 iterations
            w_dy = w_ref[dy]                        # (3*c, Cp)
            if lane_aligned:
                # One K = 3*c contraction per dy: concat the 3 dx taps on the
                # lane axis (tile-aligned offsets 0, c, 2c) -> single MXU push
                # chain, 9x fewer result pops than per-tap dots.
                chunk = jnp.concatenate(
                    [src_ref[:, dy:dy + H, dx:dx + W, :] for dx in range(3)],
                    axis=-1).reshape(M, 3 * c)
                part = jnp.dot(chunk, w_dy,
                               preferred_element_type=jnp.float32)
            else:
                # Tiny-channel fallback (stage 1, Cin=4): per-tap dots; the
                # lane concat would only add relayout work at this width.
                part = None
                for dx in range(3):
                    patch = src_ref[:, dy:dy + H, dx:dx + W, :].reshape(M, c)
                    p = jnp.dot(patch, w_dy[dx * c:(dx + 1) * c, :],
                                preferred_element_type=jnp.float32)
                    part = p if part is None else part + p
            acc = part if acc is None else acc + part
        return jnp.maximum(acc + b_ref[...], 0.0)   # (M, Cp) f32

    # ---- stage 1: conv1 + BN1 + ReLU -> padded VMEM scratch (stays on-chip).
    y1 = conv3x3_bn_relu(xpad_ref, w1_ref, b1_ref)
    ypad_ref[:, 1:H + 1, 1:W + 1, :] = (
        y1.reshape(B, H, W, Cp).astype(ypad_ref.dtype))   # cast once

    # ---- stage 2: conv2 + BN2 + ReLU.
    y2 = conv3x3_bn_relu(ypad_ref, w2_ref, b2_ref)        # (M, Cp) f32

    # ---- 2x2 average pool.
    # H pairs: leading-dim split (free).  W pairs: last-dim-preserving reshape
    # + index on the size-2 dim (sublane gather; tiny at these sizes).
    y2 = y2.reshape(B, Hp, 2, W, Cp)
    rows = y2[:, :, 0, :, :] + y2[:, :, 1, :, :]           # (B, Hp, W, Cp)
    rows = rows.reshape(B, Hp, Wp, 2, Cp)
    pooled = 0.25 * (rows[:, :, :, 0, :] + rows[:, :, :, 1, :])
    o_ref[...] = pooled.astype(o_ref.dtype)                 # lane-dense store


def conv_block_forward(x_nchw, params, pool_size=(2, 2), pool_type='avg',
                       compute_dtype=jnp.float32, batch_tile=1):
    """Pallas equivalent of ConvBlock.forward (default pool_size/pool_type)."""
    assert pool_type == 'avg' and tuple(pool_size) == (2, 2)
    w1p, b1p, w2p, b2p, c_out = params
    x = jnp.transpose(x_nchw, (0, 2, 3, 1)).astype(compute_dtype)  # NCHW->NHWC
    N, H, W, Cin = x.shape
    Cp = w1p.shape[-1]
    assert H % 2 == 0 and W % 2 == 0 and N % batch_tile == 0
    Hp, Wp = H // 2, W // 2
    B = batch_tile

    w1c = w1p.astype(compute_dtype)
    w2c = w2p.astype(compute_dtype)

    out = pl.pallas_call(
        _convblock_kernel,
        out_shape=jax.ShapeDtypeStruct((N, Hp, Wp, Cp), jnp.float32),
        grid=(N // B,),
        in_specs=[
            pl.BlockSpec((B, H, W, Cin), lambda n: (n, 0, 0, 0)),
            pl.BlockSpec(w1c.shape, lambda n: (0, 0, 0)),
            pl.BlockSpec(b1p.shape, lambda n: (0, 0)),
            pl.BlockSpec(w2c.shape, lambda n: (0, 0, 0)),
            pl.BlockSpec(b2p.shape, lambda n: (0, 0)),
        ],
        out_specs=pl.BlockSpec((B, Hp, Wp, Cp), lambda n: (n, 0, 0, 0)),
        scratch_shapes=[
            pltpu.VMEM((B, H + 2, W + 2, Cin), compute_dtype),
            pltpu.VMEM((B, H + 2, W + 2, Cp), compute_dtype),
        ],
        compiler_params=pltpu.CompilerParams(
            dimension_semantics=("parallel",),
            vmem_limit_bytes=32 * 1024 * 1024),
    )(x, w1c, b1p, w2c, b2p)

    out = out[..., :c_out]                        # drop channel-lane padding
    return jnp.transpose(out, (0, 3, 1, 2))       # NHWC -> NCHW


def init_convblock_params(key, in_channels, out_channels, eps=1e-5):
    """Deterministic params matching ConvBlock.__init__ (xavier_uniform conv, BN init)."""
    k1, k2 = jax.random.split(key)

    def xavier_uniform(k, cout, cin):
        fan_in, fan_out = cin * 9, cout * 9
        bound = (6.0 / (fan_in + fan_out)) ** 0.5
        return jax.random.uniform(k, (cout, cin, 3, 3), jnp.float32, -bound, bound)

    w1 = xavier_uniform(k1, out_channels, in_channels)   # OIHW like PyTorch
    w2 = xavier_uniform(k2, out_channels, out_channels)

    # Folded eval-mode BatchNorm: gamma=1, beta=0, running_mean=0, running_var=1.
    scale = jnp.full((out_channels,), 1.0 / jnp.sqrt(1.0 + eps), jnp.float32)
    cpad = ((out_channels + _LANE - 1) // _LANE) * _LANE   # lane-dense channels

    def to_taps(w, s, cin_pad, cout_pad):
        # OIHW -> (3, 3*cin_pad, cout_pad); middle index = dx*cin_pad + ci,
        # matching the kernel's dx-concat order; BN scale folded in.
        cout, cin = w.shape[0], w.shape[1]
        t = jnp.transpose(w, (2, 3, 1, 0)) * s[None, None, None, :]
        t = jnp.pad(t, ((0, 0), (0, 0), (0, cin_pad - cin), (0, cout_pad - cout)))
        return t.reshape(3, 3 * cin_pad, cout_pad)

    bias = jnp.zeros((1, cpad), jnp.float32)   # beta - mean*scale = 0 at init

    params = (to_taps(w1, scale, in_channels, cpad), bias,
              to_taps(w2, scale, cpad, cpad), bias,
              out_channels)
    return (w1, w2), params


def _reference(x_nchw, w1_oihw, w2_oihw, eps=1e-5):
    """Pure-JAX reference (XLA conv) for correctness checking."""
    def conv(x, w):
        return jax.lax.conv_general_dilated(
            x, w, window_strides=(1, 1), padding=((1, 1), (1, 1)),
            dimension_numbers=('NCHW', 'OIHW', 'NCHW'))
    s = 1.0 / jnp.sqrt(1.0 + eps)
    y = jnp.maximum(conv(x_nchw, w1_oihw) * s, 0.0)
    y = jnp.maximum(conv(y, w2_oihw) * s, 0.0)
    N, C, H, W = y.shape
    return y.reshape(N, C, H // 2, 2, W // 2, 2).mean(axis=(3, 5))


if __name__ == "__main__":
    key = jax.random.PRNGKey(0)
    kx, kp = jax.random.split(key)
    N, Cin, Cout, H, W = 2, 4, 8, 16, 16
    x = jax.random.normal(kx, (N, Cin, H, W), jnp.float32)
    (w1, w2), params = init_convblock_params(kp, Cin, Cout)

    ref = _reference(x, w1, w2)

    # f32 path, one image per grid step (grid has 2 parallel steps).
    out = jax.block_until_ready(conv_block_forward(x, params))
    assert out.shape == (N, Cout, H // 2, W // 2), out.shape
    err = float(jnp.max(jnp.abs(out - ref)))
    assert jnp.allclose(out, ref, atol=2e-4, rtol=2e-4), f"f32 err={err}"

    # Batched grid step (2 images flattened into M) — exercises batch_tile > 1.
    x4 = jnp.concatenate([x, x[::-1]], axis=0)
    ref4 = _reference(x4, w1, w2)
    out4 = jax.block_until_ready(conv_block_forward(x4, params, batch_tile=2))
    err4 = float(jnp.max(jnp.abs(out4 - ref4)))
    assert jnp.allclose(out4, ref4, atol=2e-4, rtol=2e-4), f"batched err={err4}"

    # bf16 matmul operands / bf16 scratch with f32 accumulation (MXU path);
    # loose sanity bound only — structural bugs would be O(1) off.
    out_bf16 = jax.block_until_ready(
        conv_block_forward(x, params, compute_dtype=jnp.bfloat16))
    err_bf16 = float(jnp.max(jnp.abs(out_bf16 - ref)))
    assert err_bf16 < 0.25, f"bf16 err={err_bf16}"

    print("KERNEL_OK")
</pallas_src>

<mosaic_0001>
module attributes {stable_mosaic.version = 11 : i64} {
  func.func @_convblock_kernel(%arg0: i32, %arg1: memref<1x16x16x4xf32, #tpu.memory_space<vmem>>, %arg2: memref<3x12x128xf32, #tpu.memory_space<vmem>>, %arg3: memref<1x128xf32, #tpu.memory_space<vmem>>, %arg4: memref<3x384x128xf32, #tpu.memory_space<vmem>>, %arg5: memref<1x128xf32, #tpu.memory_space<vmem>>, %arg6: memref<1x8x8x128xf32, #tpu.memory_space<vmem>>, %arg7: memref<1x18x18x4xf32, #tpu.memory_space<vmem>>, %arg8: memref<1x18x18x128xf32, #tpu.memory_space<vmem>>) attributes {dimension_semantics = [#tpu.dimension_semantics<parallel>], iteration_bounds = array<i64: 2>, scalar_prefetch = 0 : i64, scratch_operands = 2 : i64, tpu.core_type = #tpu.core_type<tc>, window_params = [{transform_indices = @transform_0, window_bounds = array<i64: 1, 16, 16, 4>}, {pipeline_mode = #tpu.pipeline_mode<synchronous>, transform_indices = @transform_1, window_bounds = array<i64: 3, 12, 128>}, {pipeline_mode = #tpu.pipeline_mode<synchronous>, transform_indices = @transform_2, window_bounds = array<i64: 1, 128>}, {pipeline_mode = #tpu.pipeline_mode<synchronous>, transform_indices = @transform_3, window_bounds = array<i64: 3, 384, 128>}, {pipeline_mode = #tpu.pipeline_mode<synchronous>, transform_indices = @transform_4, window_bounds = array<i64: 1, 128>}, {transform_indices = @transform_5, window_bounds = array<i64: 1, 8, 8, 128>}]} {
    %cst = arith.constant 0.000000e+00 : f32
    %0 = vector.broadcast %cst : f32 to vector<1x1x18x4xf32>
    %cst_0 = arith.constant 0.000000e+00 : f32
    %1 = vector.broadcast %cst_0 : f32 to vector<1x18x1x4xf32>
    %c0 = arith.constant 0 : index
    %c0_1 = arith.constant 0 : index
    %c0_2 = arith.constant 0 : index
    %c0_3 = arith.constant 0 : index
    %2 = vector.load %arg7[%c0, %c0_1, %c0_2, %c0_3] : memref<1x18x18x4xf32, #tpu.memory_space<vmem>>, vector<1x1x18x4xf32>
    tpu.vector_store %arg7[%c0, %c0_1, %c0_2, %c0_3], %0 {strides = array<i32>} : memref<1x18x18x4xf32, #tpu.memory_space<vmem>>, vector<1x1x18x4xf32>,
    %c0_4 = arith.constant 0 : index
    %c17 = arith.constant 17 : index
    %c0_5 = arith.constant 0 : index
    %c0_6 = arith.constant 0 : index
    %3 = vector.load %arg7[%c0_4, %c17, %c0_5, %c0_6] : memref<1x18x18x4xf32, #tpu.memory_space<vmem>>, vector<1x1x18x4xf32>
    tpu.vector_store %arg7[%c0_4, %c17, %c0_5, %c0_6], %0 {strides = array<i32>} : memref<1x18x18x4xf32, #tpu.memory_space<vmem>>, vector<1x1x18x4xf32>,
    %c0_7 = arith.constant 0 : index
    %c0_8 = arith.constant 0 : index
    %c0_9 = arith.constant 0 : index
    %c0_10 = arith.constant 0 : index
    %4 = vector.load %arg7[%c0_7, %c0_8, %c0_9, %c0_10] : memref<1x18x18x4xf32, #tpu.memory_space<vmem>>, vector<1x18x1x4xf32>
    tpu.vector_store %arg7[%c0_7, %c0_8, %c0_9, %c0_10], %1 {strides = array<i32>} : memref<1x18x18x4xf32, #tpu.memory_space<vmem>>, vector<1x18x1x4xf32>,
    %c0_11 = arith.constant 0 : index
    %c0_12 = arith.constant 0 : index
    %c17_13 = arith.constant 17 : index
    %c0_14 = arith.constant 0 : index
    %5 = vector.load %arg7[%c0_11, %c0_12, %c17_13, %c0_14] : memref<1x18x18x4xf32, #tpu.memory_space<vmem>>, vector<1x18x1x4xf32>
    tpu.vector_store %arg7[%c0_11, %c0_12, %c17_13, %c0_14], %1 {strides = array<i32>} : memref<1x18x18x4xf32, #tpu.memory_space<vmem>>, vector<1x18x1x4xf32>,
    %cst_15 = arith.constant 0.000000e+00 : f32
    %6 = vector.broadcast %cst_15 : f32 to vector<1x1x18x128xf32>
    %cst_16 = arith.constant 0.000000e+00 : f32
    %7 = vector.broadcast %cst_16 : f32 to vector<1x18x1x128xf32>
    %c0_17 = arith.constant 0 : index
    %c0_18 = arith.constant 0 : index
    %c0_19 = arith.constant 0 : index
    %c0_20 = arith.constant 0 : index
    %8 = vector.load %arg8[%c0_17, %c0_18, %c0_19, %c0_20] : memref<1x18x18x128xf32, #tpu.memory_space<vmem>>, vector<1x1x18x128xf32>
    tpu.vector_store %arg8[%c0_17, %c0_18, %c0_19, %c0_20], %6 {strides = array<i32>} : memref<1x18x18x128xf32, #tpu.memory_space<vmem>>, vector<1x1x18x128xf32>,
    %c0_21 = arith.constant 0 : index
    %c17_22 = arith.constant 17 : index
    %c0_23 = arith.constant 0 : index
    %c0_24 = arith.constant 0 : index
    %9 = vector.load %arg8[%c0_21, %c17_22, %c0_23, %c0_24] : memref<1x18x18x128xf32, #tpu.memory_space<vmem>>, vector<1x1x18x128xf32>
    tpu.vector_store %arg8[%c0_21, %c17_22, %c0_23, %c0_24], %6 {strides = array<i32>} : memref<1x18x18x128xf32, #tpu.memory_space<vmem>>, vector<1x1x18x128xf32>,
    %c0_25 = arith.constant 0 : index
    %c0_26 = arith.constant 0 : index
    %c0_27 = arith.constant 0 : index
    %c0_28 = arith.constant 0 : index
    %10 = vector.load %arg8[%c0_25, %c0_26, %c0_27, %c0_28] : memref<1x18x18x128xf32, #tpu.memory_space<vmem>>, vector<1x18x1x128xf32>
    tpu.vector_store %arg8[%c0_25, %c0_26, %c0_27, %c0_28], %7 {strides = array<i32>} : memref<1x18x18x128xf32, #tpu.memory_space<vmem>>, vector<1x18x1x128xf32>,
    %c0_29 = arith.constant 0 : index
    %c0_30 = arith.constant 0 : index
    %c17_31 = arith.constant 17 : index
    %c0_32 = arith.constant 0 : index
    %11 = vector.load %arg8[%c0_29, %c0_30, %c17_31, %c0_32] : memref<1x18x18x128xf32, #tpu.memory_space<vmem>>, vector<1x18x1x128xf32>
    tpu.vector_store %arg8[%c0_29, %c0_30, %c17_31, %c0_32], %7 {strides = array<i32>} : memref<1x18x18x128xf32, #tpu.memory_space<vmem>>, vector<1x18x1x128xf32>,
    %c0_33 = arith.constant 0 : index
    %c0_34 = arith.constant 0 : index
    %c0_35 = arith.constant 0 : index
    %c0_36 = arith.constant 0 : index
    %12 = vector.load %arg1[%c0_33, %c0_34, %c0_35, %c0_36] : memref<1x16x16x4xf32, #tpu.memory_space<vmem>>, vector<1x16x16x4xf32>
    %c0_37 = arith.constant 0 : index
    %c1 = arith.constant 1 : index
    %c1_38 = arith.constant 1 : index
    %c0_39 = arith.constant 0 : index
    %13 = vector.load %arg7[%c0_37, %c1, %c1_38, %c0_39] : memref<1x18x18x4xf32, #tpu.memory_space<vmem>>, vector<1x16x16x4xf32>
    tpu.vector_store %arg7[%c0_37, %c1, %c1_38, %c0_39], %12 {strides = array<i32>} : memref<1x18x18x4xf32, #tpu.memory_space<vmem>>, vector<1x16x16x4xf32>,
    %c0_40 = arith.constant 0 : index
    %c0_41 = arith.constant 0 : index
    %c0_42 = arith.constant 0 : index
    %14 = vector.load %arg2[%c0_40, %c0_41, %c0_42] : memref<3x12x128xf32, #tpu.memory_space<vmem>>, vector<1x12x128xf32>
    %15 = vector.shape_cast %14 : vector<1x12x128xf32> to vector<12x128xf32>
    %c0_43 = arith.constant 0 : index
    %c0_44 = arith.constant 0 : index
    %c0_45 = arith.constant 0 : index
    %c0_46 = arith.constant 0 : index
    %16 = vector.load %arg7[%c0_43, %c0_44, %c0_45, %c0_46] : memref<1x18x18x4xf32, #tpu.memory_space<vmem>>, vector<1x16x16x4xf32>
    %17 = vector.shape_cast %16 : vector<1x16x16x4xf32> to vector<256x4xf32>
    %18 = vector.extract_strided_slice %15 {offsets = [0, 0], sizes = [4, 128], strides = [1, 1]} : vector<12x128xf32> to vector<4x128xf32>
    %cst_47 = arith.constant dense<0.000000e+00> : vector<256x128xf32>
    %19 = tpu.matmul %17, %18, %cst_47 {dimension_numbers = #tpu.dot_dimension_numbers<[1], [0], [0], [1], [0, 0, 1, 1], [], []>} : vector<256x4xf32>, vector<4x128xf32>, vector<256x128xf32> -> vector<256x128xf32>
    %c0_48 = arith.constant 0 : index
    %c0_49 = arith.constant 0 : index
    %c1_50 = arith.constant 1 : index
    %c0_51 = arith.constant 0 : index
    %20 = vector.load %arg7[%c0_48, %c0_49, %c1_50, %c0_51] : memref<1x18x18x4xf32, #tpu.memory_space<vmem>>, vector<1x16x16x4xf32>
    %21 = vector.shape_cast %20 : vector<1x16x16x4xf32> to vector<256x4xf32>
    %22 = vector.extract_strided_slice %15 {offsets = [4, 0], sizes = [4, 128], strides = [1, 1]} : vector<12x128xf32> to vector<4x128xf32>
    %cst_52 = arith.constant dense<0.000000e+00> : vector<256x128xf32>
    %23 = tpu.matmul %21, %22, %cst_52 {dimension_numbers = #tpu.dot_dimension_numbers<[1], [0], [0], [1], [0, 0, 1, 1], [], []>} : vector<256x4xf32>, vector<4x128xf32>, vector<256x128xf32> -> vector<256x128xf32>
    %24 = arith.addf %19, %23 : vector<256x128xf32>
    %c0_53 = arith.constant 0 : index
    %c0_54 = arith.constant 0 : index
    %c2 = arith.constant 2 : index
    %c0_55 = arith.constant 0 : index
    %25 = vector.load %arg7[%c0_53, %c0_54, %c2, %c0_55] : memref<1x18x18x4xf32, #tpu.memory_space<vmem>>, vector<1x16x16x4xf32>
    %26 = vector.shape_cast %25 : vector<1x16x16x4xf32> to vector<256x4xf32>
    %27 = vector.extract_strided_slice %15 {offsets = [8, 0], sizes = [4, 128], strides = [1, 1]} : vector<12x128xf32> to vector<4x128xf32>
    %cst_56 = arith.constant dense<0.000000e+00> : vector<256x128xf32>
    %28 = tpu.matmul %26, %27, %cst_56 {dimension_numbers = #tpu.dot_dimension_numbers<[1], [0], [0], [1], [0, 0, 1, 1], [], []>} : vector<256x4xf32>, vector<4x128xf32>, vector<256x128xf32> -> vector<256x128xf32>
    %29 = arith.addf %24, %28 : vector<256x128xf32>
    %c1_57 = arith.constant 1 : index
    %c0_58 = arith.constant 0 : index
    %c0_59 = arith.constant 0 : index
    %30 = vector.load %arg2[%c1_57, %c0_58, %c0_59] : memref<3x12x128xf32, #tpu.memory_space<vmem>>, vector<1x12x128xf32>
    %31 = vector.shape_cast %30 : vector<1x12x128xf32> to vector<12x128xf32>
    %c0_60 = arith.constant 0 : index
    %c1_61 = arith.constant 1 : index
    %c0_62 = arith.constant 0 : index
    %c0_63 = arith.constant 0 : index
    %32 = vector.load %arg7[%c0_60, %c1_61, %c0_62, %c0_63] : memref<1x18x18x4xf32, #tpu.memory_space<vmem>>, vector<1x16x16x4xf32>
    %33 = vector.shape_cast %32 : vector<1x16x16x4xf32> to vector<256x4xf32>
    %34 = vector.extract_strided_slice %31 {offsets = [0, 0], sizes = [4, 128], strides = [1, 1]} : vector<12x128xf32> to vector<4x128xf32>
    %cst_64 = arith.constant dense<0.000000e+00> : vector<256x128xf32>
    %35 = tpu.matmul %33, %34, %cst_64 {dimension_numbers = #tpu.dot_dimension_numbers<[1], [0], [0], [1], [0, 0, 1, 1], [], []>} : vector<256x4xf32>, vector<4x128xf32>, vector<256x128xf32> -> vector<256x128xf32>
    %c0_65 = arith.constant 0 : index
    %c1_66 = arith.constant 1 : index
    %c1_67 = arith.constant 1 : index
    %c0_68 = arith.constant 0 : index
    %36 = vector.load %arg7[%c0_65, %c1_66, %c1_67, %c0_68] : memref<1x18x18x4xf32, #tpu.memory_space<vmem>>, vector<1x16x16x4xf32>
    %37 = vector.shape_cast %36 : vector<1x16x16x4xf32> to vector<256x4xf32>
    %38 = vector.extract_strided_slice %31 {offsets = [4, 0], sizes = [4, 128], strides = [1, 1]} : vector<12x128xf32> to vector<4x128xf32>
    %cst_69 = arith.constant dense<0.000000e+00> : vector<256x128xf32>
    %39 = tpu.matmul %37, %38, %cst_69 {dimension_numbers = #tpu.dot_dimension_numbers<[1], [0], [0], [1], [0, 0, 1, 1], [], []>} : vector<256x4xf32>, vector<4x128xf32>, vector<256x128xf32> -> vector<256x128xf32>
    %40 = arith.addf %35, %39 : vector<256x128xf32>
    %c0_70 = arith.constant 0 : index
    %c1_71 = arith.constant 1 : index
    %c2_72 = arith.constant 2 : index
    %c0_73 = arith.constant 0 : index
    %41 = vector.load %arg7[%c0_70, %c1_71, %c2_72, %c0_73] : memref<1x18x18x4xf32, #tpu.memory_space<vmem>>, vector<1x16x16x4xf32>
    %42 = vector.shape_cast %41 : vector<1x16x16x4xf32> to vector<256x4xf32>
    %43 = vector.extract_strided_slice %31 {offsets = [8, 0], sizes = [4, 128], strides = [1, 1]} : vector<12x128xf32> to vector<4x128xf32>
    %cst_74 = arith.constant dense<0.000000e+00> : vector<256x128xf32>
    %44 = tpu.matmul %42, %43, %cst_74 {dimension_numbers = #tpu.dot_dimension_numbers<[1], [0], [0], [1], [0, 0, 1, 1], [], []>} : vector<256x4xf32>, vector<4x128xf32>, vector<256x128xf32> -> vector<256x128xf32>
    %45 = arith.addf %40, %44 : vector<256x128xf32>
    %46 = arith.addf %29, %45 : vector<256x128xf32>
    %c2_75 = arith.constant 2 : index
    %c0_76 = arith.constant 0 : index
    %c0_77 = arith.constant 0 : index
    %47 = vector.load %arg2[%c2_75, %c0_76, %c0_77] : memref<3x12x128xf32, #tpu.memory_space<vmem>>, vector<1x12x128xf32>
    %48 = vector.shape_cast %47 : vector<1x12x128xf32> to vector<12x128xf32>
    %c0_78 = arith.constant 0 : index
    %c2_79 = arith.constant 2 : index
    %c0_80 = arith.constant 0 : index
    %c0_81 = arith.constant 0 : index
    %49 = vector.load %arg7[%c0_78, %c2_79, %c0_80, %c0_81] : memref<1x18x18x4xf32, #tpu.memory_space<vmem>>, vector<1x16x16x4xf32>
    %50 = vector.shape_cast %49 : vector<1x16x16x4xf32> to vector<256x4xf32>
    %51 = vector.extract_strided_slice %48 {offsets = [0, 0], sizes = [4, 128], strides = [1, 1]} : vector<12x128xf32> to vector<4x128xf32>
    %cst_82 = arith.constant dense<0.000000e+00> : vector<256x128xf32>
    %52 = tpu.matmul %50, %51, %cst_82 {dimension_numbers = #tpu.dot_dimension_numbers<[1], [0], [0], [1], [0, 0, 1, 1], [], []>} : vector<256x4xf32>, vector<4x128xf32>, vector<256x128xf32> -> vector<256x128xf32>
    %c0_83 = arith.constant 0 : index
    %c2_84 = arith.constant 2 : index
    %c1_85 = arith.constant 1 : index
    %c0_86 = arith.constant 0 : index
    %53 = vector.load %arg7[%c0_83, %c2_84, %c1_85, %c0_86] : memref<1x18x18x4xf32, #tpu.memory_space<vmem>>, vector<1x16x16x4xf32>
    %54 = vector.shape_cast %53 : vector<1x16x16x4xf32> to vector<256x4xf32>
    %55 = vector.extract_strided_slice %48 {offsets = [4, 0], sizes = [4, 128], strides = [1, 1]} : vector<12x128xf32> to vector<4x128xf32>
    %cst_87 = arith.constant dense<0.000000e+00> : vector<256x128xf32>
    %56 = tpu.matmul %54, %55, %cst_87 {dimension_numbers = #tpu.dot_dimension_numbers<[1], [0], [0], [1], [0, 0, 1, 1], [], []>} : vector<256x4xf32>, vector<4x128xf32>, vector<256x128xf32> -> vector<256x128xf32>
    %57 = arith.addf %52, %56 : vector<256x128xf32>
    %c0_88 = arith.constant 0 : index
    %c2_89 = arith.constant 2 : index
    %c2_90 = arith.constant 2 : index
    %c0_91 = arith.constant 0 : index
    %58 = vector.load %arg7[%c0_88, %c2_89, %c2_90, %c0_91] : memref<1x18x18x4xf32, #tpu.memory_space<vmem>>, vector<1x16x16x4xf32>
    %59 = vector.shape_cast %58 : vector<1x16x16x4xf32> to vector<256x4xf32>
    %60 = vector.extract_strided_slice %48 {offsets = [8, 0], sizes = [4, 128], strides = [1, 1]} : vector<12x128xf32> to vector<4x128xf32>
    %cst_92 = arith.constant dense<0.000000e+00> : vector<256x128xf32>
    %61 = tpu.matmul %59, %60, %cst_92 {dimension_numbers = #tpu.dot_dimension_numbers<[1], [0], [0], [1], [0, 0, 1, 1], [], []>} : vector<256x4xf32>, vector<4x128xf32>, vector<256x128xf32> -> vector<256x128xf32>
    %62 = arith.addf %57, %61 : vector<256x128xf32>
    %63 = arith.addf %46, %62 : vector<256x128xf32>
    %c0_93 = arith.constant 0 : index
    %c0_94 = arith.constant 0 : index
    %64 = vector.load %arg3[%c0_93, %c0_94] : memref<1x128xf32, #tpu.memory_space<vmem>>, vector<1x128xf32>
    %65 = vector.broadcast %64 : vector<1x128xf32> to vector<256x128xf32>
    %66 = arith.addf %63, %65 : vector<256x128xf32>
    %cst_95 = arith.constant 0.000000e+00 : f32
    %67 = vector.broadcast %cst_95 : f32 to vector<256x128xf32>
    %68 = arith.maximumf %66, %67 : vector<256x128xf32>
    %69 = vector.shape_cast %68 : vector<256x128xf32> to vector<1x16x16x128xf32>
    %c0_96 = arith.constant 0 : index
    %c1_97 = arith.constant 1 : index
    %c1_98 = arith.constant 1 : index
    %c0_99 = arith.constant 0 : index
    %70 = vector.load %arg8[%c0_96, %c1_97, %c1_98, %c0_99] : memref<1x18x18x128xf32, #tpu.memory_space<vmem>>, vector<1x16x16x128xf32>
    tpu.vector_store %arg8[%c0_96, %c1_97, %c1_98, %c0_99], %69 {strides = array<i32>} : memref<1x18x18x128xf32, #tpu.memory_space<vmem>>, vector<1x16x16x128xf32>,
    %c0_100 = arith.constant 0 : index
    %c0_101 = arith.constant 0 : index
    %c0_102 = arith.constant 0 : index
    %71 = vector.load %arg4[%c0_100, %c0_101, %c0_102] : memref<3x384x128xf32, #tpu.memory_space<vmem>>, vector<1x384x128xf32>
    %72 = vector.shape_cast %71 : vector<1x384x128xf32> to vector<384x128xf32>
    %c0_103 = arith.constant 0 : index
    %c0_104 = arith.constant 0 : index
    %c0_105 = arith.constant 0 : index
    %c0_106 = arith.constant 0 : index
    %73 = vector.load %arg8[%c0_103, %c0_104, %c0_105, %c0_106] : memref<1x18x18x128xf32, #tpu.memory_space<vmem>>, vector<1x16x16x128xf32>
    %c0_107 = arith.constant 0 : index
    %c0_108 = arith.constant 0 : index
    %c1_109 = arith.constant 1 : index
    %c0_110 = arith.constant 0 : index
    %74 = vector.load %arg8[%c0_107, %c0_108, %c1_109, %c0_110] : memref<1x18x18x128xf32, #tpu.memory_space<vmem>>, vector<1x16x16x128xf32>
    %c0_111 = arith.constant 0 : index
    %c0_112 = arith.constant 0 : index
    %c2_113 = arith.constant 2 : index
    %c0_114 = arith.constant 0 : index
    %75 = vector.load %arg8[%c0_111, %c0_112, %c2_113, %c0_114] : memref<1x18x18x128xf32, #tpu.memory_space<vmem>>, vector<1x16x16x128xf32>
    %76 = tpu.concatenate %73, %74, %75 in 3 : vector<1x16x16x128xf32>, vector<1x16x16x128xf32>, vector<1x16x16x128xf32> -> vector<1x16x16x384xf32>
    %77 = vector.shape_cast %76 : vector<1x16x16x384xf32> to vector<256x384xf32>
    %cst_115 = arith.constant dense<0.000000e+00> : vector<256x128xf32>
    %78 = tpu.matmul %77, %72, %cst_115 {dimension_numbers = #tpu.dot_dimension_numbers<[1], [0], [0], [1], [0, 0, 1, 1], [], []>} : vector<256x384xf32>, vector<384x128xf32>, vector<256x128xf32> -> vector<256x128xf32>
    %c1_116 = arith.constant 1 : index
    %c0_117 = arith.constant 0 : index
    %c0_118 = arith.constant 0 : index
    %79 = vector.load %arg4[%c1_116, %c0_117, %c0_118] : memref<3x384x128xf32, #tpu.memory_space<vmem>>, vector<1x384x128xf32>
    %80 = vector.shape_cast %79 : vector<1x384x128xf32> to vector<384x128xf32>
    %c0_119 = arith.constant 0 : index
    %c1_120 = arith.constant 1 : index
    %c0_121 = arith.constant 0 : index
    %c0_122 = arith.constant 0 : index
    %81 = vector.load %arg8[%c0_119, %c1_120, %c0_121, %c0_122] : memref<1x18x18x128xf32, #tpu.memory_space<vmem>>, vector<1x16x16x128xf32>
    %c0_123 = arith.constant 0 : index
    %c1_124 = arith.constant 1 : index
    %c1_125 = arith.constant 1 : index
    %c0_126 = arith.constant 0 : index
    %82 = vector.load %arg8[%c0_123, %c1_124, %c1_125, %c0_126] : memref<1x18x18x128xf32, #tpu.memory_space<vmem>>, vector<1x16x16x128xf32>
    %c0_127 = arith.constant 0 : index
    %c1_128 = arith.constant 1 : index
    %c2_129 = arith.constant 2 : index
    %c0_130 = arith.constant 0 : index
    %83 = vector.load %arg8[%c0_127, %c1_128, %c2_129, %c0_130] : memref<1x18x18x128xf32, #tpu.memory_space<vmem>>, vector<1x16x16x128xf32>
    %84 = tpu.concatenate %81, %82, %83 in 3 : vector<1x16x16x128xf32>, vector<1x16x16x128xf32>, vector<1x16x16x128xf32> -> vector<1x16x16x384xf32>
    %85 = vector.shape_cast %84 : vector<1x16x16x384xf32> to vector<256x384xf32>
    %cst_131 = arith.constant dense<0.000000e+00> : vector<256x128xf32>
    %86 = tpu.matmul %85, %80, %cst_131 {dimension_numbers = #tpu.dot_dimension_numbers<[1], [0], [0], [1], [0, 0, 1, 1], [], []>} : vector<256x384xf32>, vector<384x128xf32>, vector<256x128xf32> -> vector<256x128xf32>
    %87 = arith.addf %78, %86 : vector<256x128xf32>
    %c2_132 = arith.constant 2 : index
    %c0_133 = arith.constant 0 : index
    %c0_134 = arith.constant 0 : index
    %88 = vector.load %arg4[%c2_132, %c0_133, %c0_134] : memref<3x384x128xf32, #tpu.memory_space<vmem>>, vector<1x384x128xf32>
    %89 = vector.shape_cast %88 : vector<1x384x128xf32> to vector<384x128xf32>
    %c0_135 = arith.constant 0 : index
    %c2_136 = arith.constant 2 : index
    %c0_137 = arith.constant 0 : index
    %c0_138 = arith.constant 0 : index
    %90 = vector.load %arg8[%c0_135, %c2_136, %c0_137, %c0_138] : memref<1x18x18x128xf32, #tpu.memory_space<vmem>>, vector<1x16x16x128xf32>
    %c0_139 = arith.constant 0 : index
    %c2_140 = arith.constant 2 : index
    %c1_141 = arith.constant 1 : index
    %c0_142 = arith.constant 0 : index
    %91 = vector.load %arg8[%c0_139, %c2_140, %c1_141, %c0_142] : memref<1x18x18x128xf32, #tpu.memory_space<vmem>>, vector<1x16x16x128xf32>
    %c0_143 = arith.constant 0 : index
    %c2_144 = arith.constant 2 : index
    %c2_145 = arith.constant 2 : index
    %c0_146 = arith.constant 0 : index
    %92 = vector.load %arg8[%c0_143, %c2_144, %c2_145, %c0_146] : memref<1x18x18x128xf32, #tpu.memory_space<vmem>>, vector<1x16x16x128xf32>
    %93 = tpu.concatenate %90, %91, %92 in 3 : vector<1x16x16x128xf32>, vector<1x16x16x128xf32>, vector<1x16x16x128xf32> -> vector<1x16x16x384xf32>
    %94 = vector.shape_cast %93 : vector<1x16x16x384xf32> to vector<256x384xf32>
    %cst_147 = arith.constant dense<0.000000e+00> : vector<256x128xf32>
    %95 = tpu.matmul %94, %89, %cst_147 {dimension_numbers = #tpu.dot_dimension_numbers<[1], [0], [0], [1], [0, 0, 1, 1], [], []>} : vector<256x384xf32>, vector<384x128xf32>, vector<256x128xf32> -> vector<256x128xf32>
    %96 = arith.addf %87, %95 : vector<256x128xf32>
    %c0_148 = arith.constant 0 : index
    %c0_149 = arith.constant 0 : index
    %97 = vector.load %arg5[%c0_148, %c0_149] : memref<1x128xf32, #tpu.memory_space<vmem>>, vector<1x128xf32>
    %98 = vector.broadcast %97 : vector<1x128xf32> to vector<256x128xf32>
    %99 = arith.addf %96, %98 : vector<256x128xf32>
    %cst_150 = arith.constant 0.000000e+00 : f32
    %100 = vector.broadcast %cst_150 : f32 to vector<256x128xf32>
    %101 = arith.maximumf %99, %100 : vector<256x128xf32>
    %102 = vector.shape_cast %101 : vector<256x128xf32> to vector<1x8x2x16x128xf32>
    %103 = vector.extract_strided_slice %102 {offsets = [0, 0, 0, 0, 0], sizes = [1, 8, 1, 16, 128], strides = [1, 1, 1, 1, 1]} : vector<1x8x2x16x128xf32> to vector<1x8x1x16x128xf32>
    %104 = vector.shape_cast %103 : vector<1x8x1x16x128xf32> to vector<1x8x16x128xf32>
    %105 = vector.extract_strided_slice %102 {offsets = [0, 0, 1, 0, 0], sizes = [1, 8, 1, 16, 128], strides = [1, 1, 1, 1, 1]} : vector<1x8x2x16x128xf32> to vector<1x8x1x16x128xf32>
    %106 = vector.shape_cast %105 : vector<1x8x1x16x128xf32> to vector<1x8x16x128xf32>
    %107 = arith.addf %104, %106 : vector<1x8x16x128xf32>
    %108 = vector.shape_cast %107 : vector<1x8x16x128xf32> to vector<1x8x8x2x128xf32>
    %109 = vector.extract_strided_slice %108 {offsets = [0, 0, 0, 0, 0], sizes = [1, 8, 8, 1, 128], strides = [1, 1, 1, 1, 1]} : vector<1x8x8x2x128xf32> to vector<1x8x8x1x128xf32>
    %110 = vector.shape_cast %109 : vector<1x8x8x1x128xf32> to vector<1x8x8x128xf32>
    %111 = vector.extract_strided_slice %108 {offsets = [0, 0, 0, 1, 0], sizes = [1, 8, 8, 1, 128], strides = [1, 1, 1, 1, 1]} : vector<1x8x8x2x128xf32> to vector<1x8x8x1x128xf32>
    %112 = vector.shape_cast %111 : vector<1x8x8x1x128xf32> to vector<1x8x8x128xf32>
    %113 = arith.addf %110, %112 : vector<1x8x8x128xf32>
    %cst_151 = arith.constant 2.500000e-01 : f32
    %114 = vector.broadcast %cst_151 : f32 to vector<1x8x8x128xf32>
    %115 = arith.mulf %114, %113 : vector<1x8x8x128xf32>
    %c0_152 = arith.constant 0 : index
    %c0_153 = arith.constant 0 : index
    %c0_154 = arith.constant 0 : index
    %c0_155 = arith.constant 0 : index
    %116 = vector.load %arg6[%c0_152, %c0_153, %c0_154, %c0_155] : memref<1x8x8x128xf32, #tpu.memory_space<vmem>>, vector<1x8x8x128xf32>
    tpu.vector_store %arg6[%c0_152, %c0_153, %c0_154, %c0_155], %115 {strides = array<i32>} : memref<1x8x8x128xf32, #tpu.memory_space<vmem>>, vector<1x8x8x128xf32>,
    return
  }
  func.func @transform_0(%arg0: i32) -> (i32, i32, i32, i32) {
    %c0_i32 = arith.constant 0 : i32
    %c0_i32_0 = arith.constant 0 : i32
    %c0_i32_1 = arith.constant 0 : i32
    %c0_i32_2 = arith.constant 0 : i32
    return %arg0, %c0_i32, %c0_i32_0, %c0_i32_1 : i32, i32, i32, i32
  }
  func.func @transform_1(%arg0: i32) -> (i32, i32, i32) {
    %c0_i32 = arith.constant 0 : i32
    %c0_i32_0 = arith.constant 0 : i32
    %c0_i32_1 = arith.constant 0 : i32
    %c0_i32_2 = arith.constant 0 : i32
    return %c0_i32, %c0_i32_0, %c0_i32_1 : i32, i32, i32
  }
  func.func @transform_2(%arg0: i32) -> (i32, i32) {
    %c0_i32 = arith.constant 0 : i32
    %c0_i32_0 = arith.constant 0 : i32
    %c0_i32_1 = arith.constant 0 : i32
    return %c0_i32, %c0_i32_0 : i32, i32
  }
  func.func @transform_3(%arg0: i32) -> (i32, i32, i32) {
    %c0_i32 = arith.constant 0 : i32
    %c0_i32_0 = arith.constant 0 : i32
    %c0_i32_1 = arith.constant 0 : i32
    %c0_i32_2 = arith.constant 0 : i32
    return %c0_i32, %c0_i32_0, %c0_i32_1 : i32, i32, i32
  }
  func.func @transform_4(%arg0: i32) -> (i32, i32) {
    %c0_i32 = arith.constant 0 : i32
    %c0_i32_0 = arith.constant 0 : i32
    %c0_i32_1 = arith.constant 0 : i32
    return %c0_i32, %c0_i32_0 : i32, i32
  }
  func.func @transform_5(%arg0: i32) -> (i32, i32, i32, i32) {
    %c0_i32 = arith.constant 0 : i32
    %c0_i32_0 = arith.constant 0 : i32
    %c0_i32_1 = arith.constant 0 : i32
    %c0_i32_2 = arith.constant 0 : i32
    return %arg0, %c0_i32, %c0_i32_0, %c0_i32_1 : i32, i32, i32, i32
  }
}

</mosaic_0001>

<llo_original>
// kernel: tpu_custom_call.1
$region0: #{tpu_custom_call.1}
  #allocation0 [shape = 'u32[]', space=smem, size = 0x4, offset = 0x4, fixed_abs, tag = 'smem constant byte address 0x4 - core index']
  #allocation1 [shape = 'u32[72,128]{1,0:T(1,128)}', space=vmem, size = 0x9000, scoped, tag = 'internal scratch']
  #allocation2 [shape = 'f32[1,18,18,4]{3,2,1,0:T(8,128)}', space=vmem, size = 0x36000, scoped, tag = 'scratch operand']
  #allocation3 [shape = 'f32[1,18,18,128]{3,2,1,0:T(8,128)}', space=vmem, size = 0x36000, scoped, tag = 'scratch operand']
  %s0 = inlined_call_operand.vmem [shape: f32[2,16,16,4], index: 0, kind: input, shape index: {}]
  %s1 = inlined_call_operand.vmem [shape: f32[3,12,128], index: 1, kind: input, shape index: {}]
  %s2 = inlined_call_operand.vmem [shape: f32[1,128], index: 2, kind: input, shape index: {}]
  %s3 = inlined_call_operand.hbm [shape: f32[3,384,128], index: 3, kind: input, shape index: {}]
  %s4 = inlined_call_operand.vmem [shape: f32[1,128], index: 4, kind: input, shape index: {}]
  %s5 = inlined_call_operand.hbm [shape: f32[2,8,8,128], index: 5, kind: output, shape index: {}]
  %s6 = sld [smem:[#allocation0]]
  $region57: #{tpu_custom_call.1} parent=0
    _
  %s8 = ssub.s32 1, %s6
  %s9 = scalar_select 0, %s8, %s6
  $region1: #{tpu_custom_call.1} parent=0
    #allocation4 [shape = 'u8[589824]{0}', space=vmem, size = 0x90000, scoped, tag = 'input window, operand 3, single buffered']
    #allocation5 [shape = 's32[2]{0}', space=sflag, size = 0x8, scoped, tag = 'scoped memory for tpu_custom_call.1']
    #allocation6 [shape = 's32[2]{0}', space=sflag, size = 0x8, scoped, tag = 'scoped memory for tpu_custom_call.1']
    #allocation7 [shape = 'u8[65536]{0}', space=vmem, size = 0x10000, scoped, tag = 'output window, operand 0']
    %10 = vsyncpa [#allocation5], 0
    %11 = vsyncpa [#allocation6], 0
    %s12 = scalar_lea.sflag [#allocation6], 1
    %13 = vsyncpa %s12, 0
    loop: start=0, step=1, limit=4
    $region2: #{tpu_custom_call.1} parent=1 // loop_pre_header
      _
    $region3: #{tpu_custom_call.1} parent=1 // loop_header
      %s15 = sphi 0, %s19
      %p16 = scmp.ge.s32.totalorder %s15, 4
      %s25 = sphi 0, %s27
      %s28 = sphi 0, %s25
      %s29 = sphi 0, %s28
      %s45 = sphi 0, %s29
      %s49 = sphi 0, %s49
      %s51 = sphi 0, %s49
      %s52 = sphi 0, %s51
      %s66 = sphi 0, %s52
      %s70 = sphi 0, %s70
      %s72 = sphi 0, %s70
      %s73 = sphi 0, %s72
      %s87 = sphi 0, %s73
      %s91 = sphi 0, %s91
      %s93 = sphi 0, %s91
      %s94 = sphi 0, %s93
      %s108 = sphi 0, %s94
      %s112 = sphi 0, %s112
      %s114 = sphi 0, %s112
      %s115 = sphi 0, %s114
      %s129 = sphi 0, %s115
      %s135 = sphi 0, %s137
      %s138 = sphi 0, %s135
      %s139 = sphi 0, %s138
      %s155 = sphi 0, %s139
    $region4: #{tpu_custom_call.1} parent=1 // loop_header_branch
      %18 = sbr.rel (%p16) target = $region8
    $region5: #{tpu_custom_call.1} parent=1 // loop_body
      %s20 = ssub.s32 %s15, 1
      %s21 = ssub.s32 %s15, 2
      %s22 = sadd.s32 %s15, 1
      %s23 = ssub.s32 %s15, %s22
      %p24 = scmp.eq.s32.totalorder %s23, 0
      %s26 = sadd.s32 %s25, 1
      %s27 = scalar_select %p24, %s25, %s26
      %p30 = pneg %p24
      %p31 = scmp.eq.s32.totalorder %s15, 1
      %p32 = por %p30, %p31
      %p33 = scmp.ne.s32.totalorder %s25, %s28
      %p34 = scmp.eq.s32.totalorder %s15, 0
      %p35 = por %p33, %p34
      %p36 = scmp.ne.s32.totalorder %s25, %s28
      %p37 = scmp.eq.s32.totalorder %s20, 1
      %p38 = por %p36, %p37
      %p39 = scmp.ne.s32.totalorder %s28, %s29
      %p40 = scmp.eq.s32.totalorder %s20, 0
      %p41 = por %p39, %p40
      %p42 = scmp.ne.s32.totalorder %s28, %s29
      %p43 = scmp.eq.s32.totalorder %s21, 1
      %p44 = por %p42, %p43
      %p46 = scmp.ne.s32.totalorder %s29, %s45
      %p47 = scmp.eq.s32.totalorder %s21, 0
      %p48 = por %p46, %p47
      %s50 = sadd.s32 %s49, 1
      %p53 = scmp.eq.s32.totalorder %s15, 1
      %p54 = scmp.ne.s32.totalorder %s49, %s51
      %p55 = scmp.eq.s32.totalorder %s15, 0
      %p56 = por %p54, %p55
      %p57 = scmp.ne.s32.totalorder %s49, %s51
      %p58 = scmp.eq.s32.totalorder %s20, 1
      %p59 = por %p57, %p58
      %p60 = scmp.ne.s32.totalorder %s51, %s52
      %p61 = scmp.eq.s32.totalorder %s20, 0
      %p62 = por %p60, %p61
      %p63 = scmp.ne.s32.totalorder %s51, %s52
      %p64 = scmp.eq.s32.totalorder %s21, 1
      %p65 = por %p63, %p64
      %p67 = scmp.ne.s32.totalorder %s52, %s66
      %p68 = scmp.eq.s32.totalorder %s21, 0
      %p69 = por %p67, %p68
      %s71 = sadd.s32 %s70, 1
      %p74 = scmp.eq.s32.totalorder %s15, 1
      %p75 = scmp.ne.s32.totalorder %s70, %s72
      %p76 = scmp.eq.s32.totalorder %s15, 0
      %p77 = por %p75, %p76
      %p78 = scmp.ne.s32.totalorder %s70, %s72
      %p79 = scmp.eq.s32.totalorder %s20, 1
      %p80 = por %p78, %p79
      %p81 = scmp.ne.s32.totalorder %s72, %s73
      %p82 = scmp.eq.s32.totalorder %s20, 0
      %p83 = por %p81, %p82
      %p84 = scmp.ne.s32.totalorder %s72, %s73
      %p85 = scmp.eq.s32.totalorder %s21, 1
      %p86 = por %p84, %p85
      %p88 = scmp.ne.s32.totalorder %s73, %s87
      %p89 = scmp.eq.s32.totalorder %s21, 0
      %p90 = por %p88, %p89
      %s92 = sadd.s32 %s91, 1
      %p95 = scmp.eq.s32.totalorder %s15, 1
      %p96 = scmp.ne.s32.totalorder %s91, %s93
      %p97 = scmp.eq.s32.totalorder %s15, 0
      %p98 = por %p96, %p97
      %p99 = scmp.ne.s32.totalorder %s91, %s93
      %p100 = scmp.eq.s32.totalorder %s20, 1
      %p101 = por %p99, %p100
      %p102 = scmp.ne.s32.totalorder %s93, %s94
      %p103 = scmp.eq.s32.totalorder %s20, 0
      %p104 = por %p102, %p103
      %p105 = scmp.ne.s32.totalorder %s93, %s94
      %p106 = scmp.eq.s32.totalorder %s21, 1
      %p107 = por %p105, %p106
      %p109 = scmp.ne.s32.totalorder %s94, %s108
      %p110 = scmp.eq.s32.totalorder %s21, 0
      %p111 = por %p109, %p110
      %s113 = sadd.s32 %s112, 1
      %p116 = scmp.eq.s32.totalorder %s15, 1
      %p117 = scmp.ne.s32.totalorder %s112, %s114
      %p118 = scmp.eq.s32.totalorder %s15, 0
      %p119 = por %p117, %p118
      %p120 = scmp.ne.s32.totalorder %s112, %s114
      %p121 = scmp.eq.s32.totalorder %s20, 1
      %p122 = por %p120, %p121
      %p123 = scmp.ne.s32.totalorder %s114, %s115
      %p124 = scmp.eq.s32.totalorder %s20, 0
      %p125 = por %p123, %p124
      %p126 = scmp.ne.s32.totalorder %s114, %s115
      %p127 = scmp.eq.s32.totalorder %s21, 1
      %p128 = por %p126, %p127
      %p130 = scmp.ne.s32.totalorder %s115, %s129
      %p131 = scmp.eq.s32.totalorder %s21, 0
      %p132 = por %p130, %p131
      %s133 = ssub.s32 %s15, %s22
      %p134 = scmp.eq.s32.totalorder %s133, 0
      %s136 = sadd.s32 %s135, 1
      %s137 = scalar_select %p134, %s135, %s136
      %p140 = pneg %p134
      %p141 = scmp.eq.s32.totalorder %s15, 1
      %p142 = por %p140, %p141
      %p143 = scmp.ne.s32.totalorder %s135, %s138
      %p144 = scmp.eq.s32.totalorder %s15, 0
      %p145 = por %p143, %p144
      %p146 = scmp.ne.s32.totalorder %s135, %s138
      %p147 = scmp.eq.s32.totalorder %s20, 1
      %p148 = por %p146, %p147
      %p149 = scmp.ne.s32.totalorder %s138, %s139
      %p150 = scmp.eq.s32.totalorder %s20, 0
      %p151 = por %p149, %p150
      %p152 = scmp.ne.s32.totalorder %s138, %s139
      %p153 = scmp.eq.s32.totalorder %s21, 1
      %p154 = por %p152, %p153
      %p156 = scmp.ne.s32.totalorder %s139, %s155
      %p157 = scmp.eq.s32.totalorder %s21, 0
      %p158 = por %p156, %p157
      %p159 = scmp.le.s32.totalorder 1, %s15
      %p160 = scmp.lt.s32.totalorder %s15, 3
      %p161 = pnand %p159, %p160
      %p162 = pneg %p161
      // Predicated region
      $region9: #{tpu_custom_call.1} parent=5 // pred_check
        _
      $region10: #{tpu_custom_call.1} parent=5 // pred_check_branch
        %164 = sbr.rel (%p161) target = $region12
      $region11: #{tpu_custom_call.1} parent=5 // pred_region
        %s165 = ssub.s32 %s15, 1
        // Predicated region
        $region13: #{tpu_custom_call.1} parent=11 // pred_check
          %p166 = pneg %p62
        $region14: #{tpu_custom_call.1} parent=11 // pred_check_branch
          %168 = sbr.rel (%p166) target = $region16
        $region15: #{tpu_custom_call.1} parent=11 // pred_region
          _
        $region16: #{tpu_custom_call.1} parent=11 // pred_fallthru
          _
        // Predicated region
        $region17: #{tpu_custom_call.1} parent=11 // pred_check
          %p169 = pneg %p83
        $region18: #{tpu_custom_call.1} parent=11 // pred_check_branch
          %171 = sbr.rel (%p169) target = $region20
        $region19: #{tpu_custom_call.1} parent=11 // pred_region
          _
        $region20: #{tpu_custom_call.1} parent=11 // pred_fallthru
          _
        // Predicated region
        $region21: #{tpu_custom_call.1} parent=11 // pred_check
          %p172 = pneg %p104
        $region22: #{tpu_custom_call.1} parent=11 // pred_check_branch
          %174 = sbr.rel (%p172) target = $region24
        $region23: #{tpu_custom_call.1} parent=11 // pred_region
          %176 = vsyncadd [#allocation5], 0
          %s177 = sshll.u32 %s3, 4
          %s178 = int_to_ptr.hbm [resolvable:$true] %s177
          %s179 = sshll.u32 [#allocation4], 4
          %s180 = int_to_ptr.vmem [resolvable:$true] %s179
          %185 = dma.hbm_to_vmem [thread:$0]  %s178, 18432, %s180, [#allocation5], 128, 128, 8
        $region24: #{tpu_custom_call.1} parent=11 // pred_fallthru
          _
        // Predicated region
        $region25: #{tpu_custom_call.1} parent=11 // pred_check
          %p186 = pneg %p125
        $region26: #{tpu_custom_call.1} parent=11 // pred_check_branch
          %188 = sbr.rel (%p186) target = $region28
        $region27: #{tpu_custom_call.1} parent=11 // pred_region
          _
        $region28: #{tpu_custom_call.1} parent=11 // pred_fallthru
          _
      $region12: #{tpu_custom_call.1} parent=5 // pred_fallthru
        _
      %p189 = scmp.lt.s32.totalorder %s15, 2
      // Predicated region
      $region29: #{tpu_custom_call.1} parent=5 // pred_check
        %p190 = pneg %p189
      $region30: #{tpu_custom_call.1} parent=5 // pred_check_branch
        %192 = sbr.rel (%p190) target = $region32
      $region31: #{tpu_custom_call.1} parent=5 // pred_region
        // Predicated region
        $region33: #{tpu_custom_call.1} parent=31 // pred_check
          %p193 = pneg %p35
        $region34: #{tpu_custom_call.1} parent=31 // pred_check_branch
          %195 = sbr.rel (%p193) target = $region36
        $region35: #{tpu_custom_call.1} parent=31 // pred_region
          %p196 = scmp.lt.s32.totalorder %s15, 1
          %s197 = scalar_select %p196, %s15, 1
          %s198 = smul.addr %s197, 32
          %s199 = smul.addr %s198, 8
          %s200 = scalar_lea.vmem %s0, %s199
        $region36: #{tpu_custom_call.1} parent=31 // pred_fallthru
          _
      $region32: #{tpu_custom_call.1} parent=5 // pred_fallthru
        _
      %p201 = scmp.le.s32.totalorder 1, %s15
      %p202 = scmp.lt.s32.totalorder %s15, 3
      %p203 = pnand %p201, %p202
      %p204 = pneg %p203
      // Predicated region
      $region37: #{tpu_custom_call.1} parent=5 // pred_check
        _
      $region38: #{tpu_custom_call.1} parent=5 // pred_check_branch
        %206 = sbr.rel (%p203) target = $region40
      $region39: #{tpu_custom_call.1} parent=5 // pred_region
        %s207 = ssub.s32 %s15, 1
        // Predicated region
        $region41: #{tpu_custom_call.1} parent=39 // pred_check
          %p208 = pneg %p104
        $region42: #{tpu_custom_call.1} parent=39 // pred_check_branch
          %210 = sbr.rel (%p208) target = $region44
        $region43: #{tpu_custom_call.1} parent=39 // pred_region
          %212 = dma.done [#allocation5], 18432
        $region44: #{tpu_custom_call.1} parent=39 // pred_fallthru
          _
        %p213 = scmp.lt.s32.totalorder %s20, 1
        %s214 = scalar_select %p213, %s20, 1
        %s215 = smul.addr %s214, 32
        %s216 = smul.addr %s215, 8
        %s217 = scalar_lea.vmem %s0, %s216
        %p218 = pneg %p41
        %p219 = pneg %p38
        %p220 = pneg %p62
        %p221 = pneg %p59
        %p222 = pneg %p83
        %p223 = pneg %p80
        %p224 = pneg %p104
        %p225 = pneg %p101
        %p226 = pneg %p125
        %p227 = pneg %p122
        %p228 = pneg %p151
        %p229 = pneg %p148
        %s230 = sand.u32 %s138, 1
        %s231 = scalar_lea.sflag [#allocation6], %s230
        %s232 = sand.u32 %s138, 1
        %s233 = smul.addr %s232, 64
        %s234 = scalar_lea.vmem [#allocation7], %s233
        %p235 = scmp.lt.s32.totalorder %s20, 1
        %s236 = scalar_select %p235, %s20, 1
        %s237 = smul.addr %s236, 32
        %s238 = smul.addr %s237, 8
        %s239 = scalar_lea.vmem %s0, %s238
        %vm240 = vcmask 31744
        %241 = vst.msk [vmem:[#allocation2] sm:$0xff] %vm240, 0.0
        %242 = vst.msk [vmem:[#allocation2 + $0x8] sm:$0xff] %vm240, 0.0
        %vm243 = vcmask 25600
        %244 = vst.msk [vmem:[#allocation2 + $0x10] sm:$0x3] %vm243, 0.0
        %s245 = scalar_lea.vmem [#allocation2], 408
        %246 = vst.msk [vmem:[%s245] sm:$0xff] %vm240, 0.0
        %247 = vst.msk [vmem:[%s245 + $0x8] sm:$0xff] %vm240, 0.0
        %248 = vst.msk [vmem:[%s245 + $0x10] sm:$0x3] %vm243, 0.0
        %vm249 = vcmask 24576
        %250 = vst.msk [vmem:[#allocation2] sm:$0x1] %vm249, 0.0
        %251 = vst.msk [vmem:[#allocation2 + $0x18] sm:$0x1] %vm249, 0.0
        %252 = vst.msk [vmem:[#allocation2 + $0x30] sm:$0x1] %vm249, 0.0
        %253 = vst.msk [vmem:[#allocation2 + $0x48] sm:$0x1] %vm249, 0.0
        %254 = vst.msk [vmem:[#allocation2 + $0x60] sm:$0x1] %vm249, 0.0
        %255 = vst.msk [vmem:[#allocation2 + $0x78] sm:$0x1] %vm249, 0.0
        %256 = vst.msk [vmem:[#allocation2 + $0x90] sm:$0x1] %vm249, 0.0
        %257 = vst.msk [vmem:[#allocation2 + $0xa8] sm:$0x1] %vm249, 0.0
        %258 = vst.msk [vmem:[#allocation2 + $0xc0] sm:$0x1] %vm249, 0.0
        %259 = vst.msk [vmem:[#allocation2 + $0xd8] sm:$0x1] %vm249, 0.0
        %260 = vst.msk [vmem:[#allocation2 + $0xf0] sm:$0x1] %vm249, 0.0
        %261 = vst.msk [vmem:[#allocation2 + $0x108] sm:$0x1] %vm249, 0.0
        %262 = vst.msk [vmem:[#allocation2 + $0x120] sm:$0x1] %vm249, 0.0
        %263 = vst.msk [vmem:[#allocation2 + $0x138] sm:$0x1] %vm249, 0.0
        %264 = vst.msk [vmem:[#allocation2 + $0x150] sm:$0x1] %vm249, 0.0
        %265 = vst.msk [vmem:[#allocation2 + $0x168] sm:$0x1] %vm249, 0.0
        %266 = vst.msk [vmem:[#allocation2 + $0x180] sm:$0x1] %vm249, 0.0
        %267 = vst.msk [vmem:[#allocation2 + $0x198] sm:$0x1] %vm249, 0.0
        %268 = vst.msk [vmem:[#allocation2 + $0x11] sm:$0x1] %vm249, 0.0
        %269 = vst.msk [vmem:[#allocation2 + $0x29] sm:$0x1] %vm249, 0.0
        %270 = vst.msk [vmem:[#allocation2 + $0x41] sm:$0x1] %vm249, 0.0
        %271 = vst.msk [vmem:[#allocation2 + $0x59] sm:$0x1] %vm249, 0.0
        %272 = vst.msk [vmem:[#allocation2 + $0x71] sm:$0x1] %vm249, 0.0
        %273 = vst.msk [vmem:[#allocation2 + $0x89] sm:$0x1] %vm249, 0.0
        %274 = vst.msk [vmem:[#allocation2 + $0xa1] sm:$0x1] %vm249, 0.0
        %275 = vst.msk [vmem:[#allocation2 + $0xb9] sm:$0x1] %vm249, 0.0
        %276 = vst.msk [vmem:[#allocation2 + $0xd1] sm:$0x1] %vm249, 0.0
        %277 = vst.msk [vmem:[#allocation2 + $0xe9] sm:$0x1] %vm249, 0.0
        %278 = vst.msk [vmem:[#allocation2 + $0x101] sm:$0x1] %vm249, 0.0
        %279 = vst.msk [vmem:[#allocation2 + $0x119] sm:$0x1] %vm249, 0.0
        %280 = vst.msk [vmem:[#allocation2 + $0x131] sm:$0x1] %vm249, 0.0
        %281 = vst.msk [vmem:[#allocation2 + $0x149] sm:$0x1] %vm249, 0.0
        %282 = vst.msk [vmem:[#allocation2 + $0x161] sm:$0x1] %vm249, 0.0
        %283 = vst.msk [vmem:[#allocation2 + $0x179] sm:$0x1] %vm249, 0.0
        %284 = vst.msk [vmem:[#allocation2 + $0x191] sm:$0x1] %vm249, 0.0
        %285 = vst.msk [vmem:[#allocation2 + $0x1a9] sm:$0x1] %vm249, 0.0
        %286 = vst [vmem:[#allocation3] sm:$0xff] 0.0
        %287 = vst [vmem:[#allocation3 + $0x8] sm:$0xff] 0.0
        %288 = vst [vmem:[#allocation3 + $0x10] sm:$0x3] 0.0
        %s289 = scalar_lea.vmem [#allocation3], 408
        %290 = vst [vmem:[%s289] sm:$0xff] 0.0
        %291 = vst [vmem:[%s289 + $0x8] sm:$0xff] 0.0
        %292 = vst [vmem:[%s289 + $0x10] sm:$0x3] 0.0
        %293 = vst [vmem:[#allocation3] sm:$0x1] 0.0
        %294 = vst [vmem:[#allocation3 + $0x18] sm:$0x1] 0.0
        %295 = vst [vmem:[#allocation3 + $0x30] sm:$0x1] 0.0
        %296 = vst [vmem:[#allocation3 + $0x48] sm:$0x1] 0.0
        %297 = vst [vmem:[#allocation3 + $0x60] sm:$0x1] 0.0
        %298 = vst [vmem:[#allocation3 + $0x78] sm:$0x1] 0.0
        %299 = vst [vmem:[#allocation3 + $0x90] sm:$0x1] 0.0
        %300 = vst [vmem:[#allocation3 + $0xa8] sm:$0x1] 0.0
        %301 = vst [vmem:[#allocation3 + $0xc0] sm:$0x1] 0.0
        %302 = vst [vmem:[#allocation3 + $0xd8] sm:$0x1] 0.0
        %303 = vst [vmem:[#allocation3 + $0xf0] sm:$0x1] 0.0
        %304 = vst [vmem:[#allocation3 + $0x108] sm:$0x1] 0.0
        %305 = vst [vmem:[#allocation3 + $0x120] sm:$0x1] 0.0
        %306 = vst [vmem:[#allocation3 + $0x138] sm:$0x1] 0.0
        %307 = vst [vmem:[#allocation3 + $0x150] sm:$0x1] 0.0
        %308 = vst [vmem:[#allocation3 + $0x168] sm:$0x1] 0.0
        %309 = vst [vmem:[#allocation3 + $0x180] sm:$0x1] 0.0
        %310 = vst [vmem:[#allocation3 + $0x198] sm:$0x1] 0.0
        %311 = vst [vmem:[#allocation3 + $0x11] sm:$0x1] 0.0
        %312 = vst [vmem:[#allocation3 + $0x29] sm:$0x1] 0.0
        %313 = vst [vmem:[#allocation3 + $0x41] sm:$0x1] 0.0
        %314 = vst [vmem:[#allocation3 + $0x59] sm:$0x1] 0.0
        %315 = vst [vmem:[#allocation3 + $0x71] sm:$0x1] 0.0
        %316 = vst [vmem:[#allocation3 + $0x89] sm:$0x1] 0.0
        %317 = vst [vmem:[#allocation3 + $0xa1] sm:$0x1] 0.0
        %318 = vst [vmem:[#allocation3 + $0xb9] sm:$0x1] 0.0
        %319 = vst [vmem:[#allocation3 + $0xd1] sm:$0x1] 0.0
        %320 = vst [vmem:[#allocation3 + $0xe9] sm:$0x1] 0.0
        %321 = vst [vmem:[#allocation3 + $0x101] sm:$0x1] 0.0
        %322 = vst [vmem:[#allocation3 + $0x119] sm:$0x1] 0.0
        %323 = vst [vmem:[#allocation3 + $0x131] sm:$0x1] 0.0
        %324 = vst [vmem:[#allocation3 + $0x149] sm:$0x1] 0.0
        %325 = vst [vmem:[#allocation3 + $0x161] sm:$0x1] 0.0
        %326 = vst [vmem:[#allocation3 + $0x179] sm:$0x1] 0.0
        %327 = vst [vmem:[#allocation3 + $0x191] sm:$0x1] 0.0
        %328 = vst [vmem:[#allocation3 + $0x1a9] sm:$0x1] 0.0
        %v329 = vld [vmem:[%s239] sm:$0xff]
        %v330 = vld [vmem:[%s239 + $0x8] sm:$0xff]
        %v331 = vld [vmem:[%s239 + $0x10] sm:$0xff]
        %v332 = vld [vmem:[%s239 + $0x18] sm:$0xff]
        %v333 = vld [vmem:[%s239 + $0x20] sm:$0xff]
        %v334 = vld [vmem:[%s239 + $0x28] sm:$0xff]
        %v335 = vld [vmem:[%s239 + $0x30] sm:$0xff]
        %v336 = vld [vmem:[%s239 + $0x38] sm:$0xff]
        %v337 = vld [vmem:[%s239 + $0x40] sm:$0xff]
        %v338 = vld [vmem:[%s239 + $0x48] sm:$0xff]
        %v339 = vld [vmem:[%s239 + $0x50] sm:$0xff]
        %v340 = vld [vmem:[%s239 + $0x58] sm:$0xff]
        %v341 = vld [vmem:[%s239 + $0x60] sm:$0xff]
        %v342 = vld [vmem:[%s239 + $0x68] sm:$0xff]
        %v343 = vld [vmem:[%s239 + $0x70] sm:$0xff]
        %v344 = vld [vmem:[%s239 + $0x78] sm:$0xff]
        %v345 = vld [vmem:[%s239 + $0x80] sm:$0xff]
        %v346 = vld [vmem:[%s239 + $0x88] sm:$0xff]
        %v347 = vld [vmem:[%s239 + $0x90] sm:$0xff]
        %v348 = vld [vmem:[%s239 + $0x98] sm:$0xff]
        %v349 = vld [vmem:[%s239 + $0xa0] sm:$0xff]
        %v350 = vld [vmem:[%s239 + $0xa8] sm:$0xff]
        %v351 = vld [vmem:[%s239 + $0xb0] sm:$0xff]
        %v352 = vld [vmem:[%s239 + $0xb8] sm:$0xff]
        %v353 = vld [vmem:[%s239 + $0xc0] sm:$0xff]
        %v354 = vld [vmem:[%s239 + $0xc8] sm:$0xff]
        %v355 = vld [vmem:[%s239 + $0xd0] sm:$0xff]
        %v356 = vld [vmem:[%s239 + $0xd8] sm:$0xff]
        %v357 = vld [vmem:[%s239 + $0xe0] sm:$0xff]
        %v358 = vld [vmem:[%s239 + $0xe8] sm:$0xff]
        %v359 = vld [vmem:[%s239 + $0xf0] sm:$0xff]
        %v360 = vld [vmem:[%s239 + $0xf8] sm:$0xff]
        %s361 = scalar_lea.vmem [#allocation2], 24
        %362 = vst.msk [vmem:[%s361 + $0x1] sm:$0xff] %vm240, %v329
        %363 = vst.msk [vmem:[%s361 + $0x9] sm:$0xff] %vm240, %v330
        %364 = vst.msk [vmem:[%s361 + $0x19] sm:$0xff] %vm240, %v331
        %365 = vst.msk [vmem:[%s361 + $0x21] sm:$0xff] %vm240, %v332
        %366 = vst.msk [vmem:[%s361 + $0x31] sm:$0xff] %vm240, %v333
        %367 = vst.msk [vmem:[%s361 + $0x39] sm:$0xff] %vm240, %v334
        %368 = vst.msk [vmem:[%s361 + $0x49] sm:$0xff] %vm240, %v335
        %369 = vst.msk [vmem:[%s361 + $0x51] sm:$0xff] %vm240, %v336
        %370 = vst.msk [vmem:[%s361 + $0x61] sm:$0xff] %vm240, %v337
        %371 = vst.msk [vmem:[%s361 + $0x69] sm:$0xff] %vm240, %v338
        %372 = vst.msk [vmem:[%s361 + $0x79] sm:$0xff] %vm240, %v339
        %373 = vst.msk [vmem:[%s361 + $0x81] sm:$0xff] %vm240, %v340
        %374 = vst.msk [vmem:[%s361 + $0x91] sm:$0xff] %vm240, %v341
        %375 = vst.msk [vmem:[%s361 + $0x99] sm:$0xff] %vm240, %v342
        %376 = vst.msk [vmem:[%s361 + $0xa9] sm:$0xff] %vm240, %v343
        %377 = vst.msk [vmem:[%s361 + $0xb1] sm:$0xff] %vm240, %v344
        %378 = vst.msk [vmem:[%s361 + $0xc1] sm:$0xff] %vm240, %v345
        %379 = vst.msk [vmem:[%s361 + $0xc9] sm:$0xff] %vm240, %v346
        %380 = vst.msk [vmem:[%s361 + $0xd9] sm:$0xff] %vm240, %v347
        %381 = vst.msk [vmem:[%s361 + $0xe1] sm:$0xff] %vm240, %v348
        %382 = vst.msk [vmem:[%s361 + $0xf1] sm:$0xff] %vm240, %v349
        %383 = vst.msk [vmem:[%s361 + $0xf9] sm:$0xff] %vm240, %v350
        %384 = vst.msk [vmem:[%s361 + $0x109] sm:$0xff] %vm240, %v351
        %385 = vst.msk [vmem:[%s361 + $0x111] sm:$0xff] %vm240, %v352
        %386 = vst.msk [vmem:[%s361 + $0x121] sm:$0xff] %vm240, %v353
        %387 = vst.msk [vmem:[%s361 + $0x129] sm:$0xff] %vm240, %v354
        %388 = vst.msk [vmem:[%s361 + $0x139] sm:$0xff] %vm240, %v355
        %389 = vst.msk [vmem:[%s361 + $0x141] sm:$0xff] %vm240, %v356
        %390 = vst.msk [vmem:[%s361 + $0x151] sm:$0xff] %vm240, %v357
        %391 = vst.msk [vmem:[%s361 + $0x159] sm:$0xff] %vm240, %v358
        %392 = vst.msk [vmem:[%s361 + $0x169] sm:$0xff] %vm240, %v359
        %393 = vst.msk [vmem:[%s361 + $0x171] sm:$0xff] %vm240, %v360
        %v394 = vld [vmem:[%s1] sm:$0xff]
        %v395 = vld [vmem:[%s1 + $0x8] sm:$0xf]
        %v396 = vld [vmem:[#allocation2] sm:$0xff]
        %v397 = vld [vmem:[#allocation2 + $0x8] sm:$0xff]
        %v398 = vld [vmem:[#allocation2 + $0x18] sm:$0xff]
        %v399 = vld [vmem:[#allocation2 + $0x20] sm:$0xff]
        %v400 = vld [vmem:[#allocation2 + $0x30] sm:$0xff]
        %v401 = vld [vmem:[#allocation2 + $0x38] sm:$0xff]
        %v402 = vld [vmem:[#allocation2 + $0x48] sm:$0xff]
        %v403 = vld [vmem:[#allocation2 + $0x50] sm:$0xff]
        %v404 = vld [vmem:[#allocation2 + $0x60] sm:$0xff]
        %v405 = vld [vmem:[#allocation2 + $0x68] sm:$0xff]
        %v406 = vld [vmem:[#allocation2 + $0x78] sm:$0xff]
        %v407 = vld [vmem:[#allocation2 + $0x80] sm:$0xff]
        %v408 = vld [vmem:[#allocation2 + $0x90] sm:$0xff]
        %v409 = vld [vmem:[#allocation2 + $0x98] sm:$0xff]
        %v410 = vld [vmem:[#allocation2 + $0xa8] sm:$0xff]
        %v411 = vld [vmem:[#allocation2 + $0xb0] sm:$0xff]
        %v412 = vld [vmem:[#allocation2 + $0xc0] sm:$0xff]
        %v413 = vld [vmem:[#allocation2 + $0xc8] sm:$0xff]
        %v414 = vld [vmem:[#allocation2 + $0xd8] sm:$0xff]
        %v415 = vld [vmem:[#allocation2 + $0xe0] sm:$0xff]
        %v416 = vld [vmem:[#allocation2 + $0xf0] sm:$0xff]
        %v417 = vld [vmem:[#allocation2 + $0xf8] sm:$0xff]
        %v418 = vld [vmem:[#allocation2 + $0x108] sm:$0xff]
        %v419 = vld [vmem:[#allocation2 + $0x110] sm:$0xff]
        %v420 = vld [vmem:[#allocation2 + $0x120] sm:$0xff]
        %v421 = vld [vmem:[#allocation2 + $0x128] sm:$0xff]
        %v422 = vld [vmem:[#allocation2 + $0x138] sm:$0xff]
        %v423 = vld [vmem:[#allocation2 + $0x140] sm:$0xff]
        %v424 = vld [vmem:[#allocation2 + $0x150] sm:$0xff]
        %v425 = vld [vmem:[#allocation2 + $0x158] sm:$0xff]
        %v426 = vld [vmem:[#allocation2 + $0x168] sm:$0xff]
        %v427 = vld [vmem:[#allocation2 + $0x170] sm:$0xff]
        %v428 = vld [vmem:[#allocation2 + $0x1] sm:$0xff]
        %v429 = vld [vmem:[#allocation2 + $0x9] sm:$0xff]
        %v430 = vld [vmem:[#allocation2 + $0x19] sm:$0xff]
        %v431 = vld [vmem:[#allocation2 + $0x21] sm:$0xff]
        %v432 = vld [vmem:[#allocation2 + $0x31] sm:$0xff]
        %v433 = vld [vmem:[#allocation2 + $0x39] sm:$0xff]
        %v434 = vld [vmem:[#allocation2 + $0x49] sm:$0xff]
        %v435 = vld [vmem:[#allocation2 + $0x51] sm:$0xff]
        %v436 = vld [vmem:[#allocation2 + $0x61] sm:$0xff]
        %v437 = vld [vmem:[#allocation2 + $0x69] sm:$0xff]
        %v438 = vld [vmem:[#allocation2 + $0x79] sm:$0xff]
        %v439 = vld [vmem:[#allocation2 + $0x81] sm:$0xff]
        %v440 = vld [vmem:[#allocation2 + $0x91] sm:$0xff]
        %v441 = vld [vmem:[#allocation2 + $0x99] sm:$0xff]
        %v442 = vld [vmem:[#allocation2 + $0xa9] sm:$0xff]
        %v443 = vld [vmem:[#allocation2 + $0xb1] sm:$0xff]
        %v444 = vld [vmem:[#allocation2 + $0xc1] sm:$0xff]
        %v445 = vld [vmem:[#allocation2 + $0xc9] sm:$0xff]
        %v446 = vld [vmem:[#allocation2 + $0xd9] sm:$0xff]
        %v447 = vld [vmem:[#allocation2 + $0xe1] sm:$0xff]
        %v448 = vld [vmem:[#allocation2 + $0xf1] sm:$0xff]
        %v449 = vld [vmem:[#allocation2 + $0xf9] sm:$0xff]
        %v450 = vld [vmem:[#allocation2 + $0x109] sm:$0xff]
        %v451 = vld [vmem:[#allocation2 + $0x111] sm:$0xff]
        %v452 = vld [vmem:[#allocation2 + $0x121] sm:$0xff]
        %v453 = vld [vmem:[#allocation2 + $0x129] sm:$0xff]
        %v454 = vld [vmem:[#allocation2 + $0x139] sm:$0xff]
        %v455 = vld [vmem:[#allocation2 + $0x141] sm:$0xff]
        %v456 = vld [vmem:[#allocation2 + $0x151] sm:$0xff]
        %v457 = vld [vmem:[#allocation2 + $0x159] sm:$0xff]
        %v458 = vld [vmem:[#allocation2 + $0x169] sm:$0xff]
        %v459 = vld [vmem:[#allocation2 + $0x171] sm:$0xff]
        %v461 = vrot.slane %v394, 4
        %v463 = vsel %vm240, %v428, 0
        %v466 = vsel %vm240, %v429, 0
        %v469 = vsel %vm240, %v430, 0
        %v472 = vsel %vm240, %v431, 0
        %v475 = vsel %vm240, %v432, 0
        %v478 = vsel %vm240, %v433, 0
        %v481 = vsel %vm240, %v434, 0
        %v484 = vsel %vm240, %v435, 0
        %v487 = vsel %vm240, %v436, 0
        %v490 = vsel %vm240, %v437, 0
        %v493 = vsel %vm240, %v438, 0
        %v496 = vsel %vm240, %v439, 0
        %v499 = vsel %vm240, %v440, 0
        %v502 = vsel %vm240, %v441, 0
        %v505 = vsel %vm240, %v442, 0
        %v508 = vsel %vm240, %v443, 0
        %v511 = vsel %vm240, %v444, 0
        %v514 = vsel %vm240, %v445, 0
        %v517 = vsel %vm240, %v446, 0
        %v520 = vsel %vm240, %v447, 0
        %v523 = vsel %vm240, %v448, 0
        %v526 = vsel %vm240, %v449, 0
        %v529 = vsel %vm240, %v450, 0
        %v532 = vsel %vm240, %v451, 0
        %v535 = vsel %vm240, %v452, 0
        %v538 = vsel %vm240, %v453, 0
        %v541 = vsel %vm240, %v454, 0
        %v544 = vsel %vm240, %v455, 0
        %v547 = vsel %vm240, %v456, 0
        %v550 = vsel %vm240, %v457, 0
        %v553 = vsel %vm240, %v458, 0
        %v556 = vsel %vm240, %v459, 0
        %vm558 = vcmask 1043456
        %v559 = vsel %vm558, %v461, 0
        %561 = vmatpush.msra.mxu0 0.0
        %562 = vmatpush.msra.mxu0 0.0
        %563 = vmatpush.msra.mxu0 0.0
        %564 = vmatpush.msra.mxu0 0.0
        %565 = vmatpush.msra.mxu0 0.0
        %566 = vmatpush.msra.mxu0 0.0
        %567 = vmatpush.msra.mxu0 0.0
        %568 = vmatpush.msra.mxu0 0.0
        %569 = vmatpush.msra.mxu0 0.0
        %570 = vmatpush.msra.mxu0 0.0
        %571 = vmatpush.msra.mxu0 0.0
        %572 = vmatpush.msra.mxu0 0.0
        %573 = vmatpush.msra.mxu0 0.0
        %574 = vmatpush.msra.mxu0 0.0
        %575 = vmatpush.msra.mxu0 0.0
        %576 = vmatpush.msra.mxu0 %v559
        %577 = vmatmul.f32.gmra.mxu0 %v463
        %v578 = vpop.f32.mrf.mxu0
        %v579 = vadd.f32 0.0, %v578
        %580 = vmatmul.f32.gmra.mxu0 %v466
        %v581 = vpop.f32.mrf.mxu0
        %v582 = vadd.f32 0.0, %v581
        %583 = vmatmul.f32.gmra.mxu0 %v469
        %v584 = vpop.f32.mrf.mxu0
        %v585 = vadd.f32 0.0, %v584
        %586 = vmatmul.f32.gmra.mxu0 %v472
        %v587 = vpop.f32.mrf.mxu0
        %v588 = vadd.f32 0.0, %v587
        %589 = vmatmul.f32.gmra.mxu0 %v475
        %v590 = vpop.f32.mrf.mxu0
        %v591 = vadd.f32 0.0, %v590
        %592 = vmatmul.f32.gmra.mxu0 %v478
        %v593 = vpop.f32.mrf.mxu0
        %v594 = vadd.f32 0.0, %v593
        %595 = vmatmul.f32.gmra.mxu0 %v481
        %v596 = vpop.f32.mrf.mxu0
        %v597 = vadd.f32 0.0, %v596
        %598 = vmatmul.f32.gmra.mxu0 %v484
        %v599 = vpop.f32.mrf.mxu0
        %v600 = vadd.f32 0.0, %v599
        %601 = vmatmul.f32.gmra.mxu0 %v487
        %v602 = vpop.f32.mrf.mxu0
        %v603 = vadd.f32 0.0, %v602
        %604 = vmatmul.f32.gmra.mxu0 %v490
        %v605 = vpop.f32.mrf.mxu0
        %v606 = vadd.f32 0.0, %v605
        %607 = vmatmul.f32.gmra.mxu0 %v493
        %v608 = vpop.f32.mrf.mxu0
        %v609 = vadd.f32 0.0, %v608
        %610 = vmatmul.f32.gmra.mxu0 %v496
        %v611 = vpop.f32.mrf.mxu0
        %v612 = vadd.f32 0.0, %v611
        %613 = vmatmul.f32.gmra.mxu0 %v499
        %v614 = vpop.f32.mrf.mxu0
        %v615 = vadd.f32 0.0, %v614
        %616 = vmatmul.f32.gmra.mxu0 %v502
        %v617 = vpop.f32.mrf.mxu0
        %v618 = vadd.f32 0.0, %v617
        %619 = vmatmul.f32.gmra.mxu0 %v505
        %v620 = vpop.f32.mrf.mxu0
        %v621 = vadd.f32 0.0, %v620
        %622 = vmatmul.f32.gmra.mxu0 %v508
        %v623 = vpop.f32.mrf.mxu0
        %v624 = vadd.f32 0.0, %v623
        %625 = vmatmul.f32.gmra.mxu0 %v511
        %v626 = vpop.f32.mrf.mxu0
        %v627 = vadd.f32 0.0, %v626
        %628 = vmatmul.f32.gmra.mxu0 %v514
        %v629 = vpop.f32.mrf.mxu0
        %v630 = vadd.f32 0.0, %v629
        %631 = vmatmul.f32.gmra.mxu0 %v517
        %v632 = vpop.f32.mrf.mxu0
        %v633 = vadd.f32 0.0, %v632
        %634 = vmatmul.f32.gmra.mxu0 %v520
        %v635 = vpop.f32.mrf.mxu0
        %v636 = vadd.f32 0.0, %v635
        %637 = vmatmul.f32.gmra.mxu0 %v523
        %v638 = vpop.f32.mrf.mxu0
        %v639 = vadd.f32 0.0, %v638
        %640 = vmatmul.f32.gmra.mxu0 %v526
        %v641 = vpop.f32.mrf.mxu0
        %v642 = vadd.f32 0.0, %v641
        %643 = vmatmul.f32.gmra.mxu0 %v529
        %v644 = vpop.f32.mrf.mxu0
        %v645 = vadd.f32 0.0, %v644
        %646 = vmatmul.f32.gmra.mxu0 %v532
        %v647 = vpop.f32.mrf.mxu0
        %v648 = vadd.f32 0.0, %v647
        %649 = vmatmul.f32.gmra.mxu0 %v535
        %v650 = vpop.f32.mrf.mxu0
        %v651 = vadd.f32 0.0, %v650
        %652 = vmatmul.f32.gmra.mxu0 %v538
        %v653 = vpop.f32.mrf.mxu0
        %v654 = vadd.f32 0.0, %v653
        %655 = vmatmul.f32.gmra.mxu0 %v541
        %v656 = vpop.f32.mrf.mxu0
        %v657 = vadd.f32 0.0, %v656
        %658 = vmatmul.f32.gmra.mxu0 %v544
        %v659 = vpop.f32.mrf.mxu0
        %v660 = vadd.f32 0.0, %v659
        %661 = vmatmul.f32.gmra.mxu0 %v547
        %v662 = vpop.f32.mrf.mxu0
        %v663 = vadd.f32 0.0, %v662
        %664 = vmatmul.f32.gmra.mxu0 %v550
        %v665 = vpop.f32.mrf.mxu0
        %v666 = vadd.f32 0.0, %v665
        %667 = vmatmul.f32.gmra.mxu0 %v553
        %v668 = vpop.f32.mrf.mxu0
        %v669 = vadd.f32 0.0, %v668
        %670 = vmatmul.f32.gmra.mxu0 %v556
        %v671 = vpop.f32.mrf.mxu0
        %v672 = vadd.f32 0.0, %v671
        %673 = vdwg.mxu0
        %v675 = vsel %vm240, %v396, 0
        %v678 = vsel %vm240, %v397, 0
        %v681 = vsel %vm240, %v398, 0
        %v684 = vsel %vm240, %v399, 0
        %v687 = vsel %vm240, %v400, 0
        %v690 = vsel %vm240, %v401, 0
        %v693 = vsel %vm240, %v402, 0
        %v696 = vsel %vm240, %v403, 0
        %v699 = vsel %vm240, %v404, 0
        %v702 = vsel %vm240, %v405, 0
        %v705 = vsel %vm240, %v406, 0
        %v708 = vsel %vm240, %v407, 0
        %v711 = vsel %vm240, %v408, 0
        %v714 = vsel %vm240, %v409, 0
        %v717 = vsel %vm240, %v410, 0
        %v720 = vsel %vm240, %v411, 0
        %v723 = vsel %vm240, %v412, 0
        %v726 = vsel %vm240, %v413, 0
        %v729 = vsel %vm240, %v414, 0
        %v732 = vsel %vm240, %v415, 0
        %v735 = vsel %vm240, %v416, 0
        %v738 = vsel %vm240, %v417, 0
        %v741 = vsel %vm240, %v418, 0
        %v744 = vsel %vm240, %v419, 0
        %v747 = vsel %vm240, %v420, 0
        %v750 = vsel %vm240, %v421, 0
        %v753 = vsel %vm240, %v422, 0
        %v756 = vsel %vm240, %v423, 0
        %v759 = vsel %vm240, %v424, 0
        %v762 = vsel %vm240, %v425, 0
        %v765 = vsel %vm240, %v426, 0
        %v768 = vsel %vm240, %v427, 0
        %v770 = vsel %vm558, %v394, 0
        %772 = vmatpush.msra.mxu0 0.0
        %773 = vmatpush.msra.mxu0 0.0
        %774 = vmatpush.msra.mxu0 0.0
        %775 = vmatpush.msra.mxu0 0.0
        %776 = vmatpush.msra.mxu0 0.0
        %777 = vmatpush.msra.mxu0 0.0
        %778 = vmatpush.msra.mxu0 0.0
        %779 = vmatpush.msra.mxu0 0.0
        %780 = vmatpush.msra.mxu0 0.0
        %781 = vmatpush.msra.mxu0 0.0
        %782 = vmatpush.msra.mxu0 0.0
        %783 = vmatpush.msra.mxu0 0.0
        %784 = vmatpush.msra.mxu0 0.0
        %785 = vmatpush.msra.mxu0 0.0
        %786 = vmatpush.msra.mxu0 0.0
        %787 = vmatpush.msra.mxu0 %v770
        %788 = vmatmul.f32.gmra.mxu0 %v675
        %v789 = vpop.f32.mrf.mxu0
        %v790 = vadd.f32 %v579, %v789
        %791 = vmatmul.f32.gmra.mxu0 %v678
        %v792 = vpop.f32.mrf.mxu0
        %v793 = vadd.f32 %v582, %v792
        %794 = vmatmul.f32.gmra.mxu0 %v681
        %v795 = vpop.f32.mrf.mxu0
        %v796 = vadd.f32 %v585, %v795
        %797 = vmatmul.f32.gmra.mxu0 %v684
        %v798 = vpop.f32.mrf.mxu0
        %v799 = vadd.f32 %v588, %v798
        %800 = vmatmul.f32.gmra.mxu0 %v687
        %v801 = vpop.f32.mrf.mxu0
        %v802 = vadd.f32 %v591, %v801
        %803 = vmatmul.f32.gmra.mxu0 %v690
        %v804 = vpop.f32.mrf.mxu0
        %v805 = vadd.f32 %v594, %v804
        %806 = vmatmul.f32.gmra.mxu0 %v693
        %v807 = vpop.f32.mrf.mxu0
        %v808 = vadd.f32 %v597, %v807
        %809 = vmatmul.f32.gmra.mxu0 %v696
        %v810 = vpop.f32.mrf.mxu0
        %v811 = vadd.f32 %v600, %v810
        %812 = vmatmul.f32.gmra.mxu0 %v699
        %v813 = vpop.f32.mrf.mxu0
        %v814 = vadd.f32 %v603, %v813
        %815 = vmatmul.f32.gmra.mxu0 %v702
        %v816 = vpop.f32.mrf.mxu0
        %v817 = vadd.f32 %v606, %v816
        %818 = vmatmul.f32.gmra.mxu0 %v705
        %v819 = vpop.f32.mrf.mxu0
        %v820 = vadd.f32 %v609, %v819
        %821 = vmatmul.f32.gmra.mxu0 %v708
        %v822 = vpop.f32.mrf.mxu0
        %v823 = vadd.f32 %v612, %v822
        %824 = vmatmul.f32.gmra.mxu0 %v711
        %v825 = vpop.f32.mrf.mxu0
        %v826 = vadd.f32 %v615, %v825
        %827 = vmatmul.f32.gmra.mxu0 %v714
        %v828 = vpop.f32.mrf.mxu0
        %v829 = vadd.f32 %v618, %v828
        %830 = vmatmul.f32.gmra.mxu0 %v717
        %v831 = vpop.f32.mrf.mxu0
        %v832 = vadd.f32 %v621, %v831
        %833 = vmatmul.f32.gmra.mxu0 %v720
        %v834 = vpop.f32.mrf.mxu0
        %v835 = vadd.f32 %v624, %v834
        %836 = vmatmul.f32.gmra.mxu0 %v723
        %v837 = vpop.f32.mrf.mxu0
        %v838 = vadd.f32 %v627, %v837
        %839 = vmatmul.f32.gmra.mxu0 %v726
        %v840 = vpop.f32.mrf.mxu0
        %v841 = vadd.f32 %v630, %v840
        %842 = vmatmul.f32.gmra.mxu0 %v729
        %v843 = vpop.f32.mrf.mxu0
        %v844 = vadd.f32 %v633, %v843
        %845 = vmatmul.f32.gmra.mxu0 %v732
        %v846 = vpop.f32.mrf.mxu0
        %v847 = vadd.f32 %v636, %v846
        %848 = vmatmul.f32.gmra.mxu0 %v735
        %v849 = vpop.f32.mrf.mxu0
        %v850 = vadd.f32 %v639, %v849
        %851 = vmatmul.f32.gmra.mxu0 %v738
        %v852 = vpop.f32.mrf.mxu0
        %v853 = vadd.f32 %v642, %v852
        %854 = vmatmul.f32.gmra.mxu0 %v741
        %v855 = vpop.f32.mrf.mxu0
        %v856 = vadd.f32 %v645, %v855
        %857 = vmatmul.f32.gmra.mxu0 %v744
        %v858 = vpop.f32.mrf.mxu0
        %v859 = vadd.f32 %v648, %v858
        %860 = vmatmul.f32.gmra.mxu0 %v747
        %v861 = vpop.f32.mrf.mxu0
        %v862 = vadd.f32 %v651, %v861
        %863 = vmatmul.f32.gmra.mxu0 %v750
        %v864 = vpop.f32.mrf.mxu0
        %v865 = vadd.f32 %v654, %v864
        %866 = vmatmul.f32.gmra.mxu0 %v753
        %v867 = vpop.f32.mrf.mxu0
        %v868 = vadd.f32 %v657, %v867
        %869 = vmatmul.f32.gmra.mxu0 %v756
        %v870 = vpop.f32.mrf.mxu0
        %v871 = vadd.f32 %v660, %v870
        %872 = vmatmul.f32.gmra.mxu0 %v759
        %v873 = vpop.f32.mrf.mxu0
        %v874 = vadd.f32 %v663, %v873
        %875 = vmatmul.f32.gmra.mxu0 %v762
        %v876 = vpop.f32.mrf.mxu0
        %v877 = vadd.f32 %v666, %v876
        %878 = vmatmul.f32.gmra.mxu0 %v765
        %v879 = vpop.f32.mrf.mxu0
        %v880 = vadd.f32 %v669, %v879
        %881 = vmatmul.f32.gmra.mxu0 %v768
        %v882 = vpop.f32.mrf.mxu0
        %v883 = vadd.f32 %v672, %v882
        %884 = vdwg.mxu0
        %v885 = vld [vmem:[#allocation2 + $0x2] sm:$0xff]
        %v886 = vld [vmem:[#allocation2 + $0xa] sm:$0xff]
        %v887 = vld [vmem:[#allocation2 + $0x1a] sm:$0xff]
        %v888 = vld [vmem:[#allocation2 + $0x22] sm:$0xff]
        %v889 = vld [vmem:[#allocation2 + $0x32] sm:$0xff]
        %v890 = vld [vmem:[#allocation2 + $0x3a] sm:$0xff]
        %v891 = vld [vmem:[#allocation2 + $0x4a] sm:$0xff]
        %v892 = vld [vmem:[#allocation2 + $0x52] sm:$0xff]
        %v893 = vld [vmem:[#allocation2 + $0x62] sm:$0xff]
        %v894 = vld [vmem:[#allocation2 + $0x6a] sm:$0xff]
        %v895 = vld [vmem:[#allocation2 + $0x7a] sm:$0xff]
        %v896 = vld [vmem:[#allocation2 + $0x82] sm:$0xff]
        %v897 = vld [vmem:[#allocation2 + $0x92] sm:$0xff]
        %v898 = vld [vmem:[#allocation2 + $0x9a] sm:$0xff]
        %v899 = vld [vmem:[#allocation2 + $0xaa] sm:$0xff]
        %v900 = vld [vmem:[#allocation2 + $0xb2] sm:$0xff]
        %v901 = vld [vmem:[#allocation2 + $0xc2] sm:$0xff]
        %v902 = vld [vmem:[#allocation2 + $0xca] sm:$0xff]
        %v903 = vld [vmem:[#allocation2 + $0xda] sm:$0xff]
        %v904 = vld [vmem:[#allocation2 + $0xe2] sm:$0xff]
        %v905 = vld [vmem:[#allocation2 + $0xf2] sm:$0xff]
        %v906 = vld [vmem:[#allocation2 + $0xfa] sm:$0xff]
        %v907 = vld [vmem:[#allocation2 + $0x10a] sm:$0xff]
        %v908 = vld [vmem:[#allocation2 + $0x112] sm:$0xff]
        %v909 = vld [vmem:[#allocation2 + $0x122] sm:$0xff]
        %v910 = vld [vmem:[#allocation2 + $0x12a] sm:$0xff]
        %v911 = vld [vmem:[#allocation2 + $0x13a] sm:$0xff]
        %v912 = vld [vmem:[#allocation2 + $0x142] sm:$0xff]
        %v913 = vld [vmem:[#allocation2 + $0x152] sm:$0xff]
        %v914 = vld [vmem:[#allocation2 + $0x15a] sm:$0xff]
        %v915 = vld [vmem:[#allocation2 + $0x16a] sm:$0xff]
        %v916 = vld [vmem:[#allocation2 + $0x172] sm:$0xff]
        %v918 = vsel %vm240, %v885, 0
        %v921 = vsel %vm240, %v886, 0
        %v924 = vsel %vm240, %v887, 0
        %v927 = vsel %vm240, %v888, 0
        %v930 = vsel %vm240, %v889, 0
        %v933 = vsel %vm240, %v890, 0
        %v936 = vsel %vm240, %v891, 0
        %v939 = vsel %vm240, %v892, 0
        %v942 = vsel %vm240, %v893, 0
        %v945 = vsel %vm240, %v894, 0
        %v948 = vsel %vm240, %v895, 0
        %v951 = vsel %vm240, %v896, 0
        %v954 = vsel %vm240, %v897, 0
        %v957 = vsel %vm240, %v898, 0
        %v960 = vsel %vm240, %v899, 0
        %v963 = vsel %vm240, %v900, 0
        %v966 = vsel %vm240, %v901, 0
        %v969 = vsel %vm240, %v902, 0
        %v972 = vsel %vm240, %v903, 0
        %v975 = vsel %vm240, %v904, 0
        %v978 = vsel %vm240, %v905, 0
        %v981 = vsel %vm240, %v906, 0
        %v984 = vsel %vm240, %v907, 0
        %v987 = vsel %vm240, %v908, 0
        %v990 = vsel %vm240, %v909, 0
        %v993 = vsel %vm240, %v910, 0
        %v996 = vsel %vm240, %v911, 0
        %v999 = vsel %vm240, %v912, 0
        %v1002 = vsel %vm240, %v913, 0
        %v1005 = vsel %vm240, %v914, 0
        %v1008 = vsel %vm240, %v915, 0
        %v1011 = vsel %vm240, %v916, 0
        %v1014 = vsel %vm558, %v395, 0
        %1016 = vmatpush.msra.mxu0 0.0
        %1017 = vmatpush.msra.mxu0 0.0
        %1018 = vmatpush.msra.mxu0 0.0
        %1019 = vmatpush.msra.mxu0 0.0
        %1020 = vmatpush.msra.mxu0 0.0
        %1021 = vmatpush.msra.mxu0 0.0
        %1022 = vmatpush.msra.mxu0 0.0
        %1023 = vmatpush.msra.mxu0 0.0
        %1024 = vmatpush.msra.mxu0 0.0
        %1025 = vmatpush.msra.mxu0 0.0
        %1026 = vmatpush.msra.mxu0 0.0
        %1027 = vmatpush.msra.mxu0 0.0
        %1028 = vmatpush.msra.mxu0 0.0
        %1029 = vmatpush.msra.mxu0 0.0
        %1030 = vmatpush.msra.mxu0 0.0
        %1031 = vmatpush.msra.mxu0 %v1014
        %1032 = vmatmul.f32.gmra.mxu0 %v918
        %v1033 = vpop.f32.mrf.mxu0
        %v1034 = vadd.f32 0.0, %v1033
        %1035 = vmatmul.f32.gmra.mxu0 %v921
        %v1036 = vpop.f32.mrf.mxu0
        %v1037 = vadd.f32 0.0, %v1036
        %1038 = vmatmul.f32.gmra.mxu0 %v924
        %v1039 = vpop.f32.mrf.mxu0
        %v1040 = vadd.f32 0.0, %v1039
        %1041 = vmatmul.f32.gmra.mxu0 %v927
        %v1042 = vpop.f32.mrf.mxu0
        %v1043 = vadd.f32 0.0, %v1042
        %1044 = vmatmul.f32.gmra.mxu0 %v930
        %v1045 = vpop.f32.mrf.mxu0
        %v1046 = vadd.f32 0.0, %v1045
        %1047 = vmatmul.f32.gmra.mxu0 %v933
        %v1048 = vpop.f32.mrf.mxu0
        %v1049 = vadd.f32 0.0, %v1048
        %1050 = vmatmul.f32.gmra.mxu0 %v936
        %v1051 = vpop.f32.mrf.mxu0
        %v1052 = vadd.f32 0.0, %v1051
        %1053 = vmatmul.f32.gmra.mxu0 %v939
        %v1054 = vpop.f32.mrf.mxu0
        %v1055 = vadd.f32 0.0, %v1054
        %1056 = vmatmul.f32.gmra.mxu0 %v942
        %v1057 = vpop.f32.mrf.mxu0
        %v1058 = vadd.f32 0.0, %v1057
        %1059 = vmatmul.f32.gmra.mxu0 %v945
        %v1060 = vpop.f32.mrf.mxu0
        %v1061 = vadd.f32 0.0, %v1060
        %1062 = vmatmul.f32.gmra.mxu0 %v948
        %v1063 = vpop.f32.mrf.mxu0
        %v1064 = vadd.f32 0.0, %v1063
        %1065 = vmatmul.f32.gmra.mxu0 %v951
        %v1066 = vpop.f32.mrf.mxu0
        %v1067 = vadd.f32 0.0, %v1066
        %1068 = vmatmul.f32.gmra.mxu0 %v954
        %v1069 = vpop.f32.mrf.mxu0
        %v1070 = vadd.f32 0.0, %v1069
        %1071 = vmatmul.f32.gmra.mxu0 %v957
        %v1072 = vpop.f32.mrf.mxu0
        %v1073 = vadd.f32 0.0, %v1072
        %1074 = vmatmul.f32.gmra.mxu0 %v960
        %v1075 = vpop.f32.mrf.mxu0
        %v1076 = vadd.f32 0.0, %v1075
        %1077 = vmatmul.f32.gmra.mxu0 %v963
        %v1078 = vpop.f32.mrf.mxu0
        %v1079 = vadd.f32 0.0, %v1078
        %1080 = vmatmul.f32.gmra.mxu0 %v966
        %v1081 = vpop.f32.mrf.mxu0
        %v1082 = vadd.f32 0.0, %v1081
        %1083 = vmatmul.f32.gmra.mxu0 %v969
        %v1084 = vpop.f32.mrf.mxu0
        %v1085 = vadd.f32 0.0, %v1084
        %1086 = vmatmul.f32.gmra.mxu0 %v972
        %v1087 = vpop.f32.mrf.mxu0
        %v1088 = vadd.f32 0.0, %v1087
        %1089 = vmatmul.f32.gmra.mxu0 %v975
        %v1090 = vpop.f32.mrf.mxu0
        %v1091 = vadd.f32 0.0, %v1090
        %1092 = vmatmul.f32.gmra.mxu0 %v978
        %v1093 = vpop.f32.mrf.mxu0
        %v1094 = vadd.f32 0.0, %v1093
        %1095 = vmatmul.f32.gmra.mxu0 %v981
        %v1096 = vpop.f32.mrf.mxu0
        %v1097 = vadd.f32 0.0, %v1096
        %1098 = vmatmul.f32.gmra.mxu0 %v984
        %v1099 = vpop.f32.mrf.mxu0
        %v1100 = vadd.f32 0.0, %v1099
        %1101 = vmatmul.f32.gmra.mxu0 %v987
        %v1102 = vpop.f32.mrf.mxu0
        %v1103 = vadd.f32 0.0, %v1102
        %1104 = vmatmul.f32.gmra.mxu0 %v990
        %v1105 = vpop.f32.mrf.mxu0
        %v1106 = vadd.f32 0.0, %v1105
        %1107 = vmatmul.f32.gmra.mxu0 %v993
        %v1108 = vpop.f32.mrf.mxu0
        %v1109 = vadd.f32 0.0, %v1108
        %1110 = vmatmul.f32.gmra.mxu0 %v996
        %v1111 = vpop.f32.mrf.mxu0
        %v1112 = vadd.f32 0.0, %v1111
        %1113 = vmatmul.f32.gmra.mxu0 %v999
        %v1114 = vpop.f32.mrf.mxu0
        %v1115 = vadd.f32 0.0, %v1114
        %1116 = vmatmul.f32.gmra.mxu0 %v1002
        %v1117 = vpop.f32.mrf.mxu0
        %v1118 = vadd.f32 0.0, %v1117
        %1119 = vmatmul.f32.gmra.mxu0 %v1005
        %v1120 = vpop.f32.mrf.mxu0
        %v1121 = vadd.f32 0.0, %v1120
        %1122 = vmatmul.f32.gmra.mxu0 %v1008
        %v1123 = vpop.f32.mrf.mxu0
        %v1124 = vadd.f32 0.0, %v1123
        %1125 = vmatmul.f32.gmra.mxu0 %v1011
        %v1126 = vpop.f32.mrf.mxu0
        %v1127 = vadd.f32 0.0, %v1126
        %1128 = vdwg.mxu0
        %v1129 = vadd.f32 %v790, %v1034
        %v1130 = vadd.f32 %v793, %v1037
        %v1131 = vadd.f32 %v796, %v1040
        %v1132 = vadd.f32 %v799, %v1043
        %v1133 = vadd.f32 %v802, %v1046
        %v1134 = vadd.f32 %v805, %v1049
        %v1135 = vadd.f32 %v808, %v1052
        %v1136 = vadd.f32 %v811, %v1055
        %v1137 = vadd.f32 %v814, %v1058
        %v1138 = vadd.f32 %v817, %v1061
        %v1139 = vadd.f32 %v820, %v1064
        %v1140 = vadd.f32 %v823, %v1067
        %v1141 = vadd.f32 %v826, %v1070
        %v1142 = vadd.f32 %v829, %v1073
        %v1143 = vadd.f32 %v832, %v1076
        %v1144 = vadd.f32 %v835, %v1079
        %v1145 = vadd.f32 %v838, %v1082
        %v1146 = vadd.f32 %v841, %v1085
        %v1147 = vadd.f32 %v844, %v1088
        %v1148 = vadd.f32 %v847, %v1091
        %v1149 = vadd.f32 %v850, %v1094
        %v1150 = vadd.f32 %v853, %v1097
        %v1151 = vadd.f32 %v856, %v1100
        %v1152 = vadd.f32 %v859, %v1103
        %v1153 = vadd.f32 %v862, %v1106
        %v1154 = vadd.f32 %v865, %v1109
        %v1155 = vadd.f32 %v868, %v1112
        %v1156 = vadd.f32 %v871, %v1115
        %v1157 = vadd.f32 %v874, %v1118
        %v1158 = vadd.f32 %v877, %v1121
        %v1159 = vadd.f32 %v880, %v1124
        %v1160 = vadd.f32 %v883, %v1127
        %s1161 = scalar_lea.vmem %s1, 16
        %v1162 = vld [vmem:[%s1161] sm:$0xff]
        %v1163 = vld [vmem:[%s1161 + $0x8] sm:$0xf]
        %v1164 = vld [vmem:[%s361] sm:$0xff]
        %v1165 = vld [vmem:[%s361 + $0x8] sm:$0xff]
        %v1166 = vld [vmem:[%s361 + $0x18] sm:$0xff]
        %v1167 = vld [vmem:[%s361 + $0x20] sm:$0xff]
        %v1168 = vld [vmem:[%s361 + $0x30] sm:$0xff]
        %v1169 = vld [vmem:[%s361 + $0x38] sm:$0xff]
        %v1170 = vld [vmem:[%s361 + $0x48] sm:$0xff]
        %v1171 = vld [vmem:[%s361 + $0x50] sm:$0xff]
        %v1172 = vld [vmem:[%s361 + $0x60] sm:$0xff]
        %v1173 = vld [vmem:[%s361 + $0x68] sm:$0xff]
        %v1174 = vld [vmem:[%s361 + $0x78] sm:$0xff]
        %v1175 = vld [vmem:[%s361 + $0x80] sm:$0xff]
        %v1176 = vld [vmem:[%s361 + $0x90] sm:$0xff]
        %v1177 = vld [vmem:[%s361 + $0x98] sm:$0xff]
        %v1178 = vld [vmem:[%s361 + $0xa8] sm:$0xff]
        %v1179 = vld [vmem:[%s361 + $0xb0] sm:$0xff]
        %v1180 = vld [vmem:[%s361 + $0xc0] sm:$0xff]
        %v1181 = vld [vmem:[%s361 + $0xc8] sm:$0xff]
        %v1182 = vld [vmem:[%s361 + $0xd8] sm:$0xff]
        %v1183 = vld [vmem:[%s361 + $0xe0] sm:$0xff]
        %v1184 = vld [vmem:[%s361 + $0xf0] sm:$0xff]
        %v1185 = vld [vmem:[%s361 + $0xf8] sm:$0xff]
        %v1186 = vld [vmem:[%s361 + $0x108] sm:$0xff]
        %v1187 = vld [vmem:[%s361 + $0x110] sm:$0xff]
        %v1188 = vld [vmem:[%s361 + $0x120] sm:$0xff]
        %v1189 = vld [vmem:[%s361 + $0x128] sm:$0xff]
        %v1190 = vld [vmem:[%s361 + $0x138] sm:$0xff]
        %v1191 = vld [vmem:[%s361 + $0x140] sm:$0xff]
        %v1192 = vld [vmem:[%s361 + $0x150] sm:$0xff]
        %v1193 = vld [vmem:[%s361 + $0x158] sm:$0xff]
        %v1194 = vld [vmem:[%s361 + $0x168] sm:$0xff]
        %v1195 = vld [vmem:[%s361 + $0x170] sm:$0xff]
        %v1196 = vld [vmem:[%s361 + $0x1] sm:$0xff]
        %v1197 = vld [vmem:[%s361 + $0x9] sm:$0xff]
        %v1198 = vld [vmem:[%s361 + $0x19] sm:$0xff]
        %v1199 = vld [vmem:[%s361 + $0x21] sm:$0xff]
        %v1200 = vld [vmem:[%s361 + $0x31] sm:$0xff]
        %v1201 = vld [vmem:[%s361 + $0x39] sm:$0xff]
        %v1202 = vld [vmem:[%s361 + $0x49] sm:$0xff]
        %v1203 = vld [vmem:[%s361 + $0x51] sm:$0xff]
        %v1204 = vld [vmem:[%s361 + $0x61] sm:$0xff]
        %v1205 = vld [vmem:[%s361 + $0x69] sm:$0xff]
        %v1206 = vld [vmem:[%s361 + $0x79] sm:$0xff]
        %v1207 = vld [vmem:[%s361 + $0x81] sm:$0xff]
        %v1208 = vld [vmem:[%s361 + $0x91] sm:$0xff]
        %v1209 = vld [vmem:[%s361 + $0x99] sm:$0xff]
        %v1210 = vld [vmem:[%s361 + $0xa9] sm:$0xff]
        %v1211 = vld [vmem:[%s361 + $0xb1] sm:$0xff]
        %v1212 = vld [vmem:[%s361 + $0xc1] sm:$0xff]
        %v1213 = vld [vmem:[%s361 + $0xc9] sm:$0xff]
        %v1214 = vld [vmem:[%s361 + $0xd9] sm:$0xff]
        %v1215 = vld [vmem:[%s361 + $0xe1] sm:$0xff]
        %v1216 = vld [vmem:[%s361 + $0xf1] sm:$0xff]
        %v1217 = vld [vmem:[%s361 + $0xf9] sm:$0xff]
        %v1218 = vld [vmem:[%s361 + $0x109] sm:$0xff]
        %v1219 = vld [vmem:[%s361 + $0x111] sm:$0xff]
        %v1220 = vld [vmem:[%s361 + $0x121] sm:$0xff]
        %v1221 = vld [vmem:[%s361 + $0x129] sm:$0xff]
        %v1222 = vld [vmem:[%s361 + $0x139] sm:$0xff]
        %v1223 = vld [vmem:[%s361 + $0x141] sm:$0xff]
        %v1224 = vld [vmem:[%s361 + $0x151] sm:$0xff]
        %v1225 = vld [vmem:[%s361 + $0x159] sm:$0xff]
        %v1226 = vld [vmem:[%s361 + $0x169] sm:$0xff]
        %v1227 = vld [vmem:[%s361 + $0x171] sm:$0xff]
        %v1229 = vrot.slane %v1162, 4
        %v1231 = vsel %vm240, %v1196, 0
        %v1234 = vsel %vm240, %v1197, 0
        %v1237 = vsel %vm240, %v1198, 0
        %v1240 = vsel %vm240, %v1199, 0
        %v1243 = vsel %vm240, %v1200, 0
        %v1246 = vsel %vm240, %v1201, 0
        %v1249 = vsel %vm240, %v1202, 0
        %v1252 = vsel %vm240, %v1203, 0
        %v1255 = vsel %vm240, %v1204, 0
        %v1258 = vsel %vm240, %v1205, 0
        %v1261 = vsel %vm240, %v1206, 0
        %v1264 = vsel %vm240, %v1207, 0
        %v1267 = vsel %vm240, %v1208, 0
        %v1270 = vsel %vm240, %v1209, 0
        %v1273 = vsel %vm240, %v1210, 0
        %v1276 = vsel %vm240, %v1211, 0
        %v1279 = vsel %vm240, %v1212, 0
        %v1282 = vsel %vm240, %v1213, 0
        %v1285 = vsel %vm240, %v1214, 0
        %v1288 = vsel %vm240, %v1215, 0
        %v1291 = vsel %vm240, %v1216, 0
        %v1294 = vsel %vm240, %v1217, 0
        %v1297 = vsel %vm240, %v1218, 0
        %v1300 = vsel %vm240, %v1219, 0
        %v1303 = vsel %vm240, %v1220, 0
        %v1306 = vsel %vm240, %v1221, 0
        %v1309 = vsel %vm240, %v1222, 0
        %v1312 = vsel %vm240, %v1223, 0
        %v1315 = vsel %vm240, %v1224, 0
        %v1318 = vsel %vm240, %v1225, 0
        %v1321 = vsel %vm240, %v1226, 0
        %v1324 = vsel %vm240, %v1227, 0
        %v1326 = vsel %vm558, %v1229, 0
        %1328 = vmatpush.msra.mxu0 0.0
        %1329 = vmatpush.msra.mxu0 0.0
        %1330 = vmatpush.msra.mxu0 0.0
        %1331 = vmatpush.msra.mxu0 0.0
        %1332 = vmatpush.msra.mxu0 0.0
        %1333 = vmatpush.msra.mxu0 0.0
        %1334 = vmatpush.msra.mxu0 0.0
        %1335 = vmatpush.msra.mxu0 0.0
        %1336 = vmatpush.msra.mxu0 0.0
        %1337 = vmatpush.msra.mxu0 0.0
        %1338 = vmatpush.msra.mxu0 0.0
        %1339 = vmatpush.msra.mxu0 0.0
        %1340 = vmatpush.msra.mxu0 0.0
        %1341 = vmatpush.msra.mxu0 0.0
        %1342 = vmatpush.msra.mxu0 0.0
        %1343 = vmatpush.msra.mxu0 %v1326
        %1344 = vmatmul.f32.gmra.mxu0 %v1231
        %v1345 = vpop.f32.mrf.mxu0
        %v1346 = vadd.f32 0.0, %v1345
        %1347 = vmatmul.f32.gmra.mxu0 %v1234
        %v1348 = vpop.f32.mrf.mxu0
        %v1349 = vadd.f32 0.0, %v1348
        %1350 = vmatmul.f32.gmra.mxu0 %v1237
        %v1351 = vpop.f32.mrf.mxu0
        %v1352 = vadd.f32 0.0, %v1351
        %1353 = vmatmul.f32.gmra.mxu0 %v1240
        %v1354 = vpop.f32.mrf.mxu0
        %v1355 = vadd.f32 0.0, %v1354
        %1356 = vmatmul.f32.gmra.mxu0 %v1243
        %v1357 = vpop.f32.mrf.mxu0
        %v1358 = vadd.f32 0.0, %v1357
        %1359 = vmatmul.f32.gmra.mxu0 %v1246
        %v1360 = vpop.f32.mrf.mxu0
        %v1361 = vadd.f32 0.0, %v1360
        %1362 = vmatmul.f32.gmra.mxu0 %v1249
        %v1363 = vpop.f32.mrf.mxu0
        %v1364 = vadd.f32 0.0, %v1363
        %1365 = vmatmul.f32.gmra.mxu0 %v1252
        %v1366 = vpop.f32.mrf.mxu0
        %v1367 = vadd.f32 0.0, %v1366
        %1368 = vmatmul.f32.gmra.mxu0 %v1255
        %v1369 = vpop.f32.mrf.mxu0
        %v1370 = vadd.f32 0.0, %v1369
        %1371 = vmatmul.f32.gmra.mxu0 %v1258
        %v1372 = vpop.f32.mrf.mxu0
        %v1373 = vadd.f32 0.0, %v1372
        %1374 = vmatmul.f32.gmra.mxu0 %v1261
        %v1375 = vpop.f32.mrf.mxu0
        %v1376 = vadd.f32 0.0, %v1375
        %1377 = vmatmul.f32.gmra.mxu0 %v1264
        %v1378 = vpop.f32.mrf.mxu0
        %v1379 = vadd.f32 0.0, %v1378
        %1380 = vmatmul.f32.gmra.mxu0 %v1267
        %v1381 = vpop.f32.mrf.mxu0
        %v1382 = vadd.f32 0.0, %v1381
        %1383 = vmatmul.f32.gmra.mxu0 %v1270
        %v1384 = vpop.f32.mrf.mxu0
        %v1385 = vadd.f32 0.0, %v1384
        %1386 = vmatmul.f32.gmra.mxu0 %v1273
        %v1387 = vpop.f32.mrf.mxu0
        %v1388 = vadd.f32 0.0, %v1387
        %1389 = vmatmul.f32.gmra.mxu0 %v1276
        %v1390 = vpop.f32.mrf.mxu0
        %v1391 = vadd.f32 0.0, %v1390
        %1392 = vmatmul.f32.gmra.mxu0 %v1279
        %v1393 = vpop.f32.mrf.mxu0
        %v1394 = vadd.f32 0.0, %v1393
        %1395 = vmatmul.f32.gmra.mxu0 %v1282
        %v1396 = vpop.f32.mrf.mxu0
        %v1397 = vadd.f32 0.0, %v1396
        %1398 = vmatmul.f32.gmra.mxu0 %v1285
        %v1399 = vpop.f32.mrf.mxu0
        %v1400 = vadd.f32 0.0, %v1399
        %1401 = vmatmul.f32.gmra.mxu0 %v1288
        %v1402 = vpop.f32.mrf.mxu0
        %v1403 = vadd.f32 0.0, %v1402
        %1404 = vmatmul.f32.gmra.mxu0 %v1291
        %v1405 = vpop.f32.mrf.mxu0
        %v1406 = vadd.f32 0.0, %v1405
        %1407 = vmatmul.f32.gmra.mxu0 %v1294
        %v1408 = vpop.f32.mrf.mxu0
        %v1409 = vadd.f32 0.0, %v1408
        %1410 = vmatmul.f32.gmra.mxu0 %v1297
        %v1411 = vpop.f32.mrf.mxu0
        %v1412 = vadd.f32 0.0, %v1411
        %1413 = vmatmul.f32.gmra.mxu0 %v1300
        %v1414 = vpop.f32.mrf.mxu0
        %v1415 = vadd.f32 0.0, %v1414
        %1416 = vmatmul.f32.gmra.mxu0 %v1303
        %v1417 = vpop.f32.mrf.mxu0
        %v1418 = vadd.f32 0.0, %v1417
        %1419 = vmatmul.f32.gmra.mxu0 %v1306
        %v1420 = vpop.f32.mrf.mxu0
        %v1421 = vadd.f32 0.0, %v1420
        %1422 = vmatmul.f32.gmra.mxu0 %v1309
        %v1423 = vpop.f32.mrf.mxu0
        %v1424 = vadd.f32 0.0, %v1423
        %1425 = vmatmul.f32.gmra.mxu0 %v1312
        %v1426 = vpop.f32.mrf.mxu0
        %v1427 = vadd.f32 0.0, %v1426
        %1428 = vmatmul.f32.gmra.mxu0 %v1315
        %v1429 = vpop.f32.mrf.mxu0
        %v1430 = vadd.f32 0.0, %v1429
        %1431 = vmatmul.f32.gmra.mxu0 %v1318
        %v1432 = vpop.f32.mrf.mxu0
        %v1433 = vadd.f32 0.0, %v1432
        %1434 = vmatmul.f32.gmra.mxu0 %v1321
        %v1435 = vpop.f32.mrf.mxu0
        %v1436 = vadd.f32 0.0, %v1435
        %1437 = vmatmul.f32.gmra.mxu0 %v1324
        %v1438 = vpop.f32.mrf.mxu0
        %v1439 = vadd.f32 0.0, %v1438
        %1440 = vdwg.mxu0
        %v1442 = vsel %vm240, %v1164, 0
        %v1445 = vsel %vm240, %v1165, 0
        %v1448 = vsel %vm240, %v1166, 0
        %v1451 = vsel %vm240, %v1167, 0
        %v1454 = vsel %vm240, %v1168, 0
        %v1457 = vsel %vm240, %v1169, 0
        %v1460 = vsel %vm240, %v1170, 0
        %v1463 = vsel %vm240, %v1171, 0
        %v1466 = vsel %vm240, %v1172, 0
        %v1469 = vsel %vm240, %v1173, 0
        %v1472 = vsel %vm240, %v1174, 0
        %v1475 = vsel %vm240, %v1175, 0
        %v1478 = vsel %vm240, %v1176, 0
        %v1481 = vsel %vm240, %v1177, 0
        %v1484 = vsel %vm240, %v1178, 0
        %v1487 = vsel %vm240, %v1179, 0
        %v1490 = vsel %vm240, %v1180, 0
        %v1493 = vsel %vm240, %v1181, 0
        %v1496 = vsel %vm240, %v1182, 0
        %v1499 = vsel %vm240, %v1183, 0
        %v1502 = vsel %vm240, %v1184, 0
        %v1505 = vsel %vm240, %v1185, 0
        %v1508 = vsel %vm240, %v1186, 0
        %v1511 = vsel %vm240, %v1187, 0
        %v1514 = vsel %vm240, %v1188, 0
        %v1517 = vsel %vm240, %v1189, 0
        %v1520 = vsel %vm240, %v1190, 0
        %v1523 = vsel %vm240, %v1191, 0
        %v1526 = vsel %vm240, %v1192, 0
        %v1529 = vsel %vm240, %v1193, 0
        %v1532 = vsel %vm240, %v1194, 0
        %v1535 = vsel %vm240, %v1195, 0
        %v1537 = vsel %vm558, %v1162, 0
        %1539 = vmatpush.msra.mxu0 0.0
        %1540 = vmatpush.msra.mxu0 0.0
        %1541 = vmatpush.msra.mxu0 0.0
        %1542 = vmatpush.msra.mxu0 0.0
        %1543 = vmatpush.msra.mxu0 0.0
        %1544 = vmatpush.msra.mxu0 0.0
        %1545 = vmatpush.msra.mxu0 0.0
        %1546 = vmatpush.msra.mxu0 0.0
        %1547 = vmatpush.msra.mxu0 0.0
        %1548 = vmatpush.msra.mxu0 0.0
        %1549 = vmatpush.msra.mxu0 0.0
        %1550 = vmatpush.msra.mxu0 0.0
        %1551 = vmatpush.msra.mxu0 0.0
        %1552 = vmatpush.msra.mxu0 0.0
        %1553 = vmatpush.msra.mxu0 0.0
        %1554 = vmatpush.msra.mxu0 %v1537
        %1555 = vmatmul.f32.gmra.mxu0 %v1442
        %v1556 = vpop.f32.mrf.mxu0
        %v1557 = vadd.f32 %v1346, %v1556
        %1558 = vmatmul.f32.gmra.mxu0 %v1445
        %v1559 = vpop.f32.mrf.mxu0
        %v1560 = vadd.f32 %v1349, %v1559
        %1561 = vmatmul.f32.gmra.mxu0 %v1448
        %v1562 = vpop.f32.mrf.mxu0
        %v1563 = vadd.f32 %v1352, %v1562
        %1564 = vmatmul.f32.gmra.mxu0 %v1451
        %v1565 = vpop.f32.mrf.mxu0
        %v1566 = vadd.f32 %v1355, %v1565
        %1567 = vmatmul.f32.gmra.mxu0 %v1454
        %v1568 = vpop.f32.mrf.mxu0
        %v1569 = vadd.f32 %v1358, %v1568
        %1570 = vmatmul.f32.gmra.mxu0 %v1457
        %v1571 = vpop.f32.mrf.mxu0
        %v1572 = vadd.f32 %v1361, %v1571
        %1573 = vmatmul.f32.gmra.mxu0 %v1460
        %v1574 = vpop.f32.mrf.mxu0
        %v1575 = vadd.f32 %v1364, %v1574
        %1576 = vmatmul.f32.gmra.mxu0 %v1463
        %v1577 = vpop.f32.mrf.mxu0
        %v1578 = vadd.f32 %v1367, %v1577
        %1579 = vmatmul.f32.gmra.mxu0 %v1466
        %v1580 = vpop.f32.mrf.mxu0
        %v1581 = vadd.f32 %v1370, %v1580
        %1582 = vmatmul.f32.gmra.mxu0 %v1469
        %v1583 = vpop.f32.mrf.mxu0
        %v1584 = vadd.f32 %v1373, %v1583
        %1585 = vmatmul.f32.gmra.mxu0 %v1472
        %v1586 = vpop.f32.mrf.mxu0
        %v1587 = vadd.f32 %v1376, %v1586
        %1588 = vmatmul.f32.gmra.mxu0 %v1475
        %v1589 = vpop.f32.mrf.mxu0
        %v1590 = vadd.f32 %v1379, %v1589
        %1591 = vmatmul.f32.gmra.mxu0 %v1478
        %v1592 = vpop.f32.mrf.mxu0
        %v1593 = vadd.f32 %v1382, %v1592
        %1594 = vmatmul.f32.gmra.mxu0 %v1481
        %v1595 = vpop.f32.mrf.mxu0
        %v1596 = vadd.f32 %v1385, %v1595
        %1597 = vmatmul.f32.gmra.mxu0 %v1484
        %v1598 = vpop.f32.mrf.mxu0
        %v1599 = vadd.f32 %v1388, %v1598
        %1600 = vmatmul.f32.gmra.mxu0 %v1487
        %v1601 = vpop.f32.mrf.mxu0
        %v1602 = vadd.f32 %v1391, %v1601
        %1603 = vmatmul.f32.gmra.mxu0 %v1490
        %v1604 = vpop.f32.mrf.mxu0
        %v1605 = vadd.f32 %v1394, %v1604
        %1606 = vmatmul.f32.gmra.mxu0 %v1493
        %v1607 = vpop.f32.mrf.mxu0
        %v1608 = vadd.f32 %v1397, %v1607
        %1609 = vmatmul.f32.gmra.mxu0 %v1496
        %v1610 = vpop.f32.mrf.mxu0
        %v1611 = vadd.f32 %v1400, %v1610
        %1612 = vmatmul.f32.gmra.mxu0 %v1499
        %v1613 = vpop.f32.mrf.mxu0
        %v1614 = vadd.f32 %v1403, %v1613
        %1615 = vmatmul.f32.gmra.mxu0 %v1502
        %v1616 = vpop.f32.mrf.mxu0
        %v1617 = vadd.f32 %v1406, %v1616
        %1618 = vmatmul.f32.gmra.mxu0 %v1505
        %v1619 = vpop.f32.mrf.mxu0
        %v1620 = vadd.f32 %v1409, %v1619
        %1621 = vmatmul.f32.gmra.mxu0 %v1508
        %v1622 = vpop.f32.mrf.mxu0
        %v1623 = vadd.f32 %v1412, %v1622
        %1624 = vmatmul.f32.gmra.mxu0 %v1511
        %v1625 = vpop.f32.mrf.mxu0
        %v1626 = vadd.f32 %v1415, %v1625
        %1627 = vmatmul.f32.gmra.mxu0 %v1514
        %v1628 = vpop.f32.mrf.mxu0
        %v1629 = vadd.f32 %v1418, %v1628
        %1630 = vmatmul.f32.gmra.mxu0 %v1517
        %v1631 = vpop.f32.mrf.mxu0
        %v1632 = vadd.f32 %v1421, %v1631
        %1633 = vmatmul.f32.gmra.mxu0 %v1520
        %v1634 = vpop.f32.mrf.mxu0
        %v1635 = vadd.f32 %v1424, %v1634
        %1636 = vmatmul.f32.gmra.mxu0 %v1523
        %v1637 = vpop.f32.mrf.mxu0
        %v1638 = vadd.f32 %v1427, %v1637
        %1639 = vmatmul.f32.gmra.mxu0 %v1526
        %v1640 = vpop.f32.mrf.mxu0
        %v1641 = vadd.f32 %v1430, %v1640
        %1642 = vmatmul.f32.gmra.mxu0 %v1529
        %v1643 = vpop.f32.mrf.mxu0
        %v1644 = vadd.f32 %v1433, %v1643
        %1645 = vmatmul.f32.gmra.mxu0 %v1532
        %v1646 = vpop.f32.mrf.mxu0
        %v1647 = vadd.f32 %v1436, %v1646
        %1648 = vmatmul.f32.gmra.mxu0 %v1535
        %v1649 = vpop.f32.mrf.mxu0
        %v1650 = vadd.f32 %v1439, %v1649
        %1651 = vdwg.mxu0
        %v1652 = vld [vmem:[%s361 + $0x2] sm:$0xff]
        %v1653 = vld [vmem:[%s361 + $0xa] sm:$0xff]
        %v1654 = vld [vmem:[%s361 + $0x1a] sm:$0xff]
        %v1655 = vld [vmem:[%s361 + $0x22] sm:$0xff]
        %v1656 = vld [vmem:[%s361 + $0x32] sm:$0xff]
        %v1657 = vld [vmem:[%s361 + $0x3a] sm:$0xff]
        %v1658 = vld [vmem:[%s361 + $0x4a] sm:$0xff]
        %v1659 = vld [vmem:[%s361 + $0x52] sm:$0xff]
        %v1660 = vld [vmem:[%s361 + $0x62] sm:$0xff]
        %v1661 = vld [vmem:[%s361 + $0x6a] sm:$0xff]
        %v1662 = vld [vmem:[%s361 + $0x7a] sm:$0xff]
        %v1663 = vld [vmem:[%s361 + $0x82] sm:$0xff]
        %v1664 = vld [vmem:[%s361 + $0x92] sm:$0xff]
        %v1665 = vld [vmem:[%s361 + $0x9a] sm:$0xff]
        %v1666 = vld [vmem:[%s361 + $0xaa] sm:$0xff]
        %v1667 = vld [vmem:[%s361 + $0xb2] sm:$0xff]
        %v1668 = vld [vmem:[%s361 + $0xc2] sm:$0xff]
        %v1669 = vld [vmem:[%s361 + $0xca] sm:$0xff]
        %v1670 = vld [vmem:[%s361 + $0xda] sm:$0xff]
        %v1671 = vld [vmem:[%s361 + $0xe2] sm:$0xff]
        %v1672 = vld [vmem:[%s361 + $0xf2] sm:$0xff]
        %v1673 = vld [vmem:[%s361 + $0xfa] sm:$0xff]
        %v1674 = vld [vmem:[%s361 + $0x10a] sm:$0xff]
        %v1675 = vld [vmem:[%s361 + $0x112] sm:$0xff]
        %v1676 = vld [vmem:[%s361 + $0x122] sm:$0xff]
        %v1677 = vld [vmem:[%s361 + $0x12a] sm:$0xff]
        %v1678 = vld [vmem:[%s361 + $0x13a] sm:$0xff]
        %v1679 = vld [vmem:[%s361 + $0x142] sm:$0xff]
        %v1680 = vld [vmem:[%s361 + $0x152] sm:$0xff]
        %v1681 = vld [vmem:[%s361 + $0x15a] sm:$0xff]
        %v1682 = vld [vmem:[%s361 + $0x16a] sm:$0xff]
        %v1683 = vld [vmem:[%s361 + $0x172] sm:$0xff]
        %v1685 = vsel %vm240, %v1652, 0
        %v1688 = vsel %vm240, %v1653, 0
        %v1691 = vsel %vm240, %v1654, 0
        %v1694 = vsel %vm240, %v1655, 0
        %v1697 = vsel %vm240, %v1656, 0
        %v1700 = vsel %vm240, %v1657, 0
        %v1703 = vsel %vm240, %v1658, 0
        %v1706 = vsel %vm240, %v1659, 0
        %v1709 = vsel %vm240, %v1660, 0
        %v1712 = vsel %vm240, %v1661, 0
        %v1715 = vsel %vm240, %v1662, 0
        %v1718 = vsel %vm240, %v1663, 0
        %v1721 = vsel %vm240, %v1664, 0
        %v1724 = vsel %vm240, %v1665, 0
        %v1727 = vsel %vm240, %v1666, 0
        %v1730 = vsel %vm240, %v1667, 0
        %v1733 = vsel %vm240, %v1668, 0
        %v1736 = vsel %vm240, %v1669, 0
        %v1739 = vsel %vm240, %v1670, 0
        %v1742 = vsel %vm240, %v1671, 0
        %v1745 = vsel %vm240, %v1672, 0
        %v1748 = vsel %vm240, %v1673, 0
        %v1751 = vsel %vm240, %v1674, 0
        %v1754 = vsel %vm240, %v1675, 0
        %v1757 = vsel %vm240, %v1676, 0
        %v1760 = vsel %vm240, %v1677, 0
        %v1763 = vsel %vm240, %v1678, 0
        %v1766 = vsel %vm240, %v1679, 0
        %v1769 = vsel %vm240, %v1680, 0
        %v1772 = vsel %vm240, %v1681, 0
        %v1775 = vsel %vm240, %v1682, 0
        %v1778 = vsel %vm240, %v1683, 0
        %v1781 = vsel %vm558, %v1163, 0
        %1783 = vmatpush.msra.mxu0 0.0
        %1784 = vmatpush.msra.mxu0 0.0
        %1785 = vmatpush.msra.mxu0 0.0
        %1786 = vmatpush.msra.mxu0 0.0
        %1787 = vmatpush.msra.mxu0 0.0
        %1788 = vmatpush.msra.mxu0 0.0
        %1789 = vmatpush.msra.mxu0 0.0
        %1790 = vmatpush.msra.mxu0 0.0
        %1791 = vmatpush.msra.mxu0 0.0
        %1792 = vmatpush.msra.mxu0 0.0
        %1793 = vmatpush.msra.mxu0 0.0
        %1794 = vmatpush.msra.mxu0 0.0
        %1795 = vmatpush.msra.mxu0 0.0
        %1796 = vmatpush.msra.mxu0 0.0
        %1797 = vmatpush.msra.mxu0 0.0
        %1798 = vmatpush.msra.mxu0 %v1781
        %1799 = vmatmul.f32.gmra.mxu0 %v1685
        %v1800 = vpop.f32.mrf.mxu0
        %v1801 = vadd.f32 0.0, %v1800
        %1802 = vmatmul.f32.gmra.mxu0 %v1688
        %v1803 = vpop.f32.mrf.mxu0
        %v1804 = vadd.f32 0.0, %v1803
        %1805 = vmatmul.f32.gmra.mxu0 %v1691
        %v1806 = vpop.f32.mrf.mxu0
        %v1807 = vadd.f32 0.0, %v1806
        %1808 = vmatmul.f32.gmra.mxu0 %v1694
        %v1809 = vpop.f32.mrf.mxu0
        %v1810 = vadd.f32 0.0, %v1809
        %1811 = vmatmul.f32.gmra.mxu0 %v1697
        %v1812 = vpop.f32.mrf.mxu0
        %v1813 = vadd.f32 0.0, %v1812
        %1814 = vmatmul.f32.gmra.mxu0 %v1700
        %v1815 = vpop.f32.mrf.mxu0
        %v1816 = vadd.f32 0.0, %v1815
        %1817 = vmatmul.f32.gmra.mxu0 %v1703
        %v1818 = vpop.f32.mrf.mxu0
        %v1819 = vadd.f32 0.0, %v1818
        %1820 = vmatmul.f32.gmra.mxu0 %v1706
        %v1821 = vpop.f32.mrf.mxu0
        %v1822 = vadd.f32 0.0, %v1821
        %1823 = vmatmul.f32.gmra.mxu0 %v1709
        %v1824 = vpop.f32.mrf.mxu0
        %v1825 = vadd.f32 0.0, %v1824
        %1826 = vmatmul.f32.gmra.mxu0 %v1712
        %v1827 = vpop.f32.mrf.mxu0
        %v1828 = vadd.f32 0.0, %v1827
        %1829 = vmatmul.f32.gmra.mxu0 %v1715
        %v1830 = vpop.f32.mrf.mxu0
        %v1831 = vadd.f32 0.0, %v1830
        %1832 = vmatmul.f32.gmra.mxu0 %v1718
        %v1833 = vpop.f32.mrf.mxu0
        %v1834 = vadd.f32 0.0, %v1833
        %1835 = vmatmul.f32.gmra.mxu0 %v1721
        %v1836 = vpop.f32.mrf.mxu0
        %v1837 = vadd.f32 0.0, %v1836
        %1838 = vmatmul.f32.gmra.mxu0 %v1724
        %v1839 = vpop.f32.mrf.mxu0
        %v1840 = vadd.f32 0.0, %v1839
        %1841 = vmatmul.f32.gmra.mxu0 %v1727
        %v1842 = vpop.f32.mrf.mxu0
        %v1843 = vadd.f32 0.0, %v1842
        %1844 = vmatmul.f32.gmra.mxu0 %v1730
        %v1845 = vpop.f32.mrf.mxu0
        %v1846 = vadd.f32 0.0, %v1845
        %1847 = vmatmul.f32.gmra.mxu0 %v1733
        %v1848 = vpop.f32.mrf.mxu0
        %v1849 = vadd.f32 0.0, %v1848
        %1850 = vmatmul.f32.gmra.mxu0 %v1736
        %v1851 = vpop.f32.mrf.mxu0
        %v1852 = vadd.f32 0.0, %v1851
        %1853 = vmatmul.f32.gmra.mxu0 %v1739
        %v1854 = vpop.f32.mrf.mxu0
        %v1855 = vadd.f32 0.0, %v1854
        %1856 = vmatmul.f32.gmra.mxu0 %v1742
        %v1857 = vpop.f32.mrf.mxu0
        %v1858 = vadd.f32 0.0, %v1857
        %1859 = vmatmul.f32.gmra.mxu0 %v1745
        %v1860 = vpop.f32.mrf.mxu0
        %v1861 = vadd.f32 0.0, %v1860
        %1862 = vmatmul.f32.gmra.mxu0 %v1748
        %v1863 = vpop.f32.mrf.mxu0
        %v1864 = vadd.f32 0.0, %v1863
        %1865 = vmatmul.f32.gmra.mxu0 %v1751
        %v1866 = vpop.f32.mrf.mxu0
        %v1867 = vadd.f32 0.0, %v1866
        %1868 = vmatmul.f32.gmra.mxu0 %v1754
        %v1869 = vpop.f32.mrf.mxu0
        %v1870 = vadd.f32 0.0, %v1869
        %1871 = vmatmul.f32.gmra.mxu0 %v1757
        %v1872 = vpop.f32.mrf.mxu0
        %v1873 = vadd.f32 0.0, %v1872
        %1874 = vmatmul.f32.gmra.mxu0 %v1760
        %v1875 = vpop.f32.mrf.mxu0
        %v1876 = vadd.f32 0.0, %v1875
        %1877 = vmatmul.f32.gmra.mxu0 %v1763
        %v1878 = vpop.f32.mrf.mxu0
        %v1879 = vadd.f32 0.0, %v1878
        %1880 = vmatmul.f32.gmra.mxu0 %v1766
        %v1881 = vpop.f32.mrf.mxu0
        %v1882 = vadd.f32 0.0, %v1881
        %1883 = vmatmul.f32.gmra.mxu0 %v1769
        %v1884 = vpop.f32.mrf.mxu0
        %v1885 = vadd.f32 0.0, %v1884
        %1886 = vmatmul.f32.gmra.mxu0 %v1772
        %v1887 = vpop.f32.mrf.mxu0
        %v1888 = vadd.f32 0.0, %v1887
        %1889 = vmatmul.f32.gmra.mxu0 %v1775
        %v1890 = vpop.f32.mrf.mxu0
        %v1891 = vadd.f32 0.0, %v1890
        %1892 = vmatmul.f32.gmra.mxu0 %v1778
        %v1893 = vpop.f32.mrf.mxu0
        %v1894 = vadd.f32 0.0, %v1893
        %1895 = vdwg.mxu0
        %v1896 = vadd.f32 %v1557, %v1801
        %v1897 = vadd.f32 %v1560, %v1804
        %v1898 = vadd.f32 %v1563, %v1807
        %v1899 = vadd.f32 %v1566, %v1810
        %v1900 = vadd.f32 %v1569, %v1813
        %v1901 = vadd.f32 %v1572, %v1816
        %v1902 = vadd.f32 %v1575, %v1819
        %v1903 = vadd.f32 %v1578, %v1822
        %v1904 = vadd.f32 %v1581, %v1825
        %v1905 = vadd.f32 %v1584, %v1828
        %v1906 = vadd.f32 %v1587, %v1831
        %v1907 = vadd.f32 %v1590, %v1834
        %v1908 = vadd.f32 %v1593, %v1837
        %v1909 = vadd.f32 %v1596, %v1840
        %v1910 = vadd.f32 %v1599, %v1843
        %v1911 = vadd.f32 %v1602, %v1846
        %v1912 = vadd.f32 %v1605, %v1849
        %v1913 = vadd.f32 %v1608, %v1852
        %v1914 = vadd.f32 %v1611, %v1855
        %v1915 = vadd.f32 %v1614, %v1858
        %v1916 = vadd.f32 %v1617, %v1861
        %v1917 = vadd.f32 %v1620, %v1864
        %v1918 = vadd.f32 %v1623, %v1867
        %v1919 = vadd.f32 %v1626, %v1870
        %v1920 = vadd.f32 %v1629, %v1873
        %v1921 = vadd.f32 %v1632, %v1876
        %v1922 = vadd.f32 %v1635, %v1879
        %v1923 = vadd.f32 %v1638, %v1882
        %v1924 = vadd.f32 %v1641, %v1885
        %v1925 = vadd.f32 %v1644, %v1888
        %v1926 = vadd.f32 %v1647, %v1891
        %v1927 = vadd.f32 %v1650, %v1894
        %v1928 = vadd.f32 %v1129, %v1896
        %v1929 = vadd.f32 %v1130, %v1897
        %v1930 = vadd.f32 %v1131, %v1898
        %v1931 = vadd.f32 %v1132, %v1899
        %v1932 = vadd.f32 %v1133, %v1900
        %v1933 = vadd.f32 %v1134, %v1901
        %v1934 = vadd.f32 %v1135, %v1902
        %v1935 = vadd.f32 %v1136, %v1903
        %v1936 = vadd.f32 %v1137, %v1904
        %v1937 = vadd.f32 %v1138, %v1905
        %v1938 = vadd.f32 %v1139, %v1906
        %v1939 = vadd.f32 %v1140, %v1907
        %v1940 = vadd.f32 %v1141, %v1908
        %v1941 = vadd.f32 %v1142, %v1909
        %v1942 = vadd.f32 %v1143, %v1910
        %v1943 = vadd.f32 %v1144, %v1911
        %v1944 = vadd.f32 %v1145, %v1912
        %v1945 = vadd.f32 %v1146, %v1913
        %v1946 = vadd.f32 %v1147, %v1914
        %v1947 = vadd.f32 %v1148, %v1915
        %v1948 = vadd.f32 %v1149, %v1916
        %v1949 = vadd.f32 %v1150, %v1917
        %v1950 = vadd.f32 %v1151, %v1918
        %v1951 = vadd.f32 %v1152, %v1919
        %v1952 = vadd.f32 %v1153, %v1920
        %v1953 = vadd.f32 %v1154, %v1921
        %v1954 = vadd.f32 %v1155, %v1922
        %v1955 = vadd.f32 %v1156, %v1923
        %v1956 = vadd.f32 %v1157, %v1924
        %v1957 = vadd.f32 %v1158, %v1925
        %v1958 = vadd.f32 %v1159, %v1926
        %v1959 = vadd.f32 %v1160, %v1927
        %s1960 = scalar_lea.vmem %s1, 32
        %v1961 = vld [vmem:[%s1960] sm:$0xff]
        %v1962 = vld [vmem:[%s1960 + $0x8] sm:$0xf]
        %s1963 = scalar_lea.vmem [#allocation2], 48
        %v1964 = vld [vmem:[%s1963] sm:$0xff]
        %v1965 = vld [vmem:[%s1963 + $0x8] sm:$0xff]
        %v1966 = vld [vmem:[%s1963 + $0x18] sm:$0xff]
        %v1967 = vld [vmem:[%s1963 + $0x20] sm:$0xff]
        %v1968 = vld [vmem:[%s1963 + $0x30] sm:$0xff]
        %v1969 = vld [vmem:[%s1963 + $0x38] sm:$0xff]
        %v1970 = vld [vmem:[%s1963 + $0x48] sm:$0xff]
        %v1971 = vld [vmem:[%s1963 + $0x50] sm:$0xff]
        %v1972 = vld [vmem:[%s1963 + $0x60] sm:$0xff]
        %v1973 = vld [vmem:[%s1963 + $0x68] sm:$0xff]
        %v1974 = vld [vmem:[%s1963 + $0x78] sm:$0xff]
        %v1975 = vld [vmem:[%s1963 + $0x80] sm:$0xff]
        %v1976 = vld [vmem:[%s1963 + $0x90] sm:$0xff]
        %v1977 = vld [vmem:[%s1963 + $0x98] sm:$0xff]
        %v1978 = vld [vmem:[%s1963 + $0xa8] sm:$0xff]
        %v1979 = vld [vmem:[%s1963 + $0xb0] sm:$0xff]
        %v1980 = vld [vmem:[%s1963 + $0xc0] sm:$0xff]
        %v1981 = vld [vmem:[%s1963 + $0xc8] sm:$0xff]
        %v1982 = vld [vmem:[%s1963 + $0xd8] sm:$0xff]
        %v1983 = vld [vmem:[%s1963 + $0xe0] sm:$0xff]
        %v1984 = vld [vmem:[%s1963 + $0xf0] sm:$0xff]
        %v1985 = vld [vmem:[%s1963 + $0xf8] sm:$0xff]
        %v1986 = vld [vmem:[%s1963 + $0x108] sm:$0xff]
        %v1987 = vld [vmem:[%s1963 + $0x110] sm:$0xff]
        %v1988 = vld [vmem:[%s1963 + $0x120] sm:$0xff]
        %v1989 = vld [vmem:[%s1963 + $0x128] sm:$0xff]
        %v1990 = vld [vmem:[%s1963 + $0x138] sm:$0xff]
        %v1991 = vld [vmem:[%s1963 + $0x140] sm:$0xff]
        %v1992 = vld [vmem:[%s1963 + $0x150] sm:$0xff]
        %v1993 = vld [vmem:[%s1963 + $0x158] sm:$0xff]
        %v1994 = vld [vmem:[%s1963 + $0x168] sm:$0xff]
        %v1995 = vld [vmem:[%s1963 + $0x170] sm:$0xff]
        %v1996 = vld [vmem:[%s1963 + $0x1] sm:$0xff]
        %v1997 = vld [vmem:[%s1963 + $0x9] sm:$0xff]
        %v1998 = vld [vmem:[%s1963 + $0x19] sm:$0xff]
        %v1999 = vld [vmem:[%s1963 + $0x21] sm:$0xff]
        %v2000 = vld [vmem:[%s1963 + $0x31] sm:$0xff]
        %v2001 = vld [vmem:[%s1963 + $0x39] sm:$0xff]
        %v2002 = vld [vmem:[%s1963 + $0x49] sm:$0xff]
        %v2003 = vld [vmem:[%s1963 + $0x51] sm:$0xff]
        %v2004 = vld [vmem:[%s1963 + $0x61] sm:$0xff]
        %v2005 = vld [vmem:[%s1963 + $0x69] sm:$0xff]
        %v2006 = vld [vmem:[%s1963 + $0x79] sm:$0xff]
        %v2007 = vld [vmem:[%s1963 + $0x81] sm:$0xff]
        %v2008 = vld [vmem:[%s1963 + $0x91] sm:$0xff]
        %v2009 = vld [vmem:[%s1963 + $0x99] sm:$0xff]
        %v2010 = vld [vmem:[%s1963 + $0xa9] sm:$0xff]
        %v2011 = vld [vmem:[%s1963 + $0xb1] sm:$0xff]
        %v2012 = vld [vmem:[%s1963 + $0xc1] sm:$0xff]
        %v2013 = vld [vmem:[%s1963 + $0xc9] sm:$0xff]
        %v2014 = vld [vmem:[%s1963 + $0xd9] sm:$0xff]
        %v2015 = vld [vmem:[%s1963 + $0xe1] sm:$0xff]
        %v2016 = vld [vmem:[%s1963 + $0xf1] sm:$0xff]
        %v2017 = vld [vmem:[%s1963 + $0xf9] sm:$0xff]
        %v2018 = vld [vmem:[%s1963 + $0x109] sm:$0xff]
        %v2019 = vld [vmem:[%s1963 + $0x111] sm:$0xff]
        %v2020 = vld [vmem:[%s1963 + $0x121] sm:$0xff]
        %v2021 = vld [vmem:[%s1963 + $0x129] sm:$0xff]
        %v2022 = vld [vmem:[%s1963 + $0x139] sm:$0xff]
        %v2023 = vld [vmem:[%s1963 + $0x141] sm:$0xff]
        %v2024 = vld [vmem:[%s1963 + $0x151] sm:$0xff]
        %v2025 = vld [vmem:[%s1963 + $0x159] sm:$0xff]
        %v2026 = vld [vmem:[%s1963 + $0x169] sm:$0xff]
        %v2027 = vld [vmem:[%s1963 + $0x171] sm:$0xff]
        %v2029 = vrot.slane %v1961, 4
        %v2031 = vsel %vm240, %v1996, 0
        %v2034 = vsel %vm240, %v1997, 0
        %v2037 = vsel %vm240, %v1998, 0
        %v2040 = vsel %vm240, %v1999, 0
        %v2043 = vsel %vm240, %v2000, 0
        %v2046 = vsel %vm240, %v2001, 0
        %v2049 = vsel %vm240, %v2002, 0
        %v2052 = vsel %vm240, %v2003, 0
        %v2055 = vsel %vm240, %v2004, 0
        %v2058 = vsel %vm240, %v2005, 0
        %v2061 = vsel %vm240, %v2006, 0
        %v2064 = vsel %vm240, %v2007, 0
        %v2067 = vsel %vm240, %v2008, 0
        %v2070 = vsel %vm240, %v2009, 0
        %v2073 = vsel %vm240, %v2010, 0
        %v2076 = vsel %vm240, %v2011, 0
        %v2079 = vsel %vm240, %v2012, 0
        %v2082 = vsel %vm240, %v2013, 0
        %v2085 = vsel %vm240, %v2014, 0
        %v2088 = vsel %vm240, %v2015, 0
        %v2091 = vsel %vm240, %v2016, 0
        %v2094 = vsel %vm240, %v2017, 0
        %v2097 = vsel %vm240, %v2018, 0
        %v2100 = vsel %vm240, %v2019, 0
        %v2103 = vsel %vm240, %v2020, 0
        %v2106 = vsel %vm240, %v2021, 0
        %v2109 = vsel %vm240, %v2022, 0
        %v2112 = vsel %vm240, %v2023, 0
        %v2115 = vsel %vm240, %v2024, 0
        %v2118 = vsel %vm240, %v2025, 0
        %v2121 = vsel %vm240, %v2026, 0
        %v2124 = vsel %vm240, %v2027, 0
        %v2126 = vsel %vm558, %v2029, 0
        %2128 = vmatpush.msra.mxu0 0.0
        %2129 = vmatpush.msra.mxu0 0.0
        %2130 = vmatpush.msra.mxu0 0.0
        %2131 = vmatpush.msra.mxu0 0.0
        %2132 = vmatpush.msra.mxu0 0.0
        %2133 = vmatpush.msra.mxu0 0.0
        %2134 = vmatpush.msra.mxu0 0.0
        %2135 = vmatpush.msra.mxu0 0.0
        %2136 = vmatpush.msra.mxu0 0.0
        %2137 = vmatpush.msra.mxu0 0.0
        %2138 = vmatpush.msra.mxu0 0.0
        %2139 = vmatpush.msra.mxu0 0.0
        %2140 = vmatpush.msra.mxu0 0.0
        %2141 = vmatpush.msra.mxu0 0.0
        %2142 = vmatpush.msra.mxu0 0.0
        %2143 = vmatpush.msra.mxu0 %v2126
        %2144 = vmatmul.f32.gmra.mxu0 %v2031
        %v2145 = vpop.f32.mrf.mxu0
        %v2146 = vadd.f32 0.0, %v2145
        %2147 = vmatmul.f32.gmra.mxu0 %v2034
        %v2148 = vpop.f32.mrf.mxu0
        %v2149 = vadd.f32 0.0, %v2148
        %2150 = vmatmul.f32.gmra.mxu0 %v2037
        %v2151 = vpop.f32.mrf.mxu0
        %v2152 = vadd.f32 0.0, %v2151
        %2153 = vmatmul.f32.gmra.mxu0 %v2040
        %v2154 = vpop.f32.mrf.mxu0
        %v2155 = vadd.f32 0.0, %v2154
        %2156 = vmatmul.f32.gmra.mxu0 %v2043
        %v2157 = vpop.f32.mrf.mxu0
        %v2158 = vadd.f32 0.0, %v2157
        %2159 = vmatmul.f32.gmra.mxu0 %v2046
        %v2160 = vpop.f32.mrf.mxu0
        %v2161 = vadd.f32 0.0, %v2160
        %2162 = vmatmul.f32.gmra.mxu0 %v2049
        %v2163 = vpop.f32.mrf.mxu0
        %v2164 = vadd.f32 0.0, %v2163
        %2165 = vmatmul.f32.gmra.mxu0 %v2052
        %v2166 = vpop.f32.mrf.mxu0
        %v2167 = vadd.f32 0.0, %v2166
        %2168 = vmatmul.f32.gmra.mxu0 %v2055
        %v2169 = vpop.f32.mrf.mxu0
        %v2170 = vadd.f32 0.0, %v2169
        %2171 = vmatmul.f32.gmra.mxu0 %v2058
        %v2172 = vpop.f32.mrf.mxu0
        %v2173 = vadd.f32 0.0, %v2172
        %2174 = vmatmul.f32.gmra.mxu0 %v2061
        %v2175 = vpop.f32.mrf.mxu0
        %v2176 = vadd.f32 0.0, %v2175
        %2177 = vmatmul.f32.gmra.mxu0 %v2064
        %v2178 = vpop.f32.mrf.mxu0
        %v2179 = vadd.f32 0.0, %v2178
        %2180 = vmatmul.f32.gmra.mxu0 %v2067
        %v2181 = vpop.f32.mrf.mxu0
        %v2182 = vadd.f32 0.0, %v2181
        %2183 = vmatmul.f32.gmra.mxu0 %v2070
        %v2184 = vpop.f32.mrf.mxu0
        %v2185 = vadd.f32 0.0, %v2184
        %2186 = vmatmul.f32.gmra.mxu0 %v2073
        %v2187 = vpop.f32.mrf.mxu0
        %v2188 = vadd.f32 0.0, %v2187
        %2189 = vmatmul.f32.gmra.mxu0 %v2076
        %v2190 = vpop.f32.mrf.mxu0
        %v2191 = vadd.f32 0.0, %v2190
        %2192 = vmatmul.f32.gmra.mxu0 %v2079
        %v2193 = vpop.f32.mrf.mxu0
        %v2194 = vadd.f32 0.0, %v2193
        %2195 = vmatmul.f32.gmra.mxu0 %v2082
        %v2196 = vpop.f32.mrf.mxu0
        %v2197 = vadd.f32 0.0, %v2196
        %2198 = vmatmul.f32.gmra.mxu0 %v2085
        %v2199 = vpop.f32.mrf.mxu0
        %v2200 = vadd.f32 0.0, %v2199
        %2201 = vmatmul.f32.gmra.mxu0 %v2088
        %v2202 = vpop.f32.mrf.mxu0
        %v2203 = vadd.f32 0.0, %v2202
        %2204 = vmatmul.f32.gmra.mxu0 %v2091
        %v2205 = vpop.f32.mrf.mxu0
        %v2206 = vadd.f32 0.0, %v2205
        %2207 = vmatmul.f32.gmra.mxu0 %v2094
        %v2208 = vpop.f32.mrf.mxu0
        %v2209 = vadd.f32 0.0, %v2208
        %2210 = vmatmul.f32.gmra.mxu0 %v2097
        %v2211 = vpop.f32.mrf.mxu0
        %v2212 = vadd.f32 0.0, %v2211
        %2213 = vmatmul.f32.gmra.mxu0 %v2100
        %v2214 = vpop.f32.mrf.mxu0
        %v2215 = vadd.f32 0.0, %v2214
        %2216 = vmatmul.f32.gmra.mxu0 %v2103
        %v2217 = vpop.f32.mrf.mxu0
        %v2218 = vadd.f32 0.0, %v2217
        %2219 = vmatmul.f32.gmra.mxu0 %v2106
        %v2220 = vpop.f32.mrf.mxu0
        %v2221 = vadd.f32 0.0, %v2220
        %2222 = vmatmul.f32.gmra.mxu0 %v2109
        %v2223 = vpop.f32.mrf.mxu0
        %v2224 = vadd.f32 0.0, %v2223
        %2225 = vmatmul.f32.gmra.mxu0 %v2112
        %v2226 = vpop.f32.mrf.mxu0
        %v2227 = vadd.f32 0.0, %v2226
        %2228 = vmatmul.f32.gmra.mxu0 %v2115
        %v2229 = vpop.f32.mrf.mxu0
        %v2230 = vadd.f32 0.0, %v2229
        %2231 = vmatmul.f32.gmra.mxu0 %v2118
        %v2232 = vpop.f32.mrf.mxu0
        %v2233 = vadd.f32 0.0, %v2232
        %2234 = vmatmul.f32.gmra.mxu0 %v2121
        %v2235 = vpop.f32.mrf.mxu0
        %v2236 = vadd.f32 0.0, %v2235
        %2237 = vmatmul.f32.gmra.mxu0 %v2124
        %v2238 = vpop.f32.mrf.mxu0
        %v2239 = vadd.f32 0.0, %v2238
        %2240 = vdwg.mxu0
        %v2242 = vsel %vm240, %v1964, 0
        %v2245 = vsel %vm240, %v1965, 0
        %v2248 = vsel %vm240, %v1966, 0
        %v2251 = vsel %vm240, %v1967, 0
        %v2254 = vsel %vm240, %v1968, 0
        %v2257 = vsel %vm240, %v1969, 0
        %v2260 = vsel %vm240, %v1970, 0
        %v2263 = vsel %vm240, %v1971, 0
        %v2266 = vsel %vm240, %v1972, 0
        %v2269 = vsel %vm240, %v1973, 0
        %v2272 = vsel %vm240, %v1974, 0
        %v2275 = vsel %vm240, %v1975, 0
        %v2278 = vsel %vm240, %v1976, 0
        %v2281 = vsel %vm240, %v1977, 0
        %v2284 = vsel %vm240, %v1978, 0
        %v2287 = vsel %vm240, %v1979, 0
        %v2290 = vsel %vm240, %v1980, 0
        %v2293 = vsel %vm240, %v1981, 0
        %v2296 = vsel %vm240, %v1982, 0
        %v2299 = vsel %vm240, %v1983, 0
        %v2302 = vsel %vm240, %v1984, 0
        %v2305 = vsel %vm240, %v1985, 0
        %v2308 = vsel %vm240, %v1986, 0
        %v2311 = vsel %vm240, %v1987, 0
        %v2314 = vsel %vm240, %v1988, 0
        %v2317 = vsel %vm240, %v1989, 0
        %v2320 = vsel %vm240, %v1990, 0
        %v2323 = vsel %vm240, %v1991, 0
        %v2326 = vsel %vm240, %v1992, 0
        %v2329 = vsel %vm240, %v1993, 0
        %v2332 = vsel %vm240, %v1994, 0
        %v2335 = vsel %vm240, %v1995, 0
        %v2337 = vsel %vm558, %v1961, 0
        %2339 = vmatpush.msra.mxu0 0.0
        %2340 = vmatpush.msra.mxu0 0.0
        %2341 = vmatpush.msra.mxu0 0.0
        %2342 = vmatpush.msra.mxu0 0.0
        %2343 = vmatpush.msra.mxu0 0.0
        %2344 = vmatpush.msra.mxu0 0.0
        %2345 = vmatpush.msra.mxu0 0.0
        %2346 = vmatpush.msra.mxu0 0.0
        %2347 = vmatpush.msra.mxu0 0.0
        %2348 = vmatpush.msra.mxu0 0.0
        %2349 = vmatpush.msra.mxu0 0.0
        %2350 = vmatpush.msra.mxu0 0.0
        %2351 = vmatpush.msra.mxu0 0.0
        %2352 = vmatpush.msra.mxu0 0.0
        %2353 = vmatpush.msra.mxu0 0.0
        %2354 = vmatpush.msra.mxu0 %v2337
        %2355 = vmatmul.f32.gmra.mxu0 %v2242
        %v2356 = vpop.f32.mrf.mxu0
        %v2357 = vadd.f32 %v2146, %v2356
        %2358 = vmatmul.f32.gmra.mxu0 %v2245
        %v2359 = vpop.f32.mrf.mxu0
        %v2360 = vadd.f32 %v2149, %v2359
        %2361 = vmatmul.f32.gmra.mxu0 %v2248
        %v2362 = vpop.f32.mrf.mxu0
        %v2363 = vadd.f32 %v2152, %v2362
        %2364 = vmatmul.f32.gmra.mxu0 %v2251
        %v2365 = vpop.f32.mrf.mxu0
        %v2366 = vadd.f32 %v2155, %v2365
        %2367 = vmatmul.f32.gmra.mxu0 %v2254
        %v2368 = vpop.f32.mrf.mxu0
        %v2369 = vadd.f32 %v2158, %v2368
        %2370 = vmatmul.f32.gmra.mxu0 %v2257
        %v2371 = vpop.f32.mrf.mxu0
        %v2372 = vadd.f32 %v2161, %v2371
        %2373 = vmatmul.f32.gmra.mxu0 %v2260
        %v2374 = vpop.f32.mrf.mxu0
        %v2375 = vadd.f32 %v2164, %v2374
        %2376 = vmatmul.f32.gmra.mxu0 %v2263
        %v2377 = vpop.f32.mrf.mxu0
        %v2378 = vadd.f32 %v2167, %v2377
        %2379 = vmatmul.f32.gmra.mxu0 %v2266
        %v2380 = vpop.f32.mrf.mxu0
        %v2381 = vadd.f32 %v2170, %v2380
        %2382 = vmatmul.f32.gmra.mxu0 %v2269
        %v2383 = vpop.f32.mrf.mxu0
        %v2384 = vadd.f32 %v2173, %v2383
        %2385 = vmatmul.f32.gmra.mxu0 %v2272
        %v2386 = vpop.f32.mrf.mxu0
        %v2387 = vadd.f32 %v2176, %v2386
        %2388 = vmatmul.f32.gmra.mxu0 %v2275
        %v2389 = vpop.f32.mrf.mxu0
        %v2390 = vadd.f32 %v2179, %v2389
        %2391 = vmatmul.f32.gmra.mxu0 %v2278
        %v2392 = vpop.f32.mrf.mxu0
        %v2393 = vadd.f32 %v2182, %v2392
        %2394 = vmatmul.f32.gmra.mxu0 %v2281
        %v2395 = vpop.f32.mrf.mxu0
        %v2396 = vadd.f32 %v2185, %v2395
        %2397 = vmatmul.f32.gmra.mxu0 %v2284
        %v2398 = vpop.f32.mrf.mxu0
        %v2399 = vadd.f32 %v2188, %v2398
        %2400 = vmatmul.f32.gmra.mxu0 %v2287
        %v2401 = vpop.f32.mrf.mxu0
        %v2402 = vadd.f32 %v2191, %v2401
        %2403 = vmatmul.f32.gmra.mxu0 %v2290
        %v2404 = vpop.f32.mrf.mxu0
        %v2405 = vadd.f32 %v2194, %v2404
        %2406 = vmatmul.f32.gmra.mxu0 %v2293
        %v2407 = vpop.f32.mrf.mxu0
        %v2408 = vadd.f32 %v2197, %v2407
        %2409 = vmatmul.f32.gmra.mxu0 %v2296
        %v2410 = vpop.f32.mrf.mxu0
        %v2411 = vadd.f32 %v2200, %v2410
        %2412 = vmatmul.f32.gmra.mxu0 %v2299
        %v2413 = vpop.f32.mrf.mxu0
        %v2414 = vadd.f32 %v2203, %v2413
        %2415 = vmatmul.f32.gmra.mxu0 %v2302
        %v2416 = vpop.f32.mrf.mxu0
        %v2417 = vadd.f32 %v2206, %v2416
        %2418 = vmatmul.f32.gmra.mxu0 %v2305
        %v2419 = vpop.f32.mrf.mxu0
        %v2420 = vadd.f32 %v2209, %v2419
        %2421 = vmatmul.f32.gmra.mxu0 %v2308
        %v2422 = vpop.f32.mrf.mxu0
        %v2423 = vadd.f32 %v2212, %v2422
        %2424 = vmatmul.f32.gmra.mxu0 %v2311
        %v2425 = vpop.f32.mrf.mxu0
        %v2426 = vadd.f32 %v2215, %v2425
        %2427 = vmatmul.f32.gmra.mxu0 %v2314
        %v2428 = vpop.f32.mrf.mxu0
        %v2429 = vadd.f32 %v2218, %v2428
        %2430 = vmatmul.f32.gmra.mxu0 %v2317
        %v2431 = vpop.f32.mrf.mxu0
        %v2432 = vadd.f32 %v2221, %v2431
        %2433 = vmatmul.f32.gmra.mxu0 %v2320
        %v2434 = vpop.f32.mrf.mxu0
        %v2435 = vadd.f32 %v2224, %v2434
        %2436 = vmatmul.f32.gmra.mxu0 %v2323
        %v2437 = vpop.f32.mrf.mxu0
        %v2438 = vadd.f32 %v2227, %v2437
        %2439 = vmatmul.f32.gmra.mxu0 %v2326
        %v2440 = vpop.f32.mrf.mxu0
        %v2441 = vadd.f32 %v2230, %v2440
        %2442 = vmatmul.f32.gmra.mxu0 %v2329
        %v2443 = vpop.f32.mrf.mxu0
        %v2444 = vadd.f32 %v2233, %v2443
        %2445 = vmatmul.f32.gmra.mxu0 %v2332
        %v2446 = vpop.f32.mrf.mxu0
        %v2447 = vadd.f32 %v2236, %v2446
        %2448 = vmatmul.f32.gmra.mxu0 %v2335
        %v2449 = vpop.f32.mrf.mxu0
        %v2450 = vadd.f32 %v2239, %v2449
        %2451 = vdwg.mxu0
        %v2452 = vld [vmem:[%s1963 + $0x2] sm:$0xff]
        %v2453 = vld [vmem:[%s1963 + $0xa] sm:$0xff]
        %v2454 = vld [vmem:[%s1963 + $0x1a] sm:$0xff]
        %v2455 = vld [vmem:[%s1963 + $0x22] sm:$0xff]
        %v2456 = vld [vmem:[%s1963 + $0x32] sm:$0xff]
        %v2457 = vld [vmem:[%s1963 + $0x3a] sm:$0xff]
        %v2458 = vld [vmem:[%s1963 + $0x4a] sm:$0xff]
        %v2459 = vld [vmem:[%s1963 + $0x52] sm:$0xff]
        %v2460 = vld [vmem:[%s1963 + $0x62] sm:$0xff]
        %v2461 = vld [vmem:[%s1963 + $0x6a] sm:$0xff]
        %v2462 = vld [vmem:[%s1963 + $0x7a] sm:$0xff]
        %v2463 = vld [vmem:[%s1963 + $0x82] sm:$0xff]
        %v2464 = vld [vmem:[%s1963 + $0x92] sm:$0xff]
        %v2465 = vld [vmem:[%s1963 + $0x9a] sm:$0xff]
        %v2466 = vld [vmem:[%s1963 + $0xaa] sm:$0xff]
        %v2467 = vld [vmem:[%s1963 + $0xb2] sm:$0xff]
        %v2468 = vld [vmem:[%s1963 + $0xc2] sm:$0xff]
        %v2469 = vld [vmem:[%s1963 + $0xca] sm:$0xff]
        %v2470 = vld [vmem:[%s1963 + $0xda] sm:$0xff]
        %v2471 = vld [vmem:[%s1963 + $0xe2] sm:$0xff]
        %v2472 = vld [vmem:[%s1963 + $0xf2] sm:$0xff]
        %v2473 = vld [vmem:[%s1963 + $0xfa] sm:$0xff]
        %v2474 = vld [vmem:[%s1963 + $0x10a] sm:$0xff]
        %v2475 = vld [vmem:[%s1963 + $0x112] sm:$0xff]
        %v2476 = vld [vmem:[%s1963 + $0x122] sm:$0xff]
        %v2477 = vld [vmem:[%s1963 + $0x12a] sm:$0xff]
        %v2478 = vld [vmem:[%s1963 + $0x13a] sm:$0xff]
        %v2479 = vld [vmem:[%s1963 + $0x142] sm:$0xff]
        %v2480 = vld [vmem:[%s1963 + $0x152] sm:$0xff]
        %v2481 = vld [vmem:[%s1963 + $0x15a] sm:$0xff]
        %v2482 = vld [vmem:[%s1963 + $0x16a] sm:$0xff]
        %v2483 = vld [vmem:[%s1963 + $0x172] sm:$0xff]
        %v2485 = vsel %vm240, %v2452, 0
        %v2488 = vsel %vm240, %v2453, 0
        %v2491 = vsel %vm240, %v2454, 0
        %v2494 = vsel %vm240, %v2455, 0
        %v2497 = vsel %vm240, %v2456, 0
        %v2500 = vsel %vm240, %v2457, 0
        %v2503 = vsel %vm240, %v2458, 0
        %v2506 = vsel %vm240, %v2459, 0
        %v2509 = vsel %vm240, %v2460, 0
        %v2512 = vsel %vm240, %v2461, 0
        %v2515 = vsel %vm240, %v2462, 0
        %v2518 = vsel %vm240, %v2463, 0
        %v2521 = vsel %vm240, %v2464, 0
        %v2524 = vsel %vm240, %v2465, 0
        %v2527 = vsel %vm240, %v2466, 0
        %v2530 = vsel %vm240, %v2467, 0
        %v2533 = vsel %vm240, %v2468, 0
        %v2536 = vsel %vm240, %v2469, 0
        %v2539 = vsel %vm240, %v2470, 0
        %v2542 = vsel %vm240, %v2471, 0
        %v2545 = vsel %vm240, %v2472, 0
        %v2548 = vsel %vm240, %v2473, 0
        %v2551 = vsel %vm240, %v2474, 0
        %v2554 = vsel %vm240, %v2475, 0
        %v2557 = vsel %vm240, %v2476, 0
        %v2560 = vsel %vm240, %v2477, 0
        %v2563 = vsel %vm240, %v2478, 0
        %v2566 = vsel %vm240, %v2479, 0
        %v2569 = vsel %vm240, %v2480, 0
        %v2572 = vsel %vm240, %v2481, 0
        %v2575 = vsel %vm240, %v2482, 0
        %v2578 = vsel %vm240, %v2483, 0
        %v2581 = vsel %vm558, %v1962, 0
        %2583 = vmatpush.msra.mxu0 0.0
        %2584 = vmatpush.msra.mxu0 0.0
        %2585 = vmatpush.msra.mxu0 0.0
        %2586 = vmatpush.msra.mxu0 0.0
        %2587 = vmatpush.msra.mxu0 0.0
        %2588 = vmatpush.msra.mxu0 0.0
        %2589 = vmatpush.msra.mxu0 0.0
        %2590 = vmatpush.msra.mxu0 0.0
        %2591 = vmatpush.msra.mxu0 0.0
        %2592 = vmatpush.msra.mxu0 0.0
        %2593 = vmatpush.msra.mxu0 0.0
        %2594 = vmatpush.msra.mxu0 0.0
        %2595 = vmatpush.msra.mxu0 0.0
        %2596 = vmatpush.msra.mxu0 0.0
        %2597 = vmatpush.msra.mxu0 0.0
        %2598 = vmatpush.msra.mxu0 %v2581
        %2599 = vmatmul.f32.gmra.mxu0 %v2485
        %v2600 = vpop.f32.mrf.mxu0
        %v2601 = vadd.f32 0.0, %v2600
        %2602 = vmatmul.f32.gmra.mxu0 %v2488
        %v2603 = vpop.f32.mrf.mxu0
        %v2604 = vadd.f32 0.0, %v2603
        %2605 = vmatmul.f32.gmra.mxu0 %v2491
        %v2606 = vpop.f32.mrf.mxu0
        %v2607 = vadd.f32 0.0, %v2606
        %2608 = vmatmul.f32.gmra.mxu0 %v2494
        %v2609 = vpop.f32.mrf.mxu0
        %v2610 = vadd.f32 0.0, %v2609
        %2611 = vmatmul.f32.gmra.mxu0 %v2497
        %v2612 = vpop.f32.mrf.mxu0
        %v2613 = vadd.f32 0.0, %v2612
        %2614 = vmatmul.f32.gmra.mxu0 %v2500
        %v2615 = vpop.f32.mrf.mxu0
        %v2616 = vadd.f32 0.0, %v2615
        %2617 = vmatmul.f32.gmra.mxu0 %v2503
        %v2618 = vpop.f32.mrf.mxu0
        %v2619 = vadd.f32 0.0, %v2618
        %2620 = vmatmul.f32.gmra.mxu0 %v2506
        %v2621 = vpop.f32.mrf.mxu0
        %v2622 = vadd.f32 0.0, %v2621
        %2623 = vmatmul.f32.gmra.mxu0 %v2509
        %v2624 = vpop.f32.mrf.mxu0
        %v2625 = vadd.f32 0.0, %v2624
        %2626 = vmatmul.f32.gmra.mxu0 %v2512
        %v2627 = vpop.f32.mrf.mxu0
        %v2628 = vadd.f32 0.0, %v2627
        %2629 = vmatmul.f32.gmra.mxu0 %v2515
        %v2630 = vpop.f32.mrf.mxu0
        %v2631 = vadd.f32 0.0, %v2630
        %2632 = vmatmul.f32.gmra.mxu0 %v2518
        %v2633 = vpop.f32.mrf.mxu0
        %v2634 = vadd.f32 0.0, %v2633
        %2635 = vmatmul.f32.gmra.mxu0 %v2521
        %v2636 = vpop.f32.mrf.mxu0
        %v2637 = vadd.f32 0.0, %v2636
        %2638 = vmatmul.f32.gmra.mxu0 %v2524
        %v2639 = vpop.f32.mrf.mxu0
        %v2640 = vadd.f32 0.0, %v2639
        %2641 = vmatmul.f32.gmra.mxu0 %v2527
        %v2642 = vpop.f32.mrf.mxu0
        %v2643 = vadd.f32 0.0, %v2642
        %2644 = vmatmul.f32.gmra.mxu0 %v2530
        %v2645 = vpop.f32.mrf.mxu0
        %v2646 = vadd.f32 0.0, %v2645
        %2647 = vmatmul.f32.gmra.mxu0 %v2533
        %v2648 = vpop.f32.mrf.mxu0
        %v2649 = vadd.f32 0.0, %v2648
        %2650 = vmatmul.f32.gmra.mxu0 %v2536
        %v2651 = vpop.f32.mrf.mxu0
        %v2652 = vadd.f32 0.0, %v2651
        %2653 = vmatmul.f32.gmra.mxu0 %v2539
        %v2654 = vpop.f32.mrf.mxu0
        %v2655 = vadd.f32 0.0, %v2654
        %2656 = vmatmul.f32.gmra.mxu0 %v2542
        %v2657 = vpop.f32.mrf.mxu0
        %v2658 = vadd.f32 0.0, %v2657
        %2659 = vmatmul.f32.gmra.mxu0 %v2545
        %v2660 = vpop.f32.mrf.mxu0
        %v2661 = vadd.f32 0.0, %v2660
        %2662 = vmatmul.f32.gmra.mxu0 %v2548
        %v2663 = vpop.f32.mrf.mxu0
        %v2664 = vadd.f32 0.0, %v2663
        %2665 = vmatmul.f32.gmra.mxu0 %v2551
        %v2666 = vpop.f32.mrf.mxu0
        %v2667 = vadd.f32 0.0, %v2666
        %2668 = vmatmul.f32.gmra.mxu0 %v2554
        %v2669 = vpop.f32.mrf.mxu0
        %v2670 = vadd.f32 0.0, %v2669
        %2671 = vmatmul.f32.gmra.mxu0 %v2557
        %v2672 = vpop.f32.mrf.mxu0
        %v2673 = vadd.f32 0.0, %v2672
        %2674 = vmatmul.f32.gmra.mxu0 %v2560
        %v2675 = vpop.f32.mrf.mxu0
        %v2676 = vadd.f32 0.0, %v2675
        %2677 = vmatmul.f32.gmra.mxu0 %v2563
        %v2678 = vpop.f32.mrf.mxu0
        %v2679 = vadd.f32 0.0, %v2678
        %2680 = vmatmul.f32.gmra.mxu0 %v2566
        %v2681 = vpop.f32.mrf.mxu0
        %v2682 = vadd.f32 0.0, %v2681
        %2683 = vmatmul.f32.gmra.mxu0 %v2569
        %v2684 = vpop.f32.mrf.mxu0
        %v2685 = vadd.f32 0.0, %v2684
        %2686 = vmatmul.f32.gmra.mxu0 %v2572
        %v2687 = vpop.f32.mrf.mxu0
        %v2688 = vadd.f32 0.0, %v2687
        %2689 = vmatmul.f32.gmra.mxu0 %v2575
        %v2690 = vpop.f32.mrf.mxu0
        %v2691 = vadd.f32 0.0, %v2690
        %2692 = vmatmul.f32.gmra.mxu0 %v2578
        %v2693 = vpop.f32.mrf.mxu0
        %v2694 = vadd.f32 0.0, %v2693
        %2695 = vdwg.mxu0
        %v2696 = vadd.f32 %v2357, %v2601
        %v2697 = vadd.f32 %v2360, %v2604
        %v2698 = vadd.f32 %v2363, %v2607
        %v2699 = vadd.f32 %v2366, %v2610
        %v2700 = vadd.f32 %v2369, %v2613
        %v2701 = vadd.f32 %v2372, %v2616
        %v2702 = vadd.f32 %v2375, %v2619
        %v2703 = vadd.f32 %v2378, %v2622
        %v2704 = vadd.f32 %v2381, %v2625
        %v2705 = vadd.f32 %v2384, %v2628
        %v2706 = vadd.f32 %v2387, %v2631
        %v2707 = vadd.f32 %v2390, %v2634
        %v2708 = vadd.f32 %v2393, %v2637
        %v2709 = vadd.f32 %v2396, %v2640
        %v2710 = vadd.f32 %v2399, %v2643
        %v2711 = vadd.f32 %v2402, %v2646
        %v2712 = vadd.f32 %v2405, %v2649
        %v2713 = vadd.f32 %v2408, %v2652
        %v2714 = vadd.f32 %v2411, %v2655
        %v2715 = vadd.f32 %v2414, %v2658
        %v2716 = vadd.f32 %v2417, %v2661
        %v2717 = vadd.f32 %v2420, %v2664
        %v2718 = vadd.f32 %v2423, %v2667
        %v2719 = vadd.f32 %v2426, %v2670
        %v2720 = vadd.f32 %v2429, %v2673
        %v2721 = vadd.f32 %v2432, %v2676
        %v2722 = vadd.f32 %v2435, %v2679
        %v2723 = vadd.f32 %v2438, %v2682
        %v2724 = vadd.f32 %v2441, %v2685
        %v2725 = vadd.f32 %v2444, %v2688
        %v2726 = vadd.f32 %v2447, %v2691
        %v2727 = vadd.f32 %v2450, %v2694
        %v2728 = vadd.f32 %v1928, %v2696
        %v2729 = vadd.f32 %v1929, %v2697
        %v2730 = vadd.f32 %v1930, %v2698
        %v2731 = vadd.f32 %v1931, %v2699
        %v2732 = vadd.f32 %v1932, %v2700
        %v2733 = vadd.f32 %v1933, %v2701
        %v2734 = vadd.f32 %v1934, %v2702
        %v2735 = vadd.f32 %v1935, %v2703
        %v2736 = vadd.f32 %v1936, %v2704
        %v2737 = vadd.f32 %v1937, %v2705
        %v2738 = vadd.f32 %v1938, %v2706
        %v2739 = vadd.f32 %v1939, %v2707
        %v2740 = vadd.f32 %v1940, %v2708
        %v2741 = vadd.f32 %v1941, %v2709
        %v2742 = vadd.f32 %v1942, %v2710
        %v2743 = vadd.f32 %v1943, %v2711
        %v2744 = vadd.f32 %v1944, %v2712
        %v2745 = vadd.f32 %v1945, %v2713
        %v2746 = vadd.f32 %v1946, %v2714
        %v2747 = vadd.f32 %v1947, %v2715
        %v2748 = vadd.f32 %v1948, %v2716
        %v2749 = vadd.f32 %v1949, %v2717
        %v2750 = vadd.f32 %v1950, %v2718
        %v2751 = vadd.f32 %v1951, %v2719
        %v2752 = vadd.f32 %v1952, %v2720
        %v2753 = vadd.f32 %v1953, %v2721
        %v2754 = vadd.f32 %v1954, %v2722
        %v2755 = vadd.f32 %v1955, %v2723
        %v2756 = vadd.f32 %v1956, %v2724
        %v2757 = vadd.f32 %v1957, %v2725
        %v2758 = vadd.f32 %v1958, %v2726
        %v2759 = vadd.f32 %v1959, %v2727
        %v2760 = vld [vmem:[%s2] sm:$0x1]
        %v2762 = vperm.slane %v2760, 0
        %v2764 = vadd.f32 %v2728, %v2762
        %v2765 = vadd.f32 %v2729, %v2762
        %v2766 = vadd.f32 %v2730, %v2762
        %v2767 = vadd.f32 %v2731, %v2762
        %v2768 = vadd.f32 %v2732, %v2762
        %v2769 = vadd.f32 %v2733, %v2762
        %v2770 = vadd.f32 %v2734, %v2762
        %v2771 = vadd.f32 %v2735, %v2762
        %v2772 = vadd.f32 %v2736, %v2762
        %v2773 = vadd.f32 %v2737, %v2762
        %v2774 = vadd.f32 %v2738, %v2762
        %v2775 = vadd.f32 %v2739, %v2762
        %v2776 = vadd.f32 %v2740, %v2762
        %v2777 = vadd.f32 %v2741, %v2762
        %v2778 = vadd.f32 %v2742, %v2762
        %v2779 = vadd.f32 %v2743, %v2762
        %v2780 = vadd.f32 %v2744, %v2762
        %v2781 = vadd.f32 %v2745, %v2762
        %v2782 = vadd.f32 %v2746, %v2762
        %v2783 = vadd.f32 %v2747, %v2762
        %v2784 = vadd.f32 %v2748, %v2762
        %v2785 = vadd.f32 %v2749, %v2762
        %v2786 = vadd.f32 %v2750, %v2762
        %v2787 = vadd.f32 %v2751, %v2762
        %v2788 = vadd.f32 %v2752, %v2762
        %v2789 = vadd.f32 %v2753, %v2762
        %v2790 = vadd.f32 %v2754, %v2762
        %v2791 = vadd.f32 %v2755, %v2762
        %v2792 = vadd.f32 %v2756, %v2762
        %v2793 = vadd.f32 %v2757, %v2762
        %v2794 = vadd.f32 %v2758, %v2762
        %v2795 = vadd.f32 %v2759, %v2762
        %v2796 = vmax.f32 %v2764, 0.0
        %v2797 = vmax.f32 %v2765, 0.0
        %v2798 = vmax.f32 %v2766, 0.0
        %v2799 = vmax.f32 %v2767, 0.0
        %v2800 = vmax.f32 %v2768, 0.0
        %v2801 = vmax.f32 %v2769, 0.0
        %v2802 = vmax.f32 %v2770, 0.0
        %v2803 = vmax.f32 %v2771, 0.0
        %v2804 = vmax.f32 %v2772, 0.0
        %v2805 = vmax.f32 %v2773, 0.0
        %v2806 = vmax.f32 %v2774, 0.0
        %v2807 = vmax.f32 %v2775, 0.0
        %v2808 = vmax.f32 %v2776, 0.0
        %v2809 = vmax.f32 %v2777, 0.0
        %v2810 = vmax.f32 %v2778, 0.0
        %v2811 = vmax.f32 %v2779, 0.0
        %v2812 = vmax.f32 %v2780, 0.0
        %v2813 = vmax.f32 %v2781, 0.0
        %v2814 = vmax.f32 %v2782, 0.0
        %v2815 = vmax.f32 %v2783, 0.0
        %v2816 = vmax.f32 %v2784, 0.0
        %v2817 = vmax.f32 %v2785, 0.0
        %v2818 = vmax.f32 %v2786, 0.0
        %v2819 = vmax.f32 %v2787, 0.0
        %v2820 = vmax.f32 %v2788, 0.0
        %v2821 = vmax.f32 %v2789, 0.0
        %v2822 = vmax.f32 %v2790, 0.0
        %v2823 = vmax.f32 %v2791, 0.0
        %v2824 = vmax.f32 %v2792, 0.0
        %v2825 = vmax.f32 %v2793, 0.0
        %v2826 = vmax.f32 %v2794, 0.0
        %v2827 = vmax.f32 %v2795, 0.0
        %s2828 = scalar_lea.vmem [#allocation3], 24
        %2829 = vst [vmem:[%s2828 + $0x1] sm:$0xff] %v2796
        %2830 = vst [vmem:[%s2828 + $0x9] sm:$0xff] %v2797
        %2831 = vst [vmem:[%s2828 + $0x19] sm:$0xff] %v2798
        %2832 = vst [vmem:[%s2828 + $0x21] sm:$0xff] %v2799
        %2833 = vst [vmem:[%s2828 + $0x31] sm:$0xff] %v2800
        %2834 = vst [vmem:[%s2828 + $0x39] sm:$0xff] %v2801
        %2835 = vst [vmem:[%s2828 + $0x49] sm:$0xff] %v2802
        %2836 = vst [vmem:[%s2828 + $0x51] sm:$0xff] %v2803
        %2837 = vst [vmem:[%s2828 + $0x61] sm:$0xff] %v2804
        %2838 = vst [vmem:[%s2828 + $0x69] sm:$0xff] %v2805
        %2839 = vst [vmem:[%s2828 + $0x79] sm:$0xff] %v2806
        %2840 = vst [vmem:[%s2828 + $0x81] sm:$0xff] %v2807
        %2841 = vst [vmem:[%s2828 + $0x91] sm:$0xff] %v2808
        %2842 = vst [vmem:[%s2828 + $0x99] sm:$0xff] %v2809
        %2843 = vst [vmem:[%s2828 + $0xa9] sm:$0xff] %v2810
        %2844 = vst [vmem:[%s2828 + $0xb1] sm:$0xff] %v2811
        %2845 = vst [vmem:[%s2828 + $0xc1] sm:$0xff] %v2812
        %2846 = vst [vmem:[%s2828 + $0xc9] sm:$0xff] %v2813
        %2847 = vst [vmem:[%s2828 + $0xd9] sm:$0xff] %v2814
        %2848 = vst [vmem:[%s2828 + $0xe1] sm:$0xff] %v2815
        %2849 = vst [vmem:[%s2828 + $0xf1] sm:$0xff] %v2816
        %2850 = vst [vmem:[%s2828 + $0xf9] sm:$0xff] %v2817
        %2851 = vst [vmem:[%s2828 + $0x109] sm:$0xff] %v2818
        %2852 = vst [vmem:[%s2828 + $0x111] sm:$0xff] %v2819
        %2853 = vst [vmem:[%s2828 + $0x121] sm:$0xff] %v2820
        %2854 = vst [vmem:[%s2828 + $0x129] sm:$0xff] %v2821
        %2855 = vst [vmem:[%s2828 + $0x139] sm:$0xff] %v2822
        %2856 = vst [vmem:[%s2828 + $0x141] sm:$0xff] %v2823
        %2857 = vst [vmem:[%s2828 + $0x151] sm:$0xff] %v2824
        %2858 = vst [vmem:[%s2828 + $0x159] sm:$0xff] %v2825
        %2859 = vst [vmem:[%s2828 + $0x169] sm:$0xff] %v2826
        %2860 = vst [vmem:[%s2828 + $0x171] sm:$0xff] %v2827
        %v2861 = vld [vmem:[#allocation4] sm:$0xff]
        %v2862 = vld [vmem:[#allocation4 + $0x8] sm:$0xff]
        %v2863 = vld [vmem:[#allocation4 + $0x10] sm:$0xff]
        %v2864 = vld [vmem:[#allocation4 + $0x18] sm:$0xff]
        %v2865 = vld [vmem:[#allocation4 + $0x20] sm:$0xff]
        %v2866 = vld [vmem:[#allocation4 + $0x28] sm:$0xff]
        %v2867 = vld [vmem:[#allocation4 + $0x30] sm:$0xff]
        %v2868 = vld [vmem:[#allocation4 + $0x38] sm:$0xff]
        %v2869 = vld [vmem:[#allocation4 + $0x40] sm:$0xff]
        %v2870 = vld [vmem:[#allocation4 + $0x48] sm:$0xff]
        %v2871 = vld [vmem:[#allocation4 + $0x50] sm:$0xff]
        %v2872 = vld [vmem:[#allocation4 + $0x58] sm:$0xff]
        %v2873 = vld [vmem:[#allocation4 + $0x60] sm:$0xff]
        %v2874 = vld [vmem:[#allocation4 + $0x68] sm:$0xff]
        %v2875 = vld [vmem:[#allocation4 + $0x70] sm:$0xff]
        %v2876 = vld [vmem:[#allocation4 + $0x78] sm:$0xff]
        %v2877 = vld [vmem:[#allocation4 + $0x80] sm:$0xff]
        %v2878 = vld [vmem:[#allocation4 + $0x88] sm:$0xff]
        %v2879 = vld [vmem:[#allocation4 + $0x90] sm:$0xff]
        %v2880 = vld [vmem:[#allocation4 + $0x98] sm:$0xff]
        %v2881 = vld [vmem:[#allocation4 + $0xa0] sm:$0xff]
        %v2882 = vld [vmem:[#allocation4 + $0xa8] sm:$0xff]
        %v2883 = vld [vmem:[#allocation4 + $0xb0] sm:$0xff]
        %v2884 = vld [vmem:[#allocation4 + $0xb8] sm:$0xff]
        %v2885 = vld [vmem:[#allocation4 + $0xc0] sm:$0xff]
        %v2886 = vld [vmem:[#allocation4 + $0xc8] sm:$0xff]
        %v2887 = vld [vmem:[#allocation4 + $0xd0] sm:$0xff]
        %v2888 = vld [vmem:[#allocation4 + $0xd8] sm:$0xff]
        %v2889 = vld [vmem:[#allocation4 + $0xe0] sm:$0xff]
        %v2890 = vld [vmem:[#allocation4 + $0xe8] sm:$0xff]
        %v2891 = vld [vmem:[#allocation4 + $0xf0] sm:$0xff]
        %v2892 = vld [vmem:[#allocation4 + $0xf8] sm:$0xff]
        %v2893 = vld [vmem:[#allocation4 + $0x100] sm:$0xff]
        %v2894 = vld [vmem:[#allocation4 + $0x108] sm:$0xff]
        %v2895 = vld [vmem:[#allocation4 + $0x110] sm:$0xff]
        %v2896 = vld [vmem:[#allocation4 + $0x118] sm:$0xff]
        %v2897 = vld [vmem:[#allocation4 + $0x120] sm:$0xff]
        %v2898 = vld [vmem:[#allocation4 + $0x128] sm:$0xff]
        %v2899 = vld [vmem:[#allocation4 + $0x130] sm:$0xff]
        %v2900 = vld [vmem:[#allocation4 + $0x138] sm:$0xff]
        %v2901 = vld [vmem:[#allocation4 + $0x140] sm:$0xff]
        %v2902 = vld [vmem:[#allocation4 + $0x148] sm:$0xff]
        %v2903 = vld [vmem:[#allocation4 + $0x150] sm:$0xff]
        %v2904 = vld [vmem:[#allocation4 + $0x158] sm:$0xff]
        %v2905 = vld [vmem:[#allocation4 + $0x160] sm:$0xff]
        %v2906 = vld [vmem:[#allocation4 + $0x168] sm:$0xff]
        %v2907 = vld [vmem:[#allocation4 + $0x170] sm:$0xff]
        %v2908 = vld [vmem:[#allocation4 + $0x178] sm:$0xff]
        %v2909 = vld [vmem:[#allocation3] sm:$0xff]
        %v2910 = vld [vmem:[#allocation3 + $0x8] sm:$0xff]
        %v2911 = vld [vmem:[#allocation3 + $0x18] sm:$0xff]
        %v2912 = vld [vmem:[#allocation3 + $0x20] sm:$0xff]
        %v2913 = vld [vmem:[#allocation3 + $0x30] sm:$0xff]
        %v2914 = vld [vmem:[#allocation3 + $0x38] sm:$0xff]
        %v2915 = vld [vmem:[#allocation3 + $0x48] sm:$0xff]
        %v2916 = vld [vmem:[#allocation3 + $0x50] sm:$0xff]
        %v2917 = vld [vmem:[#allocation3 + $0x60] sm:$0xff]
        %v2918 = vld [vmem:[#allocation3 + $0x68] sm:$0xff]
        %v2919 = vld [vmem:[#allocation3 + $0x78] sm:$0xff]
        %v2920 = vld [vmem:[#allocation3 + $0x80] sm:$0xff]
        %v2921 = vld [vmem:[#allocation3 + $0x90] sm:$0xff]
        %v2922 = vld [vmem:[#allocation3 + $0x98] sm:$0xff]
        %v2923 = vld [vmem:[#allocation3 + $0xa8] sm:$0xff]
        %v2924 = vld [vmem:[#allocation3 + $0xb0] sm:$0xff]
        %v2925 = vld [vmem:[#allocation3 + $0xc0] sm:$0xff]
        %v2926 = vld [vmem:[#allocation3 + $0xc8] sm:$0xff]
        %v2927 = vld [vmem:[#allocation3 + $0xd8] sm:$0xff]
        %v2928 = vld [vmem:[#allocation3 + $0xe0] sm:$0xff]
        %v2929 = vld [vmem:[#allocation3 + $0xf0] sm:$0xff]
        %v2930 = vld [vmem:[#allocation3 + $0xf8] sm:$0xff]
        %v2931 = vld [vmem:[#allocation3 + $0x108] sm:$0xff]
        %v2932 = vld [vmem:[#allocation3 + $0x110] sm:$0xff]
        %v2933 = vld [vmem:[#allocation3 + $0x120] sm:$0xff]
        %v2934 = vld [vmem:[#allocation3 + $0x128] sm:$0xff]
        %v2935 = vld [vmem:[#allocation3 + $0x138] sm:$0xff]
        %v2936 = vld [vmem:[#allocation3 + $0x140] sm:$0xff]
        %v2937 = vld [vmem:[#allocation3 + $0x150] sm:$0xff]
        %v2938 = vld [vmem:[#allocation3 + $0x158] sm:$0xff]
        %v2939 = vld [vmem:[#allocation3 + $0x168] sm:$0xff]
        %v2940 = vld [vmem:[#allocation3 + $0x170] sm:$0xff]
        %v2941 = vld [vmem:[#allocation3 + $0x1] sm:$0xff]
        %v2942 = vld [vmem:[#allocation3 + $0x9] sm:$0xff]
        %v2943 = vld [vmem:[#allocation3 + $0x19] sm:$0xff]
        %v2944 = vld [vmem:[#allocation3 + $0x21] sm:$0xff]
        %v2945 = vld [vmem:[#allocation3 + $0x31] sm:$0xff]
        %v2946 = vld [vmem:[#allocation3 + $0x39] sm:$0xff]
        %v2947 = vld [vmem:[#allocation3 + $0x49] sm:$0xff]
        %v2948 = vld [vmem:[#allocation3 + $0x51] sm:$0xff]
        %v2949 = vld [vmem:[#allocation3 + $0x61] sm:$0xff]
        %v2950 = vld [vmem:[#allocation3 + $0x69] sm:$0xff]
        %v2951 = vld [vmem:[#allocation3 + $0x79] sm:$0xff]
        %v2952 = vld [vmem:[#allocation3 + $0x81] sm:$0xff]
        %v2953 = vld [vmem:[#allocation3 + $0x91] sm:$0xff]
        %v2954 = vld [vmem:[#allocation3 + $0x99] sm:$0xff]
        %v2955 = vld [vmem:[#allocation3 + $0xa9] sm:$0xff]
        %v2956 = vld [vmem:[#allocation3 + $0xb1] sm:$0xff]
        %v2957 = vld [vmem:[#allocation3 + $0xc1] sm:$0xff]
        %v2958 = vld [vmem:[#allocation3 + $0xc9] sm:$0xff]
        %v2959 = vld [vmem:[#allocation3 + $0xd9] sm:$0xff]
        %v2960 = vld [vmem:[#allocation3 + $0xe1] sm:$0xff]
        %v2961 = vld [vmem:[#allocation3 + $0xf1] sm:$0xff]
        %v2962 = vld [vmem:[#allocation3 + $0xf9] sm:$0xff]
        %v2963 = vld [vmem:[#allocation3 + $0x109] sm:$0xff]
        %v2964 = vld [vmem:[#allocation3 + $0x111] sm:$0xff]
        %v2965 = vld [vmem:[#allocation3 + $0x121] sm:$0xff]
        %v2966 = vld [vmem:[#allocation3 + $0x129] sm:$0xff]
        %v2967 = vld [vmem:[#allocation3 + $0x139] sm:$0xff]
        %v2968 = vld [vmem:[#allocation3 + $0x141] sm:$0xff]
        %v2969 = vld [vmem:[#allocation3 + $0x151] sm:$0xff]
        %v2970 = vld [vmem:[#allocation3 + $0x159] sm:$0xff]
        %v2971 = vld [vmem:[#allocation3 + $0x169] sm:$0xff]
        %v2972 = vld [vmem:[#allocation3 + $0x171] sm:$0xff]
        %v2973 = vld [vmem:[#allocation3 + $0x2] sm:$0xff]
        %v2974 = vld [vmem:[#allocation3 + $0xa] sm:$0xff]
        %v2975 = vld [vmem:[#allocation3 + $0x1a] sm:$0xff]
        %v2976 = vld [vmem:[#allocation3 + $0x22] sm:$0xff]
        %v2977 = vld [vmem:[#allocation3 + $0x32] sm:$0xff]
        %v2978 = vld [vmem:[#allocation3 + $0x3a] sm:$0xff]
        %v2979 = vld [vmem:[#allocation3 + $0x4a] sm:$0xff]
        %v2980 = vld [vmem:[#allocation3 + $0x52] sm:$0xff]
        %v2981 = vld [vmem:[#allocation3 + $0x62] sm:$0xff]
        %v2982 = vld [vmem:[#allocation3 + $0x6a] sm:$0xff]
        %v2983 = vld [vmem:[#allocation3 + $0x7a] sm:$0xff]
        %v2984 = vld [vmem:[#allocation3 + $0x82] sm:$0xff]
        %v2985 = vld [vmem:[#allocation3 + $0x92] sm:$0xff]
        %v2986 = vld [vmem:[#allocation3 + $0x9a] sm:$0xff]
        %v2987 = vld [vmem:[#allocation3 + $0xaa] sm:$0xff]
        %v2988 = vld [vmem:[#allocation3 + $0xb2] sm:$0xff]
        %v2989 = vld [vmem:[#allocation3 + $0xc2] sm:$0xff]
        %v2990 = vld [vmem:[#allocation3 + $0xca] sm:$0xff]
        %v2991 = vld [vmem:[#allocation3 + $0xda] sm:$0xff]
        %v2992 = vld [vmem:[#allocation3 + $0xe2] sm:$0xff]
        %v2993 = vld [vmem:[#allocation3 + $0xf2] sm:$0xff]
        %v2994 = vld [vmem:[#allocation3 + $0xfa] sm:$0xff]
        %v2995 = vld [vmem:[#allocation3 + $0x10a] sm:$0xff]
        %v2996 = vld [vmem:[#allocation3 + $0x112] sm:$0xff]
        %v2997 = vld [vmem:[#allocation3 + $0x122] sm:$0xff]
        %v2998 = vld [vmem:[#allocation3 + $0x12a] sm:$0xff]
        %v2999 = vld [vmem:[#allocation3 + $0x13a] sm:$0xff]
        %v3000 = vld [vmem:[#allocation3 + $0x142] sm:$0xff]
        %v3001 = vld [vmem:[#allocation3 + $0x152] sm:$0xff]
        %v3002 = vld [vmem:[#allocation3 + $0x15a] sm:$0xff]
        %v3003 = vld [vmem:[#allocation3 + $0x16a] sm:$0xff]
        %v3004 = vld [vmem:[#allocation3 + $0x172] sm:$0xff]
        %s3005 = scalar_lea.vmem [#allocation4], 384
        %v3006 = vld [vmem:[%s3005] sm:$0xff]
        %v3007 = vld [vmem:[%s3005 + $0x8] sm:$0xff]
        %v3008 = vld [vmem:[%s3005 + $0x10] sm:$0xff]
        %v3009 = vld [vmem:[%s3005 + $0x18] sm:$0xff]
        %v3010 = vld [vmem:[%s3005 + $0x20] sm:$0xff]
        %v3011 = vld [vmem:[%s3005 + $0x28] sm:$0xff]
        %v3012 = vld [vmem:[%s3005 + $0x30] sm:$0xff]
        %v3013 = vld [vmem:[%s3005 + $0x38] sm:$0xff]
        %v3014 = vld [vmem:[%s3005 + $0x40] sm:$0xff]
        %v3015 = vld [vmem:[%s3005 + $0x48] sm:$0xff]
        %v3016 = vld [vmem:[%s3005 + $0x50] sm:$0xff]
        %v3017 = vld [vmem:[%s3005 + $0x58] sm:$0xff]
        %v3018 = vld [vmem:[%s3005 + $0x60] sm:$0xff]
        %v3019 = vld [vmem:[%s3005 + $0x68] sm:$0xff]
        %v3020 = vld [vmem:[%s3005 + $0x70] sm:$0xff]
        %v3021 = vld [vmem:[%s3005 + $0x78] sm:$0xff]
        %v3022 = vld [vmem:[%s3005 + $0x80] sm:$0xff]
        %v3023 = vld [vmem:[%s3005 + $0x88] sm:$0xff]
        %v3024 = vld [vmem:[%s3005 + $0x90] sm:$0xff]
        %v3025 = vld [vmem:[%s3005 + $0x98] sm:$0xff]
        %v3026 = vld [vmem:[%s3005 + $0xa0] sm:$0xff]
        %v3027 = vld [vmem:[%s3005 + $0xa8] sm:$0xff]
        %v3028 = vld [vmem:[%s3005 + $0xb0] sm:$0xff]
        %v3029 = vld [vmem:[%s3005 + $0xb8] sm:$0xff]
        %v3030 = vld [vmem:[%s3005 + $0xc0] sm:$0xff]
        %v3031 = vld [vmem:[%s3005 + $0xc8] sm:$0xff]
        %v3032 = vld [vmem:[%s3005 + $0xd0] sm:$0xff]
        %v3033 = vld [vmem:[%s3005 + $0xd8] sm:$0xff]
        %v3034 = vld [vmem:[%s3005 + $0xe0] sm:$0xff]
        %v3035 = vld [vmem:[%s3005 + $0xe8] sm:$0xff]
        %v3036 = vld [vmem:[%s3005 + $0xf0] sm:$0xff]
        %v3037 = vld [vmem:[%s3005 + $0xf8] sm:$0xff]
        %v3038 = vld [vmem:[%s3005 + $0x100] sm:$0xff]
        %v3039 = vld [vmem:[%s3005 + $0x108] sm:$0xff]
        %v3040 = vld [vmem:[%s3005 + $0x110] sm:$0xff]
        %v3041 = vld [vmem:[%s3005 + $0x118] sm:$0xff]
        %v3042 = vld [vmem:[%s3005 + $0x120] sm:$0xff]
        %v3043 = vld [vmem:[%s3005 + $0x128] sm:$0xff]
        %v3044 = vld [vmem:[%s3005 + $0x130] sm:$0xff]
        %v3045 = vld [vmem:[%s3005 + $0x138] sm:$0xff]
        %v3046 = vld [vmem:[%s3005 + $0x140] sm:$0xff]
        %v3047 = vld [vmem:[%s3005 + $0x148] sm:$0xff]
        %v3048 = vld [vmem:[%s3005 + $0x150] sm:$0xff]
        %v3049 = vld [vmem:[%s3005 + $0x158] sm:$0xff]
        %v3050 = vld [vmem:[%s3005 + $0x160] sm:$0xff]
        %v3051 = vld [vmem:[%s3005 + $0x168] sm:$0xff]
        %v3052 = vld [vmem:[%s3005 + $0x170] sm:$0xff]
        %v3053 = vld [vmem:[%s3005 + $0x178] sm:$0xff]
        %v3054 = vld [vmem:[%s2828] sm:$0xff]
        %v3055 = vld [vmem:[%s2828 + $0x8] sm:$0xff]
        %v3056 = vld [vmem:[%s2828 + $0x18] sm:$0xff]
        %v3057 = vld [vmem:[%s2828 + $0x20] sm:$0xff]
        %v3058 = vld [vmem:[%s2828 + $0x30] sm:$0xff]
        %v3059 = vld [vmem:[%s2828 + $0x38] sm:$0xff]
        %v3060 = vld [vmem:[%s2828 + $0x48] sm:$0xff]
        %v3061 = vld [vmem:[%s2828 + $0x50] sm:$0xff]
        %v3062 = vld [vmem:[%s2828 + $0x60] sm:$0xff]
        %v3063 = vld [vmem:[%s2828 + $0x68] sm:$0xff]
        %v3064 = vld [vmem:[%s2828 + $0x78] sm:$0xff]
        %v3065 = vld [vmem:[%s2828 + $0x80] sm:$0xff]
        %v3066 = vld [vmem:[%s2828 + $0x90] sm:$0xff]
        %v3067 = vld [vmem:[%s2828 + $0x98] sm:$0xff]
        %v3068 = vld [vmem:[%s2828 + $0xa8] sm:$0xff]
        %v3069 = vld [vmem:[%s2828 + $0xb0] sm:$0xff]
        %v3070 = vld [vmem:[%s2828 + $0xc0] sm:$0xff]
        %v3071 = vld [vmem:[%s2828 + $0xc8] sm:$0xff]
        %v3072 = vld [vmem:[%s2828 + $0xd8] sm:$0xff]
        %v3073 = vld [vmem:[%s2828 + $0xe0] sm:$0xff]
        %v3074 = vld [vmem:[%s2828 + $0xf0] sm:$0xff]
        %v3075 = vld [vmem:[%s2828 + $0xf8] sm:$0xff]
        %v3076 = vld [vmem:[%s2828 + $0x108] sm:$0xff]
        %v3077 = vld [vmem:[%s2828 + $0x110] sm:$0xff]
        %v3078 = vld [vmem:[%s2828 + $0x120] sm:$0xff]
        %v3079 = vld [vmem:[%s2828 + $0x128] sm:$0xff]
        %v3080 = vld [vmem:[%s2828 + $0x138] sm:$0xff]
        %v3081 = vld [vmem:[%s2828 + $0x140] sm:$0xff]
        %v3082 = vld [vmem:[%s2828 + $0x150] sm:$0xff]
        %v3083 = vld [vmem:[%s2828 + $0x158] sm:$0xff]
        %v3084 = vld [vmem:[%s2828 + $0x168] sm:$0xff]
        %v3085 = vld [vmem:[%s2828 + $0x170] sm:$0xff]
        %v3086 = vld [vmem:[%s2828 + $0x1] sm:$0xff]
        %v3087 = vld [vmem:[%s2828 + $0x9] sm:$0xff]
        %v3088 = vld [vmem:[%s2828 + $0x19] sm:$0xff]
        %v3089 = vld [vmem:[%s2828 + $0x21] sm:$0xff]
        %v3090 = vld [vmem:[%s2828 + $0x31] sm:$0xff]
        %v3091 = vld [vmem:[%s2828 + $0x39] sm:$0xff]
        %v3092 = vld [vmem:[%s2828 + $0x49] sm:$0xff]
        %v3093 = vld [vmem:[%s2828 + $0x51] sm:$0xff]
        %v3094 = vld [vmem:[%s2828 + $0x61] sm:$0xff]
        %v3095 = vld [vmem:[%s2828 + $0x69] sm:$0xff]
        %v3096 = vld [vmem:[%s2828 + $0x79] sm:$0xff]
        %v3097 = vld [vmem:[%s2828 + $0x81] sm:$0xff]
        %v3098 = vld [vmem:[%s2828 + $0x91] sm:$0xff]
        %v3099 = vld [vmem:[%s2828 + $0x99] sm:$0xff]
        %v3100 = vld [vmem:[%s2828 + $0xa9] sm:$0xff]
        %v3101 = vld [vmem:[%s2828 + $0xb1] sm:$0xff]
        %v3102 = vld [vmem:[%s2828 + $0xc1] sm:$0xff]
        %v3103 = vld [vmem:[%s2828 + $0xc9] sm:$0xff]
        %v3104 = vld [vmem:[%s2828 + $0xd9] sm:$0xff]
        %v3105 = vld [vmem:[%s2828 + $0xe1] sm:$0xff]
        %v3106 = vld [vmem:[%s2828 + $0xf1] sm:$0xff]
        %v3107 = vld [vmem:[%s2828 + $0xf9] sm:$0xff]
        %v3108 = vld [vmem:[%s2828 + $0x109] sm:$0xff]
        %v3109 = vld [vmem:[%s2828 + $0x111] sm:$0xff]
        %v3110 = vld [vmem:[%s2828 + $0x121] sm:$0xff]
        %v3111 = vld [vmem:[%s2828 + $0x129] sm:$0xff]
        %v3112 = vld [vmem:[%s2828 + $0x139] sm:$0xff]
        %v3113 = vld [vmem:[%s2828 + $0x141] sm:$0xff]
        %v3114 = vld [vmem:[%s2828 + $0x151] sm:$0xff]
        %v3115 = vld [vmem:[%s2828 + $0x159] sm:$0xff]
        %v3116 = vld [vmem:[%s2828 + $0x169] sm:$0xff]
        %v3117 = vld [vmem:[%s2828 + $0x171] sm:$0xff]
        %v3118 = vld [vmem:[%s2828 + $0x2] sm:$0xff]
        %v3119 = vld [vmem:[%s2828 + $0xa] sm:$0xff]
        %v3120 = vld [vmem:[%s2828 + $0x1a] sm:$0xff]
        %v3121 = vld [vmem:[%s2828 + $0x22] sm:$0xff]
        %v3122 = vld [vmem:[%s2828 + $0x32] sm:$0xff]
        %v3123 = vld [vmem:[%s2828 + $0x3a] sm:$0xff]
        %v3124 = vld [vmem:[%s2828 + $0x4a] sm:$0xff]
        %v3125 = vld [vmem:[%s2828 + $0x52] sm:$0xff]
        %v3126 = vld [vmem:[%s2828 + $0x62] sm:$0xff]
        %v3127 = vld [vmem:[%s2828 + $0x6a] sm:$0xff]
        %v3128 = vld [vmem:[%s2828 + $0x7a] sm:$0xff]
        %v3129 = vld [vmem:[%s2828 + $0x82] sm:$0xff]
        %v3130 = vld [vmem:[%s2828 + $0x92] sm:$0xff]
        %v3131 = vld [vmem:[%s2828 + $0x9a] sm:$0xff]
        %v3132 = vld [vmem:[%s2828 + $0xaa] sm:$0xff]
        %v3133 = vld [vmem:[%s2828 + $0xb2] sm:$0xff]
        %v3134 = vld [vmem:[%s2828 + $0xc2] sm:$0xff]
        %v3135 = vld [vmem:[%s2828 + $0xca] sm:$0xff]
        %v3136 = vld [vmem:[%s2828 + $0xda] sm:$0xff]
        %v3137 = vld [vmem:[%s2828 + $0xe2] sm:$0xff]
        %v3138 = vld [vmem:[%s2828 + $0xf2] sm:$0xff]
        %v3139 = vld [vmem:[%s2828 + $0xfa] sm:$0xff]
        %v3140 = vld [vmem:[%s2828 + $0x10a] sm:$0xff]
        %v3141 = vld [vmem:[%s2828 + $0x112] sm:$0xff]
        %v3142 = vld [vmem:[%s2828 + $0x122] sm:$0xff]
        %v3143 = vld [vmem:[%s2828 + $0x12a] sm:$0xff]
        %v3144 = vld [vmem:[%s2828 + $0x13a] sm:$0xff]
        %v3145 = vld [vmem:[%s2828 + $0x142] sm:$0xff]
        %v3146 = vld [vmem:[%s2828 + $0x152] sm:$0xff]
        %v3147 = vld [vmem:[%s2828 + $0x15a] sm:$0xff]
        %v3148 = vld [vmem:[%s2828 + $0x16a] sm:$0xff]
        %v3149 = vld [vmem:[%s2828 + $0x172] sm:$0xff]
        %3150 = vmatpush.msra.mxu0 %v3021
        %3151 = vmatpush.msra.mxu0 %v3020
        %3152 = vmatpush.msra.mxu0 %v3019
        %3153 = vmatpush.msra.mxu0 %v3018
        %3154 = vmatpush.msra.mxu0 %v3017
        %3155 = vmatpush.msra.mxu0 %v3016
        %3156 = vmatpush.msra.mxu0 %v3015
        %3157 = vmatpush.msra.mxu0 %v3014
        %3158 = vmatpush.msra.mxu0 %v3013
        %3159 = vmatpush.msra.mxu0 %v3012
        %3160 = vmatpush.msra.mxu0 %v3011
        %3161 = vmatpush.msra.mxu0 %v3010
        %3162 = vmatpush.msra.mxu0 %v3009
        %3163 = vmatpush.msra.mxu0 %v3008
        %3164 = vmatpush.msra.mxu0 %v3007
        %3165 = vmatpush.msra.mxu0 %v3006
        %3166 = vmatmul.f32.gmra.mxu0 %v3054
        %v3167 = vpop.f32.mrf.mxu0
        %v3168 = vadd.f32 0.0, %v3167
        %3169 = vmatmul.f32.gmra.mxu0 %v3055
        %v3170 = vpop.f32.mrf.mxu0
        %v3171 = vadd.f32 0.0, %v3170
        %3172 = vmatmul.f32.gmra.mxu0 %v3056
        %v3173 = vpop.f32.mrf.mxu0
        %v3174 = vadd.f32 0.0, %v3173
        %3175 = vmatmul.f32.gmra.mxu0 %v3057
        %v3176 = vpop.f32.mrf.mxu0
        %v3177 = vadd.f32 0.0, %v3176
        %3178 = vmatmul.f32.gmra.mxu0 %v3058
        %v3179 = vpop.f32.mrf.mxu0
        %v3180 = vadd.f32 0.0, %v3179
        %3181 = vmatmul.f32.gmra.mxu0 %v3059
        %v3182 = vpop.f32.mrf.mxu0
        %v3183 = vadd.f32 0.0, %v3182
        %3184 = vmatmul.f32.gmra.mxu0 %v3060
        %v3185 = vpop.f32.mrf.mxu0
        %v3186 = vadd.f32 0.0, %v3185
        %3187 = vmatmul.f32.gmra.mxu0 %v3061
        %v3188 = vpop.f32.mrf.mxu0
        %v3189 = vadd.f32 0.0, %v3188
        %3190 = vmatmul.f32.gmra.mxu0 %v3062
        %v3191 = vpop.f32.mrf.mxu0
        %v3192 = vadd.f32 0.0, %v3191
        %3193 = vmatmul.f32.gmra.mxu0 %v3063
        %v3194 = vpop.f32.mrf.mxu0
        %v3195 = vadd.f32 0.0, %v3194
        %3196 = vmatmul.f32.gmra.mxu0 %v3064
        %v3197 = vpop.f32.mrf.mxu0
        %v3198 = vadd.f32 0.0, %v3197
        %3199 = vmatmul.f32.gmra.mxu0 %v3065
        %v3200 = vpop.f32.mrf.mxu0
        %v3201 = vadd.f32 0.0, %v3200
        %3202 = vmatmul.f32.gmra.mxu0 %v3066
        %v3203 = vpop.f32.mrf.mxu0
        %v3204 = vadd.f32 0.0, %v3203
        %3205 = vmatmul.f32.gmra.mxu0 %v3067
        %v3206 = vpop.f32.mrf.mxu0
        %v3207 = vadd.f32 0.0, %v3206
        %3208 = vmatmul.f32.gmra.mxu0 %v3068
        %v3209 = vpop.f32.mrf.mxu0
        %v3210 = vadd.f32 0.0, %v3209
        %3211 = vmatmul.f32.gmra.mxu0 %v3069
        %v3212 = vpop.f32.mrf.mxu0
        %v3213 = vadd.f32 0.0, %v3212
        %3214 = vmatmul.f32.gmra.mxu0 %v3070
        %v3215 = vpop.f32.mrf.mxu0
        %v3216 = vadd.f32 0.0, %v3215
        %3217 = vmatmul.f32.gmra.mxu0 %v3071
        %v3218 = vpop.f32.mrf.mxu0
        %v3219 = vadd.f32 0.0, %v3218
        %3220 = vmatmul.f32.gmra.mxu0 %v3072
        %v3221 = vpop.f32.mrf.mxu0
        %v3222 = vadd.f32 0.0, %v3221
        %3223 = vmatmul.f32.gmra.mxu0 %v3073
        %v3224 = vpop.f32.mrf.mxu0
        %v3225 = vadd.f32 0.0, %v3224
        %3226 = vmatmul.f32.gmra.mxu0 %v3074
        %v3227 = vpop.f32.mrf.mxu0
        %v3228 = vadd.f32 0.0, %v3227
        %3229 = vmatmul.f32.gmra.mxu0 %v3075
        %v3230 = vpop.f32.mrf.mxu0
        %v3231 = vadd.f32 0.0, %v3230
        %3232 = vmatmul.f32.gmra.mxu0 %v3076
        %v3233 = vpop.f32.mrf.mxu0
        %v3234 = vadd.f32 0.0, %v3233
        %3235 = vmatmul.f32.gmra.mxu0 %v3077
        %v3236 = vpop.f32.mrf.mxu0
        %v3237 = vadd.f32 0.0, %v3236
        %3238 = vmatmul.f32.gmra.mxu0 %v3078
        %v3239 = vpop.f32.mrf.mxu0
        %v3240 = vadd.f32 0.0, %v3239
        %3241 = vmatmul.f32.gmra.mxu0 %v3079
        %v3242 = vpop.f32.mrf.mxu0
        %v3243 = vadd.f32 0.0, %v3242
        %3244 = vmatmul.f32.gmra.mxu0 %v3080
        %v3245 = vpop.f32.mrf.mxu0
        %v3246 = vadd.f32 0.0, %v3245
        %3247 = vmatmul.f32.gmra.mxu0 %v3081
        %v3248 = vpop.f32.mrf.mxu0
        %v3249 = vadd.f32 0.0, %v3248
        %3250 = vmatmul.f32.gmra.mxu0 %v3082
        %v3251 = vpop.f32.mrf.mxu0
        %v3252 = vadd.f32 0.0, %v3251
        %3253 = vmatmul.f32.gmra.mxu0 %v3083
        %v3254 = vpop.f32.mrf.mxu0
        %v3255 = vadd.f32 0.0, %v3254
        %3256 = vmatmul.f32.gmra.mxu0 %v3084
        %v3257 = vpop.f32.mrf.mxu0
        %v3258 = vadd.f32 0.0, %v3257
        %3259 = vmatmul.f32.gmra.mxu0 %v3085
        %v3260 = vpop.f32.mrf.mxu0
        %v3261 = vadd.f32 0.0, %v3260
        %3262 = vdwg.mxu0
        %3263 = vmatpush.msra.mxu0 %v3037
        %3264 = vmatpush.msra.mxu0 %v3036
        %3265 = vmatpush.msra.mxu0 %v3035
        %3266 = vmatpush.msra.mxu0 %v3034
        %3267 = vmatpush.msra.mxu0 %v3033
        %3268 = vmatpush.msra.mxu0 %v3032
        %3269 = vmatpush.msra.mxu0 %v3031
        %3270 = vmatpush.msra.mxu0 %v3030
        %3271 = vmatpush.msra.mxu0 %v3029
        %3272 = vmatpush.msra.mxu0 %v3028
        %3273 = vmatpush.msra.mxu0 %v3027
        %3274 = vmatpush.msra.mxu0 %v3026
        %3275 = vmatpush.msra.mxu0 %v3025
        %3276 = vmatpush.msra.mxu0 %v3024
        %3277 = vmatpush.msra.mxu0 %v3023
        %3278 = vmatpush.msra.mxu0 %v3022
        %3279 = vmatmul.f32.gmra.mxu0 %v3086
        %v3280 = vpop.f32.mrf.mxu0
        %v3281 = vadd.f32 %v3168, %v3280
        %3282 = vmatmul.f32.gmra.mxu0 %v3087
        %v3283 = vpop.f32.mrf.mxu0
        %v3284 = vadd.f32 %v3171, %v3283
        %3285 = vmatmul.f32.gmra.mxu0 %v3088
        %v3286 = vpop.f32.mrf.mxu0
        %v3287 = vadd.f32 %v3174, %v3286
        %3288 = vmatmul.f32.gmra.mxu0 %v3089
        %v3289 = vpop.f32.mrf.mxu0
        %v3290 = vadd.f32 %v3177, %v3289
        %3291 = vmatmul.f32.gmra.mxu0 %v3090
        %v3292 = vpop.f32.mrf.mxu0
        %v3293 = vadd.f32 %v3180, %v3292
        %3294 = vmatmul.f32.gmra.mxu0 %v3091
        %v3295 = vpop.f32.mrf.mxu0
        %v3296 = vadd.f32 %v3183, %v3295
        %3297 = vmatmul.f32.gmra.mxu0 %v3092
        %v3298 = vpop.f32.mrf.mxu0
        %v3299 = vadd.f32 %v3186, %v3298
        %3300 = vmatmul.f32.gmra.mxu0 %v3093
        %v3301 = vpop.f32.mrf.mxu0
        %v3302 = vadd.f32 %v3189, %v3301
        %3303 = vmatmul.f32.gmra.mxu0 %v3094
        %v3304 = vpop.f32.mrf.mxu0
        %v3305 = vadd.f32 %v3192, %v3304
        %3306 = vmatmul.f32.gmra.mxu0 %v3095
        %v3307 = vpop.f32.mrf.mxu0
        %v3308 = vadd.f32 %v3195, %v3307
        %3309 = vmatmul.f32.gmra.mxu0 %v3096
        %v3310 = vpop.f32.mrf.mxu0
        %v3311 = vadd.f32 %v3198, %v3310
        %3312 = vmatmul.f32.gmra.mxu0 %v3097
        %v3313 = vpop.f32.mrf.mxu0
        %v3314 = vadd.f32 %v3201, %v3313
        %3315 = vmatmul.f32.gmra.mxu0 %v3098
        %v3316 = vpop.f32.mrf.mxu0
        %v3317 = vadd.f32 %v3204, %v3316
        %3318 = vmatmul.f32.gmra.mxu0 %v3099
        %v3319 = vpop.f32.mrf.mxu0
        %v3320 = vadd.f32 %v3207, %v3319
        %3321 = vmatmul.f32.gmra.mxu0 %v3100
        %v3322 = vpop.f32.mrf.mxu0
        %v3323 = vadd.f32 %v3210, %v3322
        %3324 = vmatmul.f32.gmra.mxu0 %v3101
        %v3325 = vpop.f32.mrf.mxu0
        %v3326 = vadd.f32 %v3213, %v3325
        %3327 = vmatmul.f32.gmra.mxu0 %v3102
        %v3328 = vpop.f32.mrf.mxu0
        %v3329 = vadd.f32 %v3216, %v3328
        %3330 = vmatmul.f32.gmra.mxu0 %v3103
        %v3331 = vpop.f32.mrf.mxu0
        %v3332 = vadd.f32 %v3219, %v3331
        %3333 = vmatmul.f32.gmra.mxu0 %v3104
        %v3334 = vpop.f32.mrf.mxu0
        %v3335 = vadd.f32 %v3222, %v3334
        %3336 = vmatmul.f32.gmra.mxu0 %v3105
        %v3337 = vpop.f32.mrf.mxu0
        %v3338 = vadd.f32 %v3225, %v3337
        %3339 = vmatmul.f32.gmra.mxu0 %v3106
        %v3340 = vpop.f32.mrf.mxu0
        %v3341 = vadd.f32 %v3228, %v3340
        %3342 = vmatmul.f32.gmra.mxu0 %v3107
        %v3343 = vpop.f32.mrf.mxu0
        %v3344 = vadd.f32 %v3231, %v3343
        %3345 = vmatmul.f32.gmra.mxu0 %v3108
        %v3346 = vpop.f32.mrf.mxu0
        %v3347 = vadd.f32 %v3234, %v3346
        %3348 = vmatmul.f32.gmra.mxu0 %v3109
        %v3349 = vpop.f32.mrf.mxu0
        %v3350 = vadd.f32 %v3237, %v3349
        %3351 = vmatmul.f32.gmra.mxu0 %v3110
        %v3352 = vpop.f32.mrf.mxu0
        %v3353 = vadd.f32 %v3240, %v3352
        %3354 = vmatmul.f32.gmra.mxu0 %v3111
        %v3355 = vpop.f32.mrf.mxu0
        %v3356 = vadd.f32 %v3243, %v3355
        %3357 = vmatmul.f32.gmra.mxu0 %v3112
        %v3358 = vpop.f32.mrf.mxu0
        %v3359 = vadd.f32 %v3246, %v3358
        %3360 = vmatmul.f32.gmra.mxu0 %v3113
        %v3361 = vpop.f32.mrf.mxu0
        %v3362 = vadd.f32 %v3249, %v3361
        %3363 = vmatmul.f32.gmra.mxu0 %v3114
        %v3364 = vpop.f32.mrf.mxu0
        %v3365 = vadd.f32 %v3252, %v3364
        %3366 = vmatmul.f32.gmra.mxu0 %v3115
        %v3367 = vpop.f32.mrf.mxu0
        %v3368 = vadd.f32 %v3255, %v3367
        %3369 = vmatmul.f32.gmra.mxu0 %v3116
        %v3370 = vpop.f32.mrf.mxu0
        %v3371 = vadd.f32 %v3258, %v3370
        %3372 = vmatmul.f32.gmra.mxu0 %v3117
        %v3373 = vpop.f32.mrf.mxu0
        %v3374 = vadd.f32 %v3261, %v3373
        %3375 = vdwg.mxu0
        %3376 = vmatpush.msra.mxu0 %v3053
        %3377 = vmatpush.msra.mxu0 %v3052
        %3378 = vmatpush.msra.mxu0 %v3051
        %3379 = vmatpush.msra.mxu0 %v3050
        %3380 = vmatpush.msra.mxu0 %v3049
        %3381 = vmatpush.msra.mxu0 %v3048
        %3382 = vmatpush.msra.mxu0 %v3047
        %3383 = vmatpush.msra.mxu0 %v3046
        %3384 = vmatpush.msra.mxu0 %v3045
        %3385 = vmatpush.msra.mxu0 %v3044
        %3386 = vmatpush.msra.mxu0 %v3043
        %3387 = vmatpush.msra.mxu0 %v3042
        %3388 = vmatpush.msra.mxu0 %v3041
        %3389 = vmatpush.msra.mxu0 %v3040
        %3390 = vmatpush.msra.mxu0 %v3039
        %3391 = vmatpush.msra.mxu0 %v3038
        %3392 = vmatmul.f32.gmra.mxu0 %v3118
        %v3393 = vpop.f32.mrf.mxu0
        %v3394 = vadd.f32 %v3281, %v3393
        %3395 = vmatmul.f32.gmra.mxu0 %v3119
        %v3396 = vpop.f32.mrf.mxu0
        %v3397 = vadd.f32 %v3284, %v3396
        %3398 = vmatmul.f32.gmra.mxu0 %v3120
        %v3399 = vpop.f32.mrf.mxu0
        %v3400 = vadd.f32 %v3287, %v3399
        %3401 = vmatmul.f32.gmra.mxu0 %v3121
        %v3402 = vpop.f32.mrf.mxu0
        %v3403 = vadd.f32 %v3290, %v3402
        %3404 = vmatmul.f32.gmra.mxu0 %v3122
        %v3405 = vpop.f32.mrf.mxu0
        %v3406 = vadd.f32 %v3293, %v3405
        %3407 = vmatmul.f32.gmra.mxu0 %v3123
        %v3408 = vpop.f32.mrf.mxu0
        %v3409 = vadd.f32 %v3296, %v3408
        %3410 = vmatmul.f32.gmra.mxu0 %v3124
        %v3411 = vpop.f32.mrf.mxu0
        %v3412 = vadd.f32 %v3299, %v3411
        %3413 = vmatmul.f32.gmra.mxu0 %v3125
        %v3414 = vpop.f32.mrf.mxu0
        %v3415 = vadd.f32 %v3302, %v3414
        %3416 = vmatmul.f32.gmra.mxu0 %v3126
        %v3417 = vpop.f32.mrf.mxu0
        %v3418 = vadd.f32 %v3305, %v3417
        %3419 = vmatmul.f32.gmra.mxu0 %v3127
        %v3420 = vpop.f32.mrf.mxu0
        %v3421 = vadd.f32 %v3308, %v3420
        %3422 = vmatmul.f32.gmra.mxu0 %v3128
        %v3423 = vpop.f32.mrf.mxu0
        %v3424 = vadd.f32 %v3311, %v3423
        %3425 = vmatmul.f32.gmra.mxu0 %v3129
        %v3426 = vpop.f32.mrf.mxu0
        %v3427 = vadd.f32 %v3314, %v3426
        %3428 = vmatmul.f32.gmra.mxu0 %v3130
        %v3429 = vpop.f32.mrf.mxu0
        %v3430 = vadd.f32 %v3317, %v3429
        %3431 = vmatmul.f32.gmra.mxu0 %v3131
        %v3432 = vpop.f32.mrf.mxu0
        %v3433 = vadd.f32 %v3320, %v3432
        %3434 = vmatmul.f32.gmra.mxu0 %v3132
        %v3435 = vpop.f32.mrf.mxu0
        %v3436 = vadd.f32 %v3323, %v3435
        %3437 = vmatmul.f32.gmra.mxu0 %v3133
        %v3438 = vpop.f32.mrf.mxu0
        %v3439 = vadd.f32 %v3326, %v3438
        %3440 = vmatmul.f32.gmra.mxu0 %v3134
        %v3441 = vpop.f32.mrf.mxu0
        %v3442 = vadd.f32 %v3329, %v3441
        %3443 = vmatmul.f32.gmra.mxu0 %v3135
        %v3444 = vpop.f32.mrf.mxu0
        %v3445 = vadd.f32 %v3332, %v3444
        %3446 = vmatmul.f32.gmra.mxu0 %v3136
        %v3447 = vpop.f32.mrf.mxu0
        %v3448 = vadd.f32 %v3335, %v3447
        %3449 = vmatmul.f32.gmra.mxu0 %v3137
        %v3450 = vpop.f32.mrf.mxu0
        %v3451 = vadd.f32 %v3338, %v3450
        %3452 = vmatmul.f32.gmra.mxu0 %v3138
        %v3453 = vpop.f32.mrf.mxu0
        %v3454 = vadd.f32 %v3341, %v3453
        %3455 = vmatmul.f32.gmra.mxu0 %v3139
        %v3456 = vpop.f32.mrf.mxu0
        %v3457 = vadd.f32 %v3344, %v3456
        %3458 = vmatmul.f32.gmra.mxu0 %v3140
        %v3459 = vpop.f32.mrf.mxu0
        %v3460 = vadd.f32 %v3347, %v3459
        %3461 = vmatmul.f32.gmra.mxu0 %v3141
        %v3462 = vpop.f32.mrf.mxu0
        %v3463 = vadd.f32 %v3350, %v3462
        %3464 = vmatmul.f32.gmra.mxu0 %v3142
        %v3465 = vpop.f32.mrf.mxu0
        %v3466 = vadd.f32 %v3353, %v3465
        %3467 = vmatmul.f32.gmra.mxu0 %v3143
        %v3468 = vpop.f32.mrf.mxu0
        %v3469 = vadd.f32 %v3356, %v3468
        %3470 = vmatmul.f32.gmra.mxu0 %v3144
        %v3471 = vpop.f32.mrf.mxu0
        %v3472 = vadd.f32 %v3359, %v3471
        %3473 = vmatmul.f32.gmra.mxu0 %v3145
        %v3474 = vpop.f32.mrf.mxu0
        %v3475 = vadd.f32 %v3362, %v3474
        %3476 = vmatmul.f32.gmra.mxu0 %v3146
        %v3477 = vpop.f32.mrf.mxu0
        %v3478 = vadd.f32 %v3365, %v3477
        %3479 = vmatmul.f32.gmra.mxu0 %v3147
        %v3480 = vpop.f32.mrf.mxu0
        %v3481 = vadd.f32 %v3368, %v3480
        %3482 = vmatmul.f32.gmra.mxu0 %v3148
        %v3483 = vpop.f32.mrf.mxu0
        %v3484 = vadd.f32 %v3371, %v3483
        %3485 = vmatmul.f32.gmra.mxu0 %v3149
        %v3486 = vpop.f32.mrf.mxu0
        %v3487 = vadd.f32 %v3374, %v3486
        %3488 = vdwg.mxu0
        %3489 = vmatpush.msra.mxu0 %v2876
        %3490 = vmatpush.msra.mxu0 %v2875
        %3491 = vmatpush.msra.mxu0 %v2874
        %3492 = vmatpush.msra.mxu0 %v2873
        %3493 = vmatpush.msra.mxu0 %v2872
        %3494 = vmatpush.msra.mxu0 %v2871
        %3495 = vmatpush.msra.mxu0 %v2870
        %3496 = vmatpush.msra.mxu0 %v2869
        %3497 = vmatpush.msra.mxu0 %v2868
        %3498 = vmatpush.msra.mxu0 %v2867
        %3499 = vmatpush.msra.mxu0 %v2866
        %3500 = vmatpush.msra.mxu0 %v2865
        %3501 = vmatpush.msra.mxu0 %v2864
        %3502 = vmatpush.msra.mxu0 %v2863
        %3503 = vmatpush.msra.mxu0 %v2862
        %3504 = vmatpush.msra.mxu0 %v2861
        %3505 = vmatmul.f32.gmra.mxu0 %v2909
        %v3506 = vpop.f32.mrf.mxu0
        %v3507 = vadd.f32 %v3394, %v3506
        %3508 = vmatmul.f32.gmra.mxu0 %v2910
        %v3509 = vpop.f32.mrf.mxu0
        %v3510 = vadd.f32 %v3397, %v3509
        %3511 = vmatmul.f32.gmra.mxu0 %v2911
        %v3512 = vpop.f32.mrf.mxu0
        %v3513 = vadd.f32 %v3400, %v3512
        %3514 = vmatmul.f32.gmra.mxu0 %v2912
        %v3515 = vpop.f32.mrf.mxu0
        %v3516 = vadd.f32 %v3403, %v3515
        %3517 = vmatmul.f32.gmra.mxu0 %v2913
        %v3518 = vpop.f32.mrf.mxu0
        %v3519 = vadd.f32 %v3406, %v3518
        %3520 = vmatmul.f32.gmra.mxu0 %v2914
        %v3521 = vpop.f32.mrf.mxu0
        %v3522 = vadd.f32 %v3409, %v3521
        %3523 = vmatmul.f32.gmra.mxu0 %v2915
        %v3524 = vpop.f32.mrf.mxu0
        %v3525 = vadd.f32 %v3412, %v3524
        %3526 = vmatmul.f32.gmra.mxu0 %v2916
        %v3527 = vpop.f32.mrf.mxu0
        %v3528 = vadd.f32 %v3415, %v3527
        %3529 = vmatmul.f32.gmra.mxu0 %v2917
        %v3530 = vpop.f32.mrf.mxu0
        %v3531 = vadd.f32 %v3418, %v3530
        %3532 = vmatmul.f32.gmra.mxu0 %v2918
        %v3533 = vpop.f32.mrf.mxu0
        %v3534 = vadd.f32 %v3421, %v3533
        %3535 = vmatmul.f32.gmra.mxu0 %v2919
        %v3536 = vpop.f32.mrf.mxu0
        %v3537 = vadd.f32 %v3424, %v3536
        %3538 = vmatmul.f32.gmra.mxu0 %v2920
        %v3539 = vpop.f32.mrf.mxu0
        %v3540 = vadd.f32 %v3427, %v3539
        %3541 = vmatmul.f32.gmra.mxu0 %v2921
        %v3542 = vpop.f32.mrf.mxu0
        %v3543 = vadd.f32 %v3430, %v3542
        %3544 = vmatmul.f32.gmra.mxu0 %v2922
        %v3545 = vpop.f32.mrf.mxu0
        %v3546 = vadd.f32 %v3433, %v3545
        %3547 = vmatmul.f32.gmra.mxu0 %v2923
        %v3548 = vpop.f32.mrf.mxu0
        %v3549 = vadd.f32 %v3436, %v3548
        %3550 = vmatmul.f32.gmra.mxu0 %v2924
        %v3551 = vpop.f32.mrf.mxu0
        %v3552 = vadd.f32 %v3439, %v3551
        %3553 = vmatmul.f32.gmra.mxu0 %v2925
        %v3554 = vpop.f32.mrf.mxu0
        %v3555 = vadd.f32 %v3442, %v3554
        %3556 = vmatmul.f32.gmra.mxu0 %v2926
        %v3557 = vpop.f32.mrf.mxu0
        %v3558 = vadd.f32 %v3445, %v3557
        %3559 = vmatmul.f32.gmra.mxu0 %v2927
        %v3560 = vpop.f32.mrf.mxu0
        %v3561 = vadd.f32 %v3448, %v3560
        %3562 = vmatmul.f32.gmra.mxu0 %v2928
        %v3563 = vpop.f32.mrf.mxu0
        %v3564 = vadd.f32 %v3451, %v3563
        %3565 = vmatmul.f32.gmra.mxu0 %v2929
        %v3566 = vpop.f32.mrf.mxu0
        %v3567 = vadd.f32 %v3454, %v3566
        %3568 = vmatmul.f32.gmra.mxu0 %v2930
        %v3569 = vpop.f32.mrf.mxu0
        %v3570 = vadd.f32 %v3457, %v3569
        %3571 = vmatmul.f32.gmra.mxu0 %v2931
        %v3572 = vpop.f32.mrf.mxu0
        %v3573 = vadd.f32 %v3460, %v3572
        %3574 = vmatmul.f32.gmra.mxu0 %v2932
        %v3575 = vpop.f32.mrf.mxu0
        %v3576 = vadd.f32 %v3463, %v3575
        %3577 = vmatmul.f32.gmra.mxu0 %v2933
        %v3578 = vpop.f32.mrf.mxu0
        %v3579 = vadd.f32 %v3466, %v3578
        %3580 = vmatmul.f32.gmra.mxu0 %v2934
        %v3581 = vpop.f32.mrf.mxu0
        %v3582 = vadd.f32 %v3469, %v3581
        %3583 = vmatmul.f32.gmra.mxu0 %v2935
        %v3584 = vpop.f32.mrf.mxu0
        %v3585 = vadd.f32 %v3472, %v3584
        %3586 = vmatmul.f32.gmra.mxu0 %v2936
        %v3587 = vpop.f32.mrf.mxu0
        %v3588 = vadd.f32 %v3475, %v3587
        %3589 = vmatmul.f32.gmra.mxu0 %v2937
        %v3590 = vpop.f32.mrf.mxu0
        %v3591 = vadd.f32 %v3478, %v3590
        %3592 = vmatmul.f32.gmra.mxu0 %v2938
        %v3593 = vpop.f32.mrf.mxu0
        %v3594 = vadd.f32 %v3481, %v3593
        %3595 = vmatmul.f32.gmra.mxu0 %v2939
        %v3596 = vpop.f32.mrf.mxu0
        %v3597 = vadd.f32 %v3484, %v3596
        %3598 = vmatmul.f32.gmra.mxu0 %v2940
        %v3599 = vpop.f32.mrf.mxu0
        %v3600 = vadd.f32 %v3487, %v3599
        %3601 = vdwg.mxu0
        %3602 = vmatpush.msra.mxu0 %v2892
        %3603 = vmatpush.msra.mxu0 %v2891
        %3604 = vmatpush.msra.mxu0 %v2890
        %3605 = vmatpush.msra.mxu0 %v2889
        %3606 = vmatpush.msra.mxu0 %v2888
        %3607 = vmatpush.msra.mxu0 %v2887
        %3608 = vmatpush.msra.mxu0 %v2886
        %3609 = vmatpush.msra.mxu0 %v2885
        %3610 = vmatpush.msra.mxu0 %v2884
        %3611 = vmatpush.msra.mxu0 %v2883
        %3612 = vmatpush.msra.mxu0 %v2882
        %3613 = vmatpush.msra.mxu0 %v2881
        %3614 = vmatpush.msra.mxu0 %v2880
        %3615 = vmatpush.msra.mxu0 %v2879
        %3616 = vmatpush.msra.mxu0 %v2878
        %3617 = vmatpush.msra.mxu0 %v2877
        %3618 = vmatmul.f32.gmra.mxu0 %v2941
        %v3619 = vpop.f32.mrf.mxu0
        %v3620 = vadd.f32 %v3507, %v3619
        %3621 = vmatmul.f32.gmra.mxu0 %v2942
        %v3622 = vpop.f32.mrf.mxu0
        %v3623 = vadd.f32 %v3510, %v3622
        %3624 = vmatmul.f32.gmra.mxu0 %v2943
        %v3625 = vpop.f32.mrf.mxu0
        %v3626 = vadd.f32 %v3513, %v3625
        %3627 = vmatmul.f32.gmra.mxu0 %v2944
        %v3628 = vpop.f32.mrf.mxu0
        %v3629 = vadd.f32 %v3516, %v3628
        %3630 = vmatmul.f32.gmra.mxu0 %v2945
        %v3631 = vpop.f32.mrf.mxu0
        %v3632 = vadd.f32 %v3519, %v3631
        %3633 = vmatmul.f32.gmra.mxu0 %v2946
        %v3634 = vpop.f32.mrf.mxu0
        %v3635 = vadd.f32 %v3522, %v3634
        %3636 = vmatmul.f32.gmra.mxu0 %v2947
        %v3637 = vpop.f32.mrf.mxu0
        %v3638 = vadd.f32 %v3525, %v3637
        %3639 = vmatmul.f32.gmra.mxu0 %v2948
        %v3640 = vpop.f32.mrf.mxu0
        %v3641 = vadd.f32 %v3528, %v3640
        %3642 = vmatmul.f32.gmra.mxu0 %v2949
        %v3643 = vpop.f32.mrf.mxu0
        %v3644 = vadd.f32 %v3531, %v3643
        %3645 = vmatmul.f32.gmra.mxu0 %v2950
        %v3646 = vpop.f32.mrf.mxu0
        %v3647 = vadd.f32 %v3534, %v3646
        %3648 = vmatmul.f32.gmra.mxu0 %v2951
        %v3649 = vpop.f32.mrf.mxu0
        %v3650 = vadd.f32 %v3537, %v3649
        %3651 = vmatmul.f32.gmra.mxu0 %v2952
        %v3652 = vpop.f32.mrf.mxu0
        %v3653 = vadd.f32 %v3540, %v3652
        %3654 = vmatmul.f32.gmra.mxu0 %v2953
        %v3655 = vpop.f32.mrf.mxu0
        %v3656 = vadd.f32 %v3543, %v3655
        %3657 = vmatmul.f32.gmra.mxu0 %v2954
        %v3658 = vpop.f32.mrf.mxu0
        %v3659 = vadd.f32 %v3546, %v3658
        %3660 = vmatmul.f32.gmra.mxu0 %v2955
        %v3661 = vpop.f32.mrf.mxu0
        %v3662 = vadd.f32 %v3549, %v3661
        %3663 = vmatmul.f32.gmra.mxu0 %v2956
        %v3664 = vpop.f32.mrf.mxu0
        %v3665 = vadd.f32 %v3552, %v3664
        %3666 = vmatmul.f32.gmra.mxu0 %v2957
        %v3667 = vpop.f32.mrf.mxu0
        %v3668 = vadd.f32 %v3555, %v3667
        %3669 = vmatmul.f32.gmra.mxu0 %v2958
        %v3670 = vpop.f32.mrf.mxu0
        %v3671 = vadd.f32 %v3558, %v3670
        %3672 = vmatmul.f32.gmra.mxu0 %v2959
        %v3673 = vpop.f32.mrf.mxu0
        %v3674 = vadd.f32 %v3561, %v3673
        %3675 = vmatmul.f32.gmra.mxu0 %v2960
        %v3676 = vpop.f32.mrf.mxu0
        %v3677 = vadd.f32 %v3564, %v3676
        %3678 = vmatmul.f32.gmra.mxu0 %v2961
        %v3679 = vpop.f32.mrf.mxu0
        %v3680 = vadd.f32 %v3567, %v3679
        %3681 = vmatmul.f32.gmra.mxu0 %v2962
        %v3682 = vpop.f32.mrf.mxu0
        %v3683 = vadd.f32 %v3570, %v3682
        %3684 = vmatmul.f32.gmra.mxu0 %v2963
        %v3685 = vpop.f32.mrf.mxu0
        %v3686 = vadd.f32 %v3573, %v3685
        %3687 = vmatmul.f32.gmra.mxu0 %v2964
        %v3688 = vpop.f32.mrf.mxu0
        %v3689 = vadd.f32 %v3576, %v3688
        %3690 = vmatmul.f32.gmra.mxu0 %v2965
        %v3691 = vpop.f32.mrf.mxu0
        %v3692 = vadd.f32 %v3579, %v3691
        %3693 = vmatmul.f32.gmra.mxu0 %v2966
        %v3694 = vpop.f32.mrf.mxu0
        %v3695 = vadd.f32 %v3582, %v3694
        %3696 = vmatmul.f32.gmra.mxu0 %v2967
        %v3697 = vpop.f32.mrf.mxu0
        %v3698 = vadd.f32 %v3585, %v3697
        %3699 = vmatmul.f32.gmra.mxu0 %v2968
        %v3700 = vpop.f32.mrf.mxu0
        %v3701 = vadd.f32 %v3588, %v3700
        %3702 = vmatmul.f32.gmra.mxu0 %v2969
        %v3703 = vpop.f32.mrf.mxu0
        %v3704 = vadd.f32 %v3591, %v3703
        %3705 = vmatmul.f32.gmra.mxu0 %v2970
        %v3706 = vpop.f32.mrf.mxu0
        %v3707 = vadd.f32 %v3594, %v3706
        %3708 = vmatmul.f32.gmra.mxu0 %v2971
        %v3709 = vpop.f32.mrf.mxu0
        %v3710 = vadd.f32 %v3597, %v3709
        %3711 = vmatmul.f32.gmra.mxu0 %v2972
        %v3712 = vpop.f32.mrf.mxu0
        %v3713 = vadd.f32 %v3600, %v3712
        %3714 = vdwg.mxu0
        %3715 = vmatpush.msra.mxu0 %v2908
        %3716 = vmatpush.msra.mxu0 %v2907
        %3717 = vmatpush.msra.mxu0 %v2906
        %3718 = vmatpush.msra.mxu0 %v2905
        %3719 = vmatpush.msra.mxu0 %v2904
        %3720 = vmatpush.msra.mxu0 %v2903
        %3721 = vmatpush.msra.mxu0 %v2902
        %3722 = vmatpush.msra.mxu0 %v2901
        %3723 = vmatpush.msra.mxu0 %v2900
        %3724 = vmatpush.msra.mxu0 %v2899
        %3725 = vmatpush.msra.mxu0 %v2898
        %3726 = vmatpush.msra.mxu0 %v2897
        %3727 = vmatpush.msra.mxu0 %v2896
        %3728 = vmatpush.msra.mxu0 %v2895
        %3729 = vmatpush.msra.mxu0 %v2894
        %3730 = vmatpush.msra.mxu0 %v2893
        %3731 = vmatmul.f32.gmra.mxu0 %v2973
        %v3732 = vpop.f32.mrf.mxu0
        %v3733 = vadd.f32 %v3620, %v3732
        %3734 = vmatmul.f32.gmra.mxu0 %v2974
        %v3735 = vpop.f32.mrf.mxu0
        %v3736 = vadd.f32 %v3623, %v3735
        %3737 = vmatmul.f32.gmra.mxu0 %v2975
        %v3738 = vpop.f32.mrf.mxu0
        %v3739 = vadd.f32 %v3626, %v3738
        %3740 = vmatmul.f32.gmra.mxu0 %v2976
        %v3741 = vpop.f32.mrf.mxu0
        %v3742 = vadd.f32 %v3629, %v3741
        %3743 = vmatmul.f32.gmra.mxu0 %v2977
        %v3744 = vpop.f32.mrf.mxu0
        %v3745 = vadd.f32 %v3632, %v3744
        %3746 = vmatmul.f32.gmra.mxu0 %v2978
        %v3747 = vpop.f32.mrf.mxu0
        %v3748 = vadd.f32 %v3635, %v3747
        %3749 = vmatmul.f32.gmra.mxu0 %v2979
        %v3750 = vpop.f32.mrf.mxu0
        %v3751 = vadd.f32 %v3638, %v3750
        %3752 = vmatmul.f32.gmra.mxu0 %v2980
        %v3753 = vpop.f32.mrf.mxu0
        %v3754 = vadd.f32 %v3641, %v3753
        %3755 = vmatmul.f32.gmra.mxu0 %v2981
        %v3756 = vpop.f32.mrf.mxu0
        %v3757 = vadd.f32 %v3644, %v3756
        %3758 = vmatmul.f32.gmra.mxu0 %v2982
        %v3759 = vpop.f32.mrf.mxu0
        %v3760 = vadd.f32 %v3647, %v3759
        %3761 = vmatmul.f32.gmra.mxu0 %v2983
        %v3762 = vpop.f32.mrf.mxu0
        %v3763 = vadd.f32 %v3650, %v3762
        %3764 = vmatmul.f32.gmra.mxu0 %v2984
        %v3765 = vpop.f32.mrf.mxu0
        %v3766 = vadd.f32 %v3653, %v3765
        %3767 = vmatmul.f32.gmra.mxu0 %v2985
        %v3768 = vpop.f32.mrf.mxu0
        %v3769 = vadd.f32 %v3656, %v3768
        %3770 = vmatmul.f32.gmra.mxu0 %v2986
        %v3771 = vpop.f32.mrf.mxu0
        %v3772 = vadd.f32 %v3659, %v3771
        %3773 = vmatmul.f32.gmra.mxu0 %v2987
        %v3774 = vpop.f32.mrf.mxu0
        %v3775 = vadd.f32 %v3662, %v3774
        %3776 = vmatmul.f32.gmra.mxu0 %v2988
        %v3777 = vpop.f32.mrf.mxu0
        %v3778 = vadd.f32 %v3665, %v3777
        %3779 = vmatmul.f32.gmra.mxu0 %v2989
        %v3780 = vpop.f32.mrf.mxu0
        %v3781 = vadd.f32 %v3668, %v3780
        %3782 = vmatmul.f32.gmra.mxu0 %v2990
        %v3783 = vpop.f32.mrf.mxu0
        %v3784 = vadd.f32 %v3671, %v3783
        %3785 = vmatmul.f32.gmra.mxu0 %v2991
        %v3786 = vpop.f32.mrf.mxu0
        %v3787 = vadd.f32 %v3674, %v3786
        %3788 = vmatmul.f32.gmra.mxu0 %v2992
        %v3789 = vpop.f32.mrf.mxu0
        %v3790 = vadd.f32 %v3677, %v3789
        %3791 = vmatmul.f32.gmra.mxu0 %v2993
        %v3792 = vpop.f32.mrf.mxu0
        %v3793 = vadd.f32 %v3680, %v3792
        %3794 = vmatmul.f32.gmra.mxu0 %v2994
        %v3795 = vpop.f32.mrf.mxu0
        %v3796 = vadd.f32 %v3683, %v3795
        %3797 = vmatmul.f32.gmra.mxu0 %v2995
        %v3798 = vpop.f32.mrf.mxu0
        %v3799 = vadd.f32 %v3686, %v3798
        %3800 = vmatmul.f32.gmra.mxu0 %v2996
        %v3801 = vpop.f32.mrf.mxu0
        %v3802 = vadd.f32 %v3689, %v3801
        %3803 = vmatmul.f32.gmra.mxu0 %v2997
        %v3804 = vpop.f32.mrf.mxu0
        %v3805 = vadd.f32 %v3692, %v3804
        %3806 = vmatmul.f32.gmra.mxu0 %v2998
        %v3807 = vpop.f32.mrf.mxu0
        %v3808 = vadd.f32 %v3695, %v3807
        %3809 = vmatmul.f32.gmra.mxu0 %v2999
        %v3810 = vpop.f32.mrf.mxu0
        %v3811 = vadd.f32 %v3698, %v3810
        %3812 = vmatmul.f32.gmra.mxu0 %v3000
        %v3813 = vpop.f32.mrf.mxu0
        %v3814 = vadd.f32 %v3701, %v3813
        %3815 = vmatmul.f32.gmra.mxu0 %v3001
        %v3816 = vpop.f32.mrf.mxu0
        %v3817 = vadd.f32 %v3704, %v3816
        %3818 = vmatmul.f32.gmra.mxu0 %v3002
        %v3819 = vpop.f32.mrf.mxu0
        %v3820 = vadd.f32 %v3707, %v3819
        %3821 = vmatmul.f32.gmra.mxu0 %v3003
        %v3822 = vpop.f32.mrf.mxu0
        %v3823 = vadd.f32 %v3710, %v3822
        %3824 = vmatmul.f32.gmra.mxu0 %v3004
        %v3825 = vpop.f32.mrf.mxu0
        %v3826 = vadd.f32 %v3713, %v3825
        %3827 = vdwg.mxu0
        %s3828 = scalar_lea.vmem [#allocation4], 768
        %v3829 = vld [vmem:[%s3828] sm:$0xff]
        %v3830 = vld [vmem:[%s3828 + $0x8] sm:$0xff]
        %v3831 = vld [vmem:[%s3828 + $0x10] sm:$0xff]
        %v3832 = vld [vmem:[%s3828 + $0x18] sm:$0xff]
        %v3833 = vld [vmem:[%s3828 + $0x20] sm:$0xff]
        %v3834 = vld [vmem:[%s3828 + $0x28] sm:$0xff]
        %v3835 = vld [vmem:[%s3828 + $0x30] sm:$0xff]
        %v3836 = vld [vmem:[%s3828 + $0x38] sm:$0xff]
        %v3837 = vld [vmem:[%s3828 + $0x40] sm:$0xff]
        %v3838 = vld [vmem:[%s3828 + $0x48] sm:$0xff]
        %v3839 = vld [vmem:[%s3828 + $0x50] sm:$0xff]
        %v3840 = vld [vmem:[%s3828 + $0x58] sm:$0xff]
        %v3841 = vld [vmem:[%s3828 + $0x60] sm:$0xff]
        %v3842 = vld [vmem:[%s3828 + $0x68] sm:$0xff]
        %v3843 = vld [vmem:[%s3828 + $0x70] sm:$0xff]
        %v3844 = vld [vmem:[%s3828 + $0x78] sm:$0xff]
        %v3845 = vld [vmem:[%s3828 + $0x80] sm:$0xff]
        %v3846 = vld [vmem:[%s3828 + $0x88] sm:$0xff]
        %v3847 = vld [vmem:[%s3828 + $0x90] sm:$0xff]
        %v3848 = vld [vmem:[%s3828 + $0x98] sm:$0xff]
        %v3849 = vld [vmem:[%s3828 + $0xa0] sm:$0xff]
        %v3850 = vld [vmem:[%s3828 + $0xa8] sm:$0xff]
        %v3851 = vld [vmem:[%s3828 + $0xb0] sm:$0xff]
        %v3852 = vld [vmem:[%s3828 + $0xb8] sm:$0xff]
        %v3853 = vld [vmem:[%s3828 + $0xc0] sm:$0xff]
        %v3854 = vld [vmem:[%s3828 + $0xc8] sm:$0xff]
        %v3855 = vld [vmem:[%s3828 + $0xd0] sm:$0xff]
        %v3856 = vld [vmem:[%s3828 + $0xd8] sm:$0xff]
        %v3857 = vld [vmem:[%s3828 + $0xe0] sm:$0xff]
        %v3858 = vld [vmem:[%s3828 + $0xe8] sm:$0xff]
        %v3859 = vld [vmem:[%s3828 + $0xf0] sm:$0xff]
        %v3860 = vld [vmem:[%s3828 + $0xf8] sm:$0xff]
        %v3861 = vld [vmem:[%s3828 + $0x100] sm:$0xff]
        %v3862 = vld [vmem:[%s3828 + $0x108] sm:$0xff]
        %v3863 = vld [vmem:[%s3828 + $0x110] sm:$0xff]
        %v3864 = vld [vmem:[%s3828 + $0x118] sm:$0xff]
        %v3865 = vld [vmem:[%s3828 + $0x120] sm:$0xff]
        %v3866 = vld [vmem:[%s3828 + $0x128] sm:$0xff]
        %v3867 = vld [vmem:[%s3828 + $0x130] sm:$0xff]
        %v3868 = vld [vmem:[%s3828 + $0x138] sm:$0xff]
        %v3869 = vld [vmem:[%s3828 + $0x140] sm:$0xff]
        %v3870 = vld [vmem:[%s3828 + $0x148] sm:$0xff]
        %v3871 = vld [vmem:[%s3828 + $0x150] sm:$0xff]
        %v3872 = vld [vmem:[%s3828 + $0x158] sm:$0xff]
        %v3873 = vld [vmem:[%s3828 + $0x160] sm:$0xff]
        %v3874 = vld [vmem:[%s3828 + $0x168] sm:$0xff]
        %v3875 = vld [vmem:[%s3828 + $0x170] sm:$0xff]
        %v3876 = vld [vmem:[%s3828 + $0x178] sm:$0xff]
        %s3877 = scalar_lea.vmem [#allocation3], 48
        %v3878 = vld [vmem:[%s3877] sm:$0xff]
        %v3879 = vld [vmem:[%s3877 + $0x8] sm:$0xff]
        %v3880 = vld [vmem:[%s3877 + $0x18] sm:$0xff]
        %v3881 = vld [vmem:[%s3877 + $0x20] sm:$0xff]
        %v3882 = vld [vmem:[%s3877 + $0x30] sm:$0xff]
        %v3883 = vld [vmem:[%s3877 + $0x38] sm:$0xff]
        %v3884 = vld [vmem:[%s3877 + $0x48] sm:$0xff]
        %v3885 = vld [vmem:[%s3877 + $0x50] sm:$0xff]
        %v3886 = vld [vmem:[%s3877 + $0x60] sm:$0xff]
        %v3887 = vld [vmem:[%s3877 + $0x68] sm:$0xff]
        %v3888 = vld [vmem:[%s3877 + $0x78] sm:$0xff]
        %v3889 = vld [vmem:[%s3877 + $0x80] sm:$0xff]
        %v3890 = vld [vmem:[%s3877 + $0x90] sm:$0xff]
        %v3891 = vld [vmem:[%s3877 + $0x98] sm:$0xff]
        %v3892 = vld [vmem:[%s3877 + $0xa8] sm:$0xff]
        %v3893 = vld [vmem:[%s3877 + $0xb0] sm:$0xff]
        %v3894 = vld [vmem:[%s3877 + $0xc0] sm:$0xff]
        %v3895 = vld [vmem:[%s3877 + $0xc8] sm:$0xff]
        %v3896 = vld [vmem:[%s3877 + $0xd8] sm:$0xff]
        %v3897 = vld [vmem:[%s3877 + $0xe0] sm:$0xff]
        %v3898 = vld [vmem:[%s3877 + $0xf0] sm:$0xff]
        %v3899 = vld [vmem:[%s3877 + $0xf8] sm:$0xff]
        %v3900 = vld [vmem:[%s3877 + $0x108] sm:$0xff]
        %v3901 = vld [vmem:[%s3877 + $0x110] sm:$0xff]
        %v3902 = vld [vmem:[%s3877 + $0x120] sm:$0xff]
        %v3903 = vld [vmem:[%s3877 + $0x128] sm:$0xff]
        %v3904 = vld [vmem:[%s3877 + $0x138] sm:$0xff]
        %v3905 = vld [vmem:[%s3877 + $0x140] sm:$0xff]
        %v3906 = vld [vmem:[%s3877 + $0x150] sm:$0xff]
        %v3907 = vld [vmem:[%s3877 + $0x158] sm:$0xff]
        %v3908 = vld [vmem:[%s3877 + $0x168] sm:$0xff]
        %v3909 = vld [vmem:[%s3877 + $0x170] sm:$0xff]
        %v3910 = vld [vmem:[%s3877 + $0x1] sm:$0xff]
        %v3911 = vld [vmem:[%s3877 + $0x9] sm:$0xff]
        %v3912 = vld [vmem:[%s3877 + $0x19] sm:$0xff]
        %v3913 = vld [vmem:[%s3877 + $0x21] sm:$0xff]
        %v3914 = vld [vmem:[%s3877 + $0x31] sm:$0xff]
        %v3915 = vld [vmem:[%s3877 + $0x39] sm:$0xff]
        %v3916 = vld [vmem:[%s3877 + $0x49] sm:$0xff]
        %v3917 = vld [vmem:[%s3877 + $0x51] sm:$0xff]
        %v3918 = vld [vmem:[%s3877 + $0x61] sm:$0xff]
        %v3919 = vld [vmem:[%s3877 + $0x69] sm:$0xff]
        %v3920 = vld [vmem:[%s3877 + $0x79] sm:$0xff]
        %v3921 = vld [vmem:[%s3877 + $0x81] sm:$0xff]
        %v3922 = vld [vmem:[%s3877 + $0x91] sm:$0xff]
        %v3923 = vld [vmem:[%s3877 + $0x99] sm:$0xff]
        %v3924 = vld [vmem:[%s3877 + $0xa9] sm:$0xff]
        %v3925 = vld [vmem:[%s3877 + $0xb1] sm:$0xff]
        %v3926 = vld [vmem:[%s3877 + $0xc1] sm:$0xff]
        %v3927 = vld [vmem:[%s3877 + $0xc9] sm:$0xff]
        %v3928 = vld [vmem:[%s3877 + $0xd9] sm:$0xff]
        %v3929 = vld [vmem:[%s3877 + $0xe1] sm:$0xff]
        %v3930 = vld [vmem:[%s3877 + $0xf1] sm:$0xff]
        %v3931 = vld [vmem:[%s3877 + $0xf9] sm:$0xff]
        %v3932 = vld [vmem:[%s3877 + $0x109] sm:$0xff]
        %v3933 = vld [vmem:[%s3877 + $0x111] sm:$0xff]
        %v3934 = vld [vmem:[%s3877 + $0x121] sm:$0xff]
        %v3935 = vld [vmem:[%s3877 + $0x129] sm:$0xff]
        %v3936 = vld [vmem:[%s3877 + $0x139] sm:$0xff]
        %v3937 = vld [vmem:[%s3877 + $0x141] sm:$0xff]
        %v3938 = vld [vmem:[%s3877 + $0x151] sm:$0xff]
        %v3939 = vld [vmem:[%s3877 + $0x159] sm:$0xff]
        %v3940 = vld [vmem:[%s3877 + $0x169] sm:$0xff]
        %v3941 = vld [vmem:[%s3877 + $0x171] sm:$0xff]
        %v3942 = vld [vmem:[%s3877 + $0x2] sm:$0xff]
        %v3943 = vld [vmem:[%s3877 + $0xa] sm:$0xff]
        %v3944 = vld [vmem:[%s3877 + $0x1a] sm:$0xff]
        %v3945 = vld [vmem:[%s3877 + $0x22] sm:$0xff]
        %v3946 = vld [vmem:[%s3877 + $0x32] sm:$0xff]
        %v3947 = vld [vmem:[%s3877 + $0x3a] sm:$0xff]
        %v3948 = vld [vmem:[%s3877 + $0x4a] sm:$0xff]
        %v3949 = vld [vmem:[%s3877 + $0x52] sm:$0xff]
        %v3950 = vld [vmem:[%s3877 + $0x62] sm:$0xff]
        %v3951 = vld [vmem:[%s3877 + $0x6a] sm:$0xff]
        %v3952 = vld [vmem:[%s3877 + $0x7a] sm:$0xff]
        %v3953 = vld [vmem:[%s3877 + $0x82] sm:$0xff]
        %v3954 = vld [vmem:[%s3877 + $0x92] sm:$0xff]
        %v3955 = vld [vmem:[%s3877 + $0x9a] sm:$0xff]
        %v3956 = vld [vmem:[%s3877 + $0xaa] sm:$0xff]
        %v3957 = vld [vmem:[%s3877 + $0xb2] sm:$0xff]
        %v3958 = vld [vmem:[%s3877 + $0xc2] sm:$0xff]
        %v3959 = vld [vmem:[%s3877 + $0xca] sm:$0xff]
        %v3960 = vld [vmem:[%s3877 + $0xda] sm:$0xff]
        %v3961 = vld [vmem:[%s3877 + $0xe2] sm:$0xff]
        %v3962 = vld [vmem:[%s3877 + $0xf2] sm:$0xff]
        %v3963 = vld [vmem:[%s3877 + $0xfa] sm:$0xff]
        %v3964 = vld [vmem:[%s3877 + $0x10a] sm:$0xff]
        %v3965 = vld [vmem:[%s3877 + $0x112] sm:$0xff]
        %v3966 = vld [vmem:[%s3877 + $0x122] sm:$0xff]
        %v3967 = vld [vmem:[%s3877 + $0x12a] sm:$0xff]
        %v3968 = vld [vmem:[%s3877 + $0x13a] sm:$0xff]
        %v3969 = vld [vmem:[%s3877 + $0x142] sm:$0xff]
        %v3970 = vld [vmem:[%s3877 + $0x152] sm:$0xff]
        %v3971 = vld [vmem:[%s3877 + $0x15a] sm:$0xff]
        %v3972 = vld [vmem:[%s3877 + $0x16a] sm:$0xff]
        %v3973 = vld [vmem:[%s3877 + $0x172] sm:$0xff]
        %3974 = vmatpush.msra.mxu0 %v3844
        %3975 = vmatpush.msra.mxu0 %v3843
        %3976 = vmatpush.msra.mxu0 %v3842
        %3977 = vmatpush.msra.mxu0 %v3841
        %3978 = vmatpush.msra.mxu0 %v3840
        %3979 = vmatpush.msra.mxu0 %v3839
        %3980 = vmatpush.msra.mxu0 %v3838
        %3981 = vmatpush.msra.mxu0 %v3837
        %3982 = vmatpush.msra.mxu0 %v3836
        %3983 = vmatpush.msra.mxu0 %v3835
        %3984 = vmatpush.msra.mxu0 %v3834
        %3985 = vmatpush.msra.mxu0 %v3833
        %3986 = vmatpush.msra.mxu0 %v3832
        %3987 = vmatpush.msra.mxu0 %v3831
        %3988 = vmatpush.msra.mxu0 %v3830
        %3989 = vmatpush.msra.mxu0 %v3829
        %3990 = vmatmul.f32.gmra.mxu0 %v3878
        %v3991 = vpop.f32.mrf.mxu0
        %v3992 = vadd.f32 0.0, %v3991
        %3993 = vmatmul.f32.gmra.mxu0 %v3879
        %v3994 = vpop.f32.mrf.mxu0
        %v3995 = vadd.f32 0.0, %v3994
        %3996 = vmatmul.f32.gmra.mxu0 %v3880
        %v3997 = vpop.f32.mrf.mxu0
        %v3998 = vadd.f32 0.0, %v3997
        %3999 = vmatmul.f32.gmra.mxu0 %v3881
        %v4000 = vpop.f32.mrf.mxu0
        %v4001 = vadd.f32 0.0, %v4000
        %4002 = vmatmul.f32.gmra.mxu0 %v3882
        %v4003 = vpop.f32.mrf.mxu0
        %v4004 = vadd.f32 0.0, %v4003
        %4005 = vmatmul.f32.gmra.mxu0 %v3883
        %v4006 = vpop.f32.mrf.mxu0
        %v4007 = vadd.f32 0.0, %v4006
        %4008 = vmatmul.f32.gmra.mxu0 %v3884
        %v4009 = vpop.f32.mrf.mxu0
        %v4010 = vadd.f32 0.0, %v4009
        %4011 = vmatmul.f32.gmra.mxu0 %v3885
        %v4012 = vpop.f32.mrf.mxu0
        %v4013 = vadd.f32 0.0, %v4012
        %4014 = vmatmul.f32.gmra.mxu0 %v3886
        %v4015 = vpop.f32.mrf.mxu0
        %v4016 = vadd.f32 0.0, %v4015
        %4017 = vmatmul.f32.gmra.mxu0 %v3887
        %v4018 = vpop.f32.mrf.mxu0
        %v4019 = vadd.f32 0.0, %v4018
        %4020 = vmatmul.f32.gmra.mxu0 %v3888
        %v4021 = vpop.f32.mrf.mxu0
        %v4022 = vadd.f32 0.0, %v4021
        %4023 = vmatmul.f32.gmra.mxu0 %v3889
        %v4024 = vpop.f32.mrf.mxu0
        %v4025 = vadd.f32 0.0, %v4024
        %4026 = vmatmul.f32.gmra.mxu0 %v3890
        %v4027 = vpop.f32.mrf.mxu0
        %v4028 = vadd.f32 0.0, %v4027
        %4029 = vmatmul.f32.gmra.mxu0 %v3891
        %v4030 = vpop.f32.mrf.mxu0
        %v4031 = vadd.f32 0.0, %v4030
        %4032 = vmatmul.f32.gmra.mxu0 %v3892
        %v4033 = vpop.f32.mrf.mxu0
        %v4034 = vadd.f32 0.0, %v4033
        %4035 = vmatmul.f32.gmra.mxu0 %v3893
        %v4036 = vpop.f32.mrf.mxu0
        %v4037 = vadd.f32 0.0, %v4036
        %4038 = vmatmul.f32.gmra.mxu0 %v3894
        %v4039 = vpop.f32.mrf.mxu0
        %v4040 = vadd.f32 0.0, %v4039
        %4041 = vmatmul.f32.gmra.mxu0 %v3895
        %v4042 = vpop.f32.mrf.mxu0
        %v4043 = vadd.f32 0.0, %v4042
        %4044 = vmatmul.f32.gmra.mxu0 %v3896
        %v4045 = vpop.f32.mrf.mxu0
        %v4046 = vadd.f32 0.0, %v4045
        %4047 = vmatmul.f32.gmra.mxu0 %v3897
        %v4048 = vpop.f32.mrf.mxu0
        %v4049 = vadd.f32 0.0, %v4048
        %4050 = vmatmul.f32.gmra.mxu0 %v3898
        %v4051 = vpop.f32.mrf.mxu0
        %v4052 = vadd.f32 0.0, %v4051
        %4053 = vmatmul.f32.gmra.mxu0 %v3899
        %v4054 = vpop.f32.mrf.mxu0
        %v4055 = vadd.f32 0.0, %v4054
        %4056 = vmatmul.f32.gmra.mxu0 %v3900
        %v4057 = vpop.f32.mrf.mxu0
        %v4058 = vadd.f32 0.0, %v4057
        %4059 = vmatmul.f32.gmra.mxu0 %v3901
        %v4060 = vpop.f32.mrf.mxu0
        %v4061 = vadd.f32 0.0, %v4060
        %4062 = vmatmul.f32.gmra.mxu0 %v3902
        %v4063 = vpop.f32.mrf.mxu0
        %v4064 = vadd.f32 0.0, %v4063
        %4065 = vmatmul.f32.gmra.mxu0 %v3903
        %v4066 = vpop.f32.mrf.mxu0
        %v4067 = vadd.f32 0.0, %v4066
        %4068 = vmatmul.f32.gmra.mxu0 %v3904
        %v4069 = vpop.f32.mrf.mxu0
        %v4070 = vadd.f32 0.0, %v4069
        %4071 = vmatmul.f32.gmra.mxu0 %v3905
        %v4072 = vpop.f32.mrf.mxu0
        %v4073 = vadd.f32 0.0, %v4072
        %4074 = vmatmul.f32.gmra.mxu0 %v3906
        %v4075 = vpop.f32.mrf.mxu0
        %v4076 = vadd.f32 0.0, %v4075
        %4077 = vmatmul.f32.gmra.mxu0 %v3907
        %v4078 = vpop.f32.mrf.mxu0
        %v4079 = vadd.f32 0.0, %v4078
        %4080 = vmatmul.f32.gmra.mxu0 %v3908
        %v4081 = vpop.f32.mrf.mxu0
        %v4082 = vadd.f32 0.0, %v4081
        %4083 = vmatmul.f32.gmra.mxu0 %v3909
        %v4084 = vpop.f32.mrf.mxu0
        %v4085 = vadd.f32 0.0, %v4084
        %4086 = vdwg.mxu0
        %4087 = vmatpush.msra.mxu0 %v3860
        %4088 = vmatpush.msra.mxu0 %v3859
        %4089 = vmatpush.msra.mxu0 %v3858
        %4090 = vmatpush.msra.mxu0 %v3857
        %4091 = vmatpush.msra.mxu0 %v3856
        %4092 = vmatpush.msra.mxu0 %v3855
        %4093 = vmatpush.msra.mxu0 %v3854
        %4094 = vmatpush.msra.mxu0 %v3853
        %4095 = vmatpush.msra.mxu0 %v3852
        %4096 = vmatpush.msra.mxu0 %v3851
        %4097 = vmatpush.msra.mxu0 %v3850
        %4098 = vmatpush.msra.mxu0 %v3849
        %4099 = vmatpush.msra.mxu0 %v3848
        %4100 = vmatpush.msra.mxu0 %v3847
        %4101 = vmatpush.msra.mxu0 %v3846
        %4102 = vmatpush.msra.mxu0 %v3845
        %4103 = vmatmul.f32.gmra.mxu0 %v3910
        %v4104 = vpop.f32.mrf.mxu0
        %v4105 = vadd.f32 %v3992, %v4104
        %4106 = vmatmul.f32.gmra.mxu0 %v3911
        %v4107 = vpop.f32.mrf.mxu0
        %v4108 = vadd.f32 %v3995, %v4107
        %4109 = vmatmul.f32.gmra.mxu0 %v3912
        %v4110 = vpop.f32.mrf.mxu0
        %v4111 = vadd.f32 %v3998, %v4110
        %4112 = vmatmul.f32.gmra.mxu0 %v3913
        %v4113 = vpop.f32.mrf.mxu0
        %v4114 = vadd.f32 %v4001, %v4113
        %4115 = vmatmul.f32.gmra.mxu0 %v3914
        %v4116 = vpop.f32.mrf.mxu0
        %v4117 = vadd.f32 %v4004, %v4116
        %4118 = vmatmul.f32.gmra.mxu0 %v3915
        %v4119 = vpop.f32.mrf.mxu0
        %v4120 = vadd.f32 %v4007, %v4119
        %4121 = vmatmul.f32.gmra.mxu0 %v3916
        %v4122 = vpop.f32.mrf.mxu0
        %v4123 = vadd.f32 %v4010, %v4122
        %4124 = vmatmul.f32.gmra.mxu0 %v3917
        %v4125 = vpop.f32.mrf.mxu0
        %v4126 = vadd.f32 %v4013, %v4125
        %4127 = vmatmul.f32.gmra.mxu0 %v3918
        %v4128 = vpop.f32.mrf.mxu0
        %v4129 = vadd.f32 %v4016, %v4128
        %4130 = vmatmul.f32.gmra.mxu0 %v3919
        %v4131 = vpop.f32.mrf.mxu0
        %v4132 = vadd.f32 %v4019, %v4131
        %4133 = vmatmul.f32.gmra.mxu0 %v3920
        %v4134 = vpop.f32.mrf.mxu0
        %v4135 = vadd.f32 %v4022, %v4134
        %4136 = vmatmul.f32.gmra.mxu0 %v3921
        %v4137 = vpop.f32.mrf.mxu0
        %v4138 = vadd.f32 %v4025, %v4137
        %4139 = vmatmul.f32.gmra.mxu0 %v3922
        %v4140 = vpop.f32.mrf.mxu0
        %v4141 = vadd.f32 %v4028, %v4140
        %4142 = vmatmul.f32.gmra.mxu0 %v3923
        %v4143 = vpop.f32.mrf.mxu0
        %v4144 = vadd.f32 %v4031, %v4143
        %4145 = vmatmul.f32.gmra.mxu0 %v3924
        %v4146 = vpop.f32.mrf.mxu0
        %v4147 = vadd.f32 %v4034, %v4146
        %4148 = vmatmul.f32.gmra.mxu0 %v3925
        %v4149 = vpop.f32.mrf.mxu0
        %v4150 = vadd.f32 %v4037, %v4149
        %4151 = vmatmul.f32.gmra.mxu0 %v3926
        %v4152 = vpop.f32.mrf.mxu0
        %v4153 = vadd.f32 %v4040, %v4152
        %4154 = vmatmul.f32.gmra.mxu0 %v3927
        %v4155 = vpop.f32.mrf.mxu0
        %v4156 = vadd.f32 %v4043, %v4155
        %4157 = vmatmul.f32.gmra.mxu0 %v3928
        %v4158 = vpop.f32.mrf.mxu0
        %v4159 = vadd.f32 %v4046, %v4158
        %4160 = vmatmul.f32.gmra.mxu0 %v3929
        %v4161 = vpop.f32.mrf.mxu0
        %v4162 = vadd.f32 %v4049, %v4161
        %4163 = vmatmul.f32.gmra.mxu0 %v3930
        %v4164 = vpop.f32.mrf.mxu0
        %v4165 = vadd.f32 %v4052, %v4164
        %4166 = vmatmul.f32.gmra.mxu0 %v3931
        %v4167 = vpop.f32.mrf.mxu0
        %v4168 = vadd.f32 %v4055, %v4167
        %4169 = vmatmul.f32.gmra.mxu0 %v3932
        %v4170 = vpop.f32.mrf.mxu0
        %v4171 = vadd.f32 %v4058, %v4170
        %4172 = vmatmul.f32.gmra.mxu0 %v3933
        %v4173 = vpop.f32.mrf.mxu0
        %v4174 = vadd.f32 %v4061, %v4173
        %4175 = vmatmul.f32.gmra.mxu0 %v3934
        %v4176 = vpop.f32.mrf.mxu0
        %v4177 = vadd.f32 %v4064, %v4176
        %4178 = vmatmul.f32.gmra.mxu0 %v3935
        %v4179 = vpop.f32.mrf.mxu0
        %v4180 = vadd.f32 %v4067, %v4179
        %4181 = vmatmul.f32.gmra.mxu0 %v3936
        %v4182 = vpop.f32.mrf.mxu0
        %v4183 = vadd.f32 %v4070, %v4182
        %4184 = vmatmul.f32.gmra.mxu0 %v3937
        %v4185 = vpop.f32.mrf.mxu0
        %v4186 = vadd.f32 %v4073, %v4185
        %4187 = vmatmul.f32.gmra.mxu0 %v3938
        %v4188 = vpop.f32.mrf.mxu0
        %v4189 = vadd.f32 %v4076, %v4188
        %4190 = vmatmul.f32.gmra.mxu0 %v3939
        %v4191 = vpop.f32.mrf.mxu0
        %v4192 = vadd.f32 %v4079, %v4191
        %4193 = vmatmul.f32.gmra.mxu0 %v3940
        %v4194 = vpop.f32.mrf.mxu0
        %v4195 = vadd.f32 %v4082, %v4194
        %4196 = vmatmul.f32.gmra.mxu0 %v3941
        %v4197 = vpop.f32.mrf.mxu0
        %v4198 = vadd.f32 %v4085, %v4197
        %4199 = vdwg.mxu0
        %4200 = vmatpush.msra.mxu0 %v3876
        %4201 = vmatpush.msra.mxu0 %v3875
        %4202 = vmatpush.msra.mxu0 %v3874
        %4203 = vmatpush.msra.mxu0 %v3873
        %4204 = vmatpush.msra.mxu0 %v3872
        %4205 = vmatpush.msra.mxu0 %v3871
        %4206 = vmatpush.msra.mxu0 %v3870
        %4207 = vmatpush.msra.mxu0 %v3869
        %4208 = vmatpush.msra.mxu0 %v3868
        %4209 = vmatpush.msra.mxu0 %v3867
        %4210 = vmatpush.msra.mxu0 %v3866
        %4211 = vmatpush.msra.mxu0 %v3865
        %4212 = vmatpush.msra.mxu0 %v3864
        %4213 = vmatpush.msra.mxu0 %v3863
        %4214 = vmatpush.msra.mxu0 %v3862
        %4215 = vmatpush.msra.mxu0 %v3861
        %4216 = vmatmul.f32.gmra.mxu0 %v3942
        %v4217 = vpop.f32.mrf.mxu0
        %v4218 = vadd.f32 %v4105, %v4217
        %4219 = vmatmul.f32.gmra.mxu0 %v3943
        %v4220 = vpop.f32.mrf.mxu0
        %v4221 = vadd.f32 %v4108, %v4220
        %4222 = vmatmul.f32.gmra.mxu0 %v3944
        %v4223 = vpop.f32.mrf.mxu0
        %v4224 = vadd.f32 %v4111, %v4223
        %4225 = vmatmul.f32.gmra.mxu0 %v3945
        %v4226 = vpop.f32.mrf.mxu0
        %v4227 = vadd.f32 %v4114, %v4226
        %4228 = vmatmul.f32.gmra.mxu0 %v3946
        %v4229 = vpop.f32.mrf.mxu0
        %v4230 = vadd.f32 %v4117, %v4229
        %4231 = vmatmul.f32.gmra.mxu0 %v3947
        %v4232 = vpop.f32.mrf.mxu0
        %v4233 = vadd.f32 %v4120, %v4232
        %4234 = vmatmul.f32.gmra.mxu0 %v3948
        %v4235 = vpop.f32.mrf.mxu0
        %v4236 = vadd.f32 %v4123, %v4235
        %4237 = vmatmul.f32.gmra.mxu0 %v3949
        %v4238 = vpop.f32.mrf.mxu0
        %v4239 = vadd.f32 %v4126, %v4238
        %4240 = vmatmul.f32.gmra.mxu0 %v3950
        %v4241 = vpop.f32.mrf.mxu0
        %v4242 = vadd.f32 %v4129, %v4241
        %4243 = vmatmul.f32.gmra.mxu0 %v3951
        %v4244 = vpop.f32.mrf.mxu0
        %v4245 = vadd.f32 %v4132, %v4244
        %4246 = vmatmul.f32.gmra.mxu0 %v3952
        %v4247 = vpop.f32.mrf.mxu0
        %v4248 = vadd.f32 %v4135, %v4247
        %4249 = vmatmul.f32.gmra.mxu0 %v3953
        %v4250 = vpop.f32.mrf.mxu0
        %v4251 = vadd.f32 %v4138, %v4250
        %4252 = vmatmul.f32.gmra.mxu0 %v3954
        %v4253 = vpop.f32.mrf.mxu0
        %v4254 = vadd.f32 %v4141, %v4253
        %4255 = vmatmul.f32.gmra.mxu0 %v3955
        %v4256 = vpop.f32.mrf.mxu0
        %v4257 = vadd.f32 %v4144, %v4256
        %4258 = vmatmul.f32.gmra.mxu0 %v3956
        %v4259 = vpop.f32.mrf.mxu0
        %v4260 = vadd.f32 %v4147, %v4259
        %4261 = vmatmul.f32.gmra.mxu0 %v3957
        %v4262 = vpop.f32.mrf.mxu0
        %v4263 = vadd.f32 %v4150, %v4262
        %4264 = vmatmul.f32.gmra.mxu0 %v3958
        %v4265 = vpop.f32.mrf.mxu0
        %v4266 = vadd.f32 %v4153, %v4265
        %4267 = vmatmul.f32.gmra.mxu0 %v3959
        %v4268 = vpop.f32.mrf.mxu0
        %v4269 = vadd.f32 %v4156, %v4268
        %4270 = vmatmul.f32.gmra.mxu0 %v3960
        %v4271 = vpop.f32.mrf.mxu0
        %v4272 = vadd.f32 %v4159, %v4271
        %4273 = vmatmul.f32.gmra.mxu0 %v3961
        %v4274 = vpop.f32.mrf.mxu0
        %v4275 = vadd.f32 %v4162, %v4274
        %4276 = vmatmul.f32.gmra.mxu0 %v3962
        %v4277 = vpop.f32.mrf.mxu0
        %v4278 = vadd.f32 %v4165, %v4277
        %4279 = vmatmul.f32.gmra.mxu0 %v3963
        %v4280 = vpop.f32.mrf.mxu0
        %v4281 = vadd.f32 %v4168, %v4280
        %4282 = vmatmul.f32.gmra.mxu0 %v3964
        %v4283 = vpop.f32.mrf.mxu0
        %v4284 = vadd.f32 %v4171, %v4283
        %4285 = vmatmul.f32.gmra.mxu0 %v3965
        %v4286 = vpop.f32.mrf.mxu0
        %v4287 = vadd.f32 %v4174, %v4286
        %4288 = vmatmul.f32.gmra.mxu0 %v3966
        %v4289 = vpop.f32.mrf.mxu0
        %v4290 = vadd.f32 %v4177, %v4289
        %4291 = vmatmul.f32.gmra.mxu0 %v3967
        %v4292 = vpop.f32.mrf.mxu0
        %v4293 = vadd.f32 %v4180, %v4292
        %4294 = vmatmul.f32.gmra.mxu0 %v3968
        %v4295 = vpop.f32.mrf.mxu0
        %v4296 = vadd.f32 %v4183, %v4295
        %4297 = vmatmul.f32.gmra.mxu0 %v3969
        %v4298 = vpop.f32.mrf.mxu0
        %v4299 = vadd.f32 %v4186, %v4298
        %4300 = vmatmul.f32.gmra.mxu0 %v3970
        %v4301 = vpop.f32.mrf.mxu0
        %v4302 = vadd.f32 %v4189, %v4301
        %4303 = vmatmul.f32.gmra.mxu0 %v3971
        %v4304 = vpop.f32.mrf.mxu0
        %v4305 = vadd.f32 %v4192, %v4304
        %4306 = vmatmul.f32.gmra.mxu0 %v3972
        %v4307 = vpop.f32.mrf.mxu0
        %v4308 = vadd.f32 %v4195, %v4307
        %4309 = vmatmul.f32.gmra.mxu0 %v3973
        %v4310 = vpop.f32.mrf.mxu0
        %v4311 = vadd.f32 %v4198, %v4310
        %4312 = vdwg.mxu0
        %v4313 = vadd.f32 %v3733, %v4218
        %v4314 = vadd.f32 %v3736, %v4221
        %v4315 = vadd.f32 %v3739, %v4224
        %v4316 = vadd.f32 %v3742, %v4227
        %v4317 = vadd.f32 %v3745, %v4230
        %v4318 = vadd.f32 %v3748, %v4233
        %v4319 = vadd.f32 %v3751, %v4236
        %v4320 = vadd.f32 %v3754, %v4239
        %v4321 = vadd.f32 %v3757, %v4242
        %v4322 = vadd.f32 %v3760, %v4245
        %v4323 = vadd.f32 %v3763, %v4248
        %v4324 = vadd.f32 %v3766, %v4251
        %v4325 = vadd.f32 %v3769, %v4254
        %v4326 = vadd.f32 %v3772, %v4257
        %v4327 = vadd.f32 %v3775, %v4260
        %v4328 = vadd.f32 %v3778, %v4263
        %v4329 = vadd.f32 %v3781, %v4266
        %v4330 = vadd.f32 %v3784, %v4269
        %v4331 = vadd.f32 %v3787, %v4272
        %v4332 = vadd.f32 %v3790, %v4275
        %v4333 = vadd.f32 %v3793, %v4278
        %v4334 = vadd.f32 %v3796, %v4281
        %v4335 = vadd.f32 %v3799, %v4284
        %v4336 = vadd.f32 %v3802, %v4287
        %v4337 = vadd.f32 %v3805, %v4290
        %v4338 = vadd.f32 %v3808, %v4293
        %v4339 = vadd.f32 %v3811, %v4296
        %v4340 = vadd.f32 %v3814, %v4299
        %v4341 = vadd.f32 %v3817, %v4302
        %v4342 = vadd.f32 %v3820, %v4305
        %v4343 = vadd.f32 %v3823, %v4308
        %v4344 = vadd.f32 %v3826, %v4311
        %v4345 = vld [vmem:[%s4] sm:$0x1]
        %v4347 = vperm.slane %v4345, 0
        %v4349 = vadd.f32 %v4313, %v4347
        %v4350 = vadd.f32 %v4314, %v4347
        %v4351 = vadd.f32 %v4315, %v4347
        %v4352 = vadd.f32 %v4316, %v4347
        %v4353 = vadd.f32 %v4317, %v4347
        %v4354 = vadd.f32 %v4318, %v4347
        %v4355 = vadd.f32 %v4319, %v4347
        %v4356 = vadd.f32 %v4320, %v4347
        %v4357 = vadd.f32 %v4321, %v4347
        %v4358 = vadd.f32 %v4322, %v4347
        %v4359 = vadd.f32 %v4323, %v4347
        %v4360 = vadd.f32 %v4324, %v4347
        %v4361 = vadd.f32 %v4325, %v4347
        %v4362 = vadd.f32 %v4326, %v4347
        %v4363 = vadd.f32 %v4327, %v4347
        %v4364 = vadd.f32 %v4328, %v4347
        %v4365 = vadd.f32 %v4329, %v4347
        %v4366 = vadd.f32 %v4330, %v4347
        %v4367 = vadd.f32 %v4331, %v4347
        %v4368 = vadd.f32 %v4332, %v4347
        %v4369 = vadd.f32 %v4333, %v4347
        %v4370 = vadd.f32 %v4334, %v4347
        %v4371 = vadd.f32 %v4335, %v4347
        %v4372 = vadd.f32 %v4336, %v4347
        %v4373 = vadd.f32 %v4337, %v4347
        %v4374 = vadd.f32 %v4338, %v4347
        %v4375 = vadd.f32 %v4339, %v4347
        %v4376 = vadd.f32 %v4340, %v4347
        %v4377 = vadd.f32 %v4341, %v4347
        %v4378 = vadd.f32 %v4342, %v4347
        %v4379 = vadd.f32 %v4343, %v4347
        %v4380 = vadd.f32 %v4344, %v4347
        %v4381 = vmax.f32 %v4349, 0.0
        %v4382 = vmax.f32 %v4350, 0.0
        %v4383 = vmax.f32 %v4351, 0.0
        %v4384 = vmax.f32 %v4352, 0.0
        %v4385 = vmax.f32 %v4353, 0.0
        %v4386 = vmax.f32 %v4354, 0.0
        %v4387 = vmax.f32 %v4355, 0.0
        %v4388 = vmax.f32 %v4356, 0.0
        %v4389 = vmax.f32 %v4357, 0.0
        %v4390 = vmax.f32 %v4358, 0.0
        %v4391 = vmax.f32 %v4359, 0.0
        %v4392 = vmax.f32 %v4360, 0.0
        %v4393 = vmax.f32 %v4361, 0.0
        %v4394 = vmax.f32 %v4362, 0.0
        %v4395 = vmax.f32 %v4363, 0.0
        %v4396 = vmax.f32 %v4364, 0.0
        %v4397 = vmax.f32 %v4365, 0.0
        %v4398 = vmax.f32 %v4366, 0.0
        %v4399 = vmax.f32 %v4367, 0.0
        %v4400 = vmax.f32 %v4368, 0.0
        %v4401 = vmax.f32 %v4369, 0.0
        %v4402 = vmax.f32 %v4370, 0.0
        %v4403 = vmax.f32 %v4371, 0.0
        %v4404 = vmax.f32 %v4372, 0.0
        %v4405 = vmax.f32 %v4373, 0.0
        %v4406 = vmax.f32 %v4374, 0.0
        %v4407 = vmax.f32 %v4375, 0.0
        %v4408 = vmax.f32 %v4376, 0.0
        %v4409 = vmax.f32 %v4377, 0.0
        %v4410 = vmax.f32 %v4378, 0.0
        %v4411 = vmax.f32 %v4379, 0.0
        %v4412 = vmax.f32 %v4380, 0.0
        %v4413 = vadd.f32 %v4381, %v4383
        %v4414 = vadd.f32 %v4382, %v4384
        %v4415 = vadd.f32 %v4385, %v4387
        %v4416 = vadd.f32 %v4386, %v4388
        %v4417 = vadd.f32 %v4389, %v4391
        %v4418 = vadd.f32 %v4390, %v4392
        %v4419 = vadd.f32 %v4393, %v4395
        %v4420 = vadd.f32 %v4394, %v4396
        %v4421 = vadd.f32 %v4397, %v4399
        %v4422 = vadd.f32 %v4398, %v4400
        %v4423 = vadd.f32 %v4401, %v4403
        %v4424 = vadd.f32 %v4402, %v4404
        %v4425 = vadd.f32 %v4405, %v4407
        %v4426 = vadd.f32 %v4406, %v4408
        %v4427 = vadd.f32 %v4409, %v4411
        %v4428 = vadd.f32 %v4410, %v4412
        %v4445 = vrot.slane %v4413, 2
        %v4446 = vrot.slane %v4413, 4
        %v4447 = vrot.slane %v4413, 6
        %v4448 = vrot.slane %v4414, 2
        %v4449 = vrot.slane %v4414, 4
        %v4450 = vrot.slane %v4414, 6
        %v4451 = vrot.slane %v4415, 2
        %v4452 = vrot.slane %v4415, 4
        %v4453 = vrot.slane %v4415, 6
        %v4454 = vrot.slane %v4416, 2
        %v4455 = vrot.slane %v4416, 4
        %v4456 = vrot.slane %v4416, 6
        %v4457 = vrot.slane %v4417, 2
        %v4458 = vrot.slane %v4417, 4
        %v4459 = vrot.slane %v4417, 6
        %v4460 = vrot.slane %v4418, 2
        %v4461 = vrot.slane %v4418, 4
        %v4462 = vrot.slane %v4418, 6
        %v4463 = vrot.slane %v4419, 2
        %v4464 = vrot.slane %v4419, 4
        %v4465 = vrot.slane %v4419, 6
        %v4466 = vrot.slane %v4420, 2
        %v4467 = vrot.slane %v4420, 4
        %v4468 = vrot.slane %v4420, 6
        %v4469 = vrot.slane %v4421, 2
        %v4470 = vrot.slane %v4421, 4
        %v4471 = vrot.slane %v4421, 6
        %v4472 = vrot.slane %v4422, 2
        %v4473 = vrot.slane %v4422, 4
        %v4474 = vrot.slane %v4422, 6
        %v4475 = vrot.slane %v4423, 2
        %v4476 = vrot.slane %v4423, 4
        %v4477 = vrot.slane %v4423, 6
        %v4478 = vrot.slane %v4424, 2
        %v4479 = vrot.slane %v4424, 4
        %v4480 = vrot.slane %v4424, 6
        %v4481 = vrot.slane %v4425, 2
        %v4482 = vrot.slane %v4425, 4
        %v4483 = vrot.slane %v4425, 6
        %v4484 = vrot.slane %v4426, 2
        %v4485 = vrot.slane %v4426, 4
        %v4486 = vrot.slane %v4426, 6
        %v4487 = vrot.slane %v4427, 2
        %v4488 = vrot.slane %v4427, 4
        %v4489 = vrot.slane %v4427, 6
        %v4490 = vrot.slane %v4428, 2
        %v4491 = vrot.slane %v4428, 4
        %v4492 = vrot.slane %v4428, 6
        %v4541 = vrot.slane %v4413, 7
        %v4542 = vrot.slane %v4541, 2
        %v4543 = vrot.slane %v4445, 7
        %v4544 = vrot.slane %v4543, 2
        %v4545 = vrot.slane %v4446, 7
        %v4546 = vrot.slane %v4545, 2
        %v4547 = vrot.slane %v4447, 7
        %v4548 = vrot.slane %v4547, 2
        %v4549 = vrot.slane %v4414, 7
        %v4550 = vrot.slane %v4549, 2
        %v4551 = vrot.slane %v4448, 7
        %v4552 = vrot.slane %v4551, 2
        %v4553 = vrot.slane %v4449, 7
        %v4554 = vrot.slane %v4553, 2
        %v4555 = vrot.slane %v4450, 7
        %v4556 = vrot.slane %v4555, 2
        %v4557 = vrot.slane %v4415, 7
        %v4558 = vrot.slane %v4557, 2
        %v4559 = vrot.slane %v4451, 7
        %v4560 = vrot.slane %v4559, 2
        %v4561 = vrot.slane %v4452, 7
        %v4562 = vrot.slane %v4561, 2
        %v4563 = vrot.slane %v4453, 7
        %v4564 = vrot.slane %v4563, 2
        %v4565 = vrot.slane %v4416, 7
        %v4566 = vrot.slane %v4565, 2
        %v4567 = vrot.slane %v4454, 7
        %v4568 = vrot.slane %v4567, 2
        %v4569 = vrot.slane %v4455, 7
        %v4570 = vrot.slane %v4569, 2
        %v4571 = vrot.slane %v4456, 7
        %v4572 = vrot.slane %v4571, 2
        %v4573 = vrot.slane %v4417, 7
        %v4574 = vrot.slane %v4573, 2
        %v4575 = vrot.slane %v4457, 7
        %v4576 = vrot.slane %v4575, 2
        %v4577 = vrot.slane %v4458, 7
        %v4578 = vrot.slane %v4577, 2
        %v4579 = vrot.slane %v4459, 7
        %v4580 = vrot.slane %v4579, 2
        %v4581 = vrot.slane %v4418, 7
        %v4582 = vrot.slane %v4581, 2
        %v4583 = vrot.slane %v4460, 7
        %v4584 = vrot.slane %v4583, 2
        %v4585 = vrot.slane %v4461, 7
        %v4586 = vrot.slane %v4585, 2
        %v4587 = vrot.slane %v4462, 7
        %v4588 = vrot.slane %v4587, 2
        %v4589 = vrot.slane %v4419, 7
        %v4590 = vrot.slane %v4589, 2
        %v4591 = vrot.slane %v4463, 7
        %v4592 = vrot.slane %v4591, 2
        %v4593 = vrot.slane %v4464, 7
        %v4594 = vrot.slane %v4593, 2
        %v4595 = vrot.slane %v4465, 7
        %v4596 = vrot.slane %v4595, 2
        %v4597 = vrot.slane %v4420, 7
        %v4598 = vrot.slane %v4597, 2
        %v4599 = vrot.slane %v4466, 7
        %v4600 = vrot.slane %v4599, 2
        %v4601 = vrot.slane %v4467, 7
        %v4602 = vrot.slane %v4601, 2
        %v4603 = vrot.slane %v4468, 7
        %v4604 = vrot.slane %v4603, 2
        %v4605 = vrot.slane %v4421, 7
        %v4606 = vrot.slane %v4605, 2
        %v4607 = vrot.slane %v4469, 7
        %v4608 = vrot.slane %v4607, 2
        %v4609 = vrot.slane %v4470, 7
        %v4610 = vrot.slane %v4609, 2
        %v4611 = vrot.slane %v4471, 7
        %v4612 = vrot.slane %v4611, 2
        %v4613 = vrot.slane %v4422, 7
        %v4614 = vrot.slane %v4613, 2
        %v4615 = vrot.slane %v4472, 7
        %v4616 = vrot.slane %v4615, 2
        %v4617 = vrot.slane %v4473, 7
        %v4618 = vrot.slane %v4617, 2
        %v4619 = vrot.slane %v4474, 7
        %v4620 = vrot.slane %v4619, 2
        %v4621 = vrot.slane %v4423, 7
        %v4622 = vrot.slane %v4621, 2
        %v4623 = vrot.slane %v4475, 7
        %v4624 = vrot.slane %v4623, 2
        %v4625 = vrot.slane %v4476, 7
        %v4626 = vrot.slane %v4625, 2
        %v4627 = vrot.slane %v4477, 7
        %v4628 = vrot.slane %v4627, 2
        %v4629 = vrot.slane %v4424, 7
        %v4630 = vrot.slane %v4629, 2
        %v4631 = vrot.slane %v4478, 7
        %v4632 = vrot.slane %v4631, 2
        %v4633 = vrot.slane %v4479, 7
        %v4634 = vrot.slane %v4633, 2
        %v4635 = vrot.slane %v4480, 7
        %v4636 = vrot.slane %v4635, 2
        %v4637 = vrot.slane %v4425, 7
        %v4638 = vrot.slane %v4637, 2
        %v4639 = vrot.slane %v4481, 7
        %v4640 = vrot.slane %v4639, 2
        %v4641 = vrot.slane %v4482, 7
        %v4642 = vrot.slane %v4641, 2
        %v4643 = vrot.slane %v4483, 7
        %v4644 = vrot.slane %v4643, 2
        %v4645 = vrot.slane %v4426, 7
        %v4646 = vrot.slane %v4645, 2
        %v4647 = vrot.slane %v4484, 7
        %v4648 = vrot.slane %v4647, 2
        %v4649 = vrot.slane %v4485, 7
        %v4650 = vrot.slane %v4649, 2
        %v4651 = vrot.slane %v4486, 7
        %v4652 = vrot.slane %v4651, 2
        %v4653 = vrot.slane %v4427, 7
        %v4654 = vrot.slane %v4653, 2
        %v4655 = vrot.slane %v4487, 7
        %v4656 = vrot.slane %v4655, 2
        %v4657 = vrot.slane %v4488, 7
        %v4658 = vrot.slane %v4657, 2
        %v4659 = vrot.slane %v4489, 7
        %v4660 = vrot.slane %v4659, 2
        %v4661 = vrot.slane %v4428, 7
        %v4662 = vrot.slane %v4661, 2
        %v4663 = vrot.slane %v4490, 7
        %v4664 = vrot.slane %v4663, 2
        %v4665 = vrot.slane %v4491, 7
        %v4666 = vrot.slane %v4665, 2
        %v4667 = vrot.slane %v4492, 7
        %v4668 = vrot.slane %v4667, 2
        %v4733 = vadd.f32 %v4413, %v4542
        %v4734 = vadd.f32 %v4445, %v4544
        %v4735 = vadd.f32 %v4446, %v4546
        %v4736 = vadd.f32 %v4447, %v4548
        %v4737 = vadd.f32 %v4414, %v4550
        %v4738 = vadd.f32 %v4448, %v4552
        %v4739 = vadd.f32 %v4449, %v4554
        %v4740 = vadd.f32 %v4450, %v4556
        %v4741 = vadd.f32 %v4415, %v4558
        %v4742 = vadd.f32 %v4451, %v4560
        %v4743 = vadd.f32 %v4452, %v4562
        %v4744 = vadd.f32 %v4453, %v4564
        %v4745 = vadd.f32 %v4416, %v4566
        %v4746 = vadd.f32 %v4454, %v4568
        %v4747 = vadd.f32 %v4455, %v4570
        %v4748 = vadd.f32 %v4456, %v4572
        %v4749 = vadd.f32 %v4417, %v4574
        %v4750 = vadd.f32 %v4457, %v4576
        %v4751 = vadd.f32 %v4458, %v4578
        %v4752 = vadd.f32 %v4459, %v4580
        %v4753 = vadd.f32 %v4418, %v4582
        %v4754 = vadd.f32 %v4460, %v4584
        %v4755 = vadd.f32 %v4461, %v4586
        %v4756 = vadd.f32 %v4462, %v4588
        %v4757 = vadd.f32 %v4419, %v4590
        %v4758 = vadd.f32 %v4463, %v4592
        %v4759 = vadd.f32 %v4464, %v4594
        %v4760 = vadd.f32 %v4465, %v4596
        %v4761 = vadd.f32 %v4420, %v4598
        %v4762 = vadd.f32 %v4466, %v4600
        %v4763 = vadd.f32 %v4467, %v4602
        %v4764 = vadd.f32 %v4468, %v4604
        %v4765 = vadd.f32 %v4421, %v4606
        %v4766 = vadd.f32 %v4469, %v4608
        %v4767 = vadd.f32 %v4470, %v4610
        %v4768 = vadd.f32 %v4471, %v4612
        %v4769 = vadd.f32 %v4422, %v4614
        %v4770 = vadd.f32 %v4472, %v4616
        %v4771 = vadd.f32 %v4473, %v4618
        %v4772 = vadd.f32 %v4474, %v4620
        %v4773 = vadd.f32 %v4423, %v4622
        %v4774 = vadd.f32 %v4475, %v4624
        %v4775 = vadd.f32 %v4476, %v4626
        %v4776 = vadd.f32 %v4477, %v4628
        %v4777 = vadd.f32 %v4424, %v4630
        %v4778 = vadd.f32 %v4478, %v4632
        %v4779 = vadd.f32 %v4479, %v4634
        %v4780 = vadd.f32 %v4480, %v4636
        %v4781 = vadd.f32 %v4425, %v4638
        %v4782 = vadd.f32 %v4481, %v4640
        %v4783 = vadd.f32 %v4482, %v4642
        %v4784 = vadd.f32 %v4483, %v4644
        %v4785 = vadd.f32 %v4426, %v4646
        %v4786 = vadd.f32 %v4484, %v4648
        %v4787 = vadd.f32 %v4485, %v4650
        %v4788 = vadd.f32 %v4486, %v4652
        %v4789 = vadd.f32 %v4427, %v4654
        %v4790 = vadd.f32 %v4487, %v4656
        %v4791 = vadd.f32 %v4488, %v4658
        %v4792 = vadd.f32 %v4489, %v4660
        %v4793 = vadd.f32 %v4428, %v4662
        %v4794 = vadd.f32 %v4490, %v4664
        %v4795 = vadd.f32 %v4491, %v4666
        %v4796 = vadd.f32 %v4492, %v4668
        %v4797 = vmul.f32 %v4733, 0.25
        %v4798 = vmul.f32 %v4734, 0.25
        %v4799 = vmul.f32 %v4735, 0.25
        %v4800 = vmul.f32 %v4736, 0.25
        %v4801 = vmul.f32 %v4737, 0.25
        %v4802 = vmul.f32 %v4738, 0.25
        %v4803 = vmul.f32 %v4739, 0.25
        %v4804 = vmul.f32 %v4740, 0.25
        %v4805 = vmul.f32 %v4741, 0.25
        %v4806 = vmul.f32 %v4742, 0.25
        %v4807 = vmul.f32 %v4743, 0.25
        %v4808 = vmul.f32 %v4744, 0.25
        %v4809 = vmul.f32 %v4745, 0.25
        %v4810 = vmul.f32 %v4746, 0.25
        %v4811 = vmul.f32 %v4747, 0.25
        %v4812 = vmul.f32 %v4748, 0.25
        %v4813 = vmul.f32 %v4749, 0.25
        %v4814 = vmul.f32 %v4750, 0.25
        %v4815 = vmul.f32 %v4751, 0.25
        %v4816 = vmul.f32 %v4752, 0.25
        %v4817 = vmul.f32 %v4753, 0.25
        %v4818 = vmul.f32 %v4754, 0.25
        %v4819 = vmul.f32 %v4755, 0.25
        %v4820 = vmul.f32 %v4756, 0.25
        %v4821 = vmul.f32 %v4757, 0.25
        %v4822 = vmul.f32 %v4758, 0.25
        %v4823 = vmul.f32 %v4759, 0.25
        %v4824 = vmul.f32 %v4760, 0.25
        %v4825 = vmul.f32 %v4761, 0.25
        %v4826 = vmul.f32 %v4762, 0.25
        %v4827 = vmul.f32 %v4763, 0.25
        %v4828 = vmul.f32 %v4764, 0.25
        %v4829 = vmul.f32 %v4765, 0.25
        %v4830 = vmul.f32 %v4766, 0.25
        %v4831 = vmul.f32 %v4767, 0.25
        %v4832 = vmul.f32 %v4768, 0.25
        %v4833 = vmul.f32 %v4769, 0.25
        %v4834 = vmul.f32 %v4770, 0.25
        %v4835 = vmul.f32 %v4771, 0.25
        %v4836 = vmul.f32 %v4772, 0.25
        %v4837 = vmul.f32 %v4773, 0.25
        %v4838 = vmul.f32 %v4774, 0.25
        %v4839 = vmul.f32 %v4775, 0.25
        %v4840 = vmul.f32 %v4776, 0.25
        %v4841 = vmul.f32 %v4777, 0.25
        %v4842 = vmul.f32 %v4778, 0.25
        %v4843 = vmul.f32 %v4779, 0.25
        %v4844 = vmul.f32 %v4780, 0.25
        %v4845 = vmul.f32 %v4781, 0.25
        %v4846 = vmul.f32 %v4782, 0.25
        %v4847 = vmul.f32 %v4783, 0.25
        %v4848 = vmul.f32 %v4784, 0.25
        %v4849 = vmul.f32 %v4785, 0.25
        %v4850 = vmul.f32 %v4786, 0.25
        %v4851 = vmul.f32 %v4787, 0.25
        %v4852 = vmul.f32 %v4788, 0.25
        %v4853 = vmul.f32 %v4789, 0.25
        %v4854 = vmul.f32 %v4790, 0.25
        %v4855 = vmul.f32 %v4791, 0.25
        %v4856 = vmul.f32 %v4792, 0.25
        %v4857 = vmul.f32 %v4793, 0.25
        %v4858 = vmul.f32 %v4794, 0.25
        %v4859 = vmul.f32 %v4795, 0.25
        %v4860 = vmul.f32 %v4796, 0.25
        %v4925 = vperm.slane %v4797, 0
        %v4926 = vperm.slane %v4798, 0
        %v4927 = vperm.slane %v4799, 0
        %v4928 = vperm.slane %v4800, 0
        %v4929 = vperm.slane %v4801, 0
        %v4930 = vperm.slane %v4802, 0
        %v4931 = vperm.slane %v4803, 0
        %v4932 = vperm.slane %v4804, 0
        %v4933 = vperm.slane %v4805, 0
        %v4934 = vperm.slane %v4806, 0
        %v4935 = vperm.slane %v4807, 0
        %v4936 = vperm.slane %v4808, 0
        %v4937 = vperm.slane %v4809, 0
        %v4938 = vperm.slane %v4810, 0
        %v4939 = vperm.slane %v4811, 0
        %v4940 = vperm.slane %v4812, 0
        %v4941 = vperm.slane %v4813, 0
        %v4942 = vperm.slane %v4814, 0
        %v4943 = vperm.slane %v4815, 0
        %v4944 = vperm.slane %v4816, 0
        %v4945 = vperm.slane %v4817, 0
        %v4946 = vperm.slane %v4818, 0
        %v4947 = vperm.slane %v4819, 0
        %v4948 = vperm.slane %v4820, 0
        %v4949 = vperm.slane %v4821, 0
        %v4950 = vperm.slane %v4822, 0
        %v4951 = vperm.slane %v4823, 0
        %v4952 = vperm.slane %v4824, 0
        %v4953 = vperm.slane %v4825, 0
        %v4954 = vperm.slane %v4826, 0
        %v4955 = vperm.slane %v4827, 0
        %v4956 = vperm.slane %v4828, 0
        %v4957 = vperm.slane %v4829, 0
        %v4958 = vperm.slane %v4830, 0
        %v4959 = vperm.slane %v4831, 0
        %v4960 = vperm.slane %v4832, 0
        %v4961 = vperm.slane %v4833, 0
        %v4962 = vperm.slane %v4834, 0
        %v4963 = vperm.slane %v4835, 0
        %v4964 = vperm.slane %v4836, 0
        %v4965 = vperm.slane %v4837, 0
        %v4966 = vperm.slane %v4838, 0
        %v4967 = vperm.slane %v4839, 0
        %v4968 = vperm.slane %v4840, 0
        %v4969 = vperm.slane %v4841, 0
        %v4970 = vperm.slane %v4842, 0
        %v4971 = vperm.slane %v4843, 0
        %v4972 = vperm.slane %v4844, 0
        %v4973 = vperm.slane %v4845, 0
        %v4974 = vperm.slane %v4846, 0
        %v4975 = vperm.slane %v4847, 0
        %v4976 = vperm.slane %v4848, 0
        %v4977 = vperm.slane %v4849, 0
        %v4978 = vperm.slane %v4850, 0
        %v4979 = vperm.slane %v4851, 0
        %v4980 = vperm.slane %v4852, 0
        %v4981 = vperm.slane %v4853, 0
        %v4982 = vperm.slane %v4854, 0
        %v4983 = vperm.slane %v4855, 0
        %v4984 = vperm.slane %v4856, 0
        %v4985 = vperm.slane %v4857, 0
        %v4986 = vperm.slane %v4858, 0
        %v4987 = vperm.slane %v4859, 0
        %v4988 = vperm.slane %v4860, 0
        %vm4989 = vcmask 1041409
        %v4990 = vsel %vm4989, %v4926, %v4925
        %vm4991 = vcmask 1042434
        %v4992 = vsel %vm4991, %v4927, %v4990
        %vm4993 = vcmask 1043459
        %v4994 = vsel %vm4993, %v4928, %v4992
        %vm4995 = vcmask 1044484
        %v4996 = vsel %vm4995, %v4929, %v4994
        %vm4997 = vcmask 1045509
        %v4998 = vsel %vm4997, %v4930, %v4996
        %vm4999 = vcmask 1046534
        %v5000 = vsel %vm4999, %v4931, %v4998
        %vm5001 = vcmask 1047559
        %v5002 = vsel %vm5001, %v4932, %v5000
        %v5003 = vsel %vm4989, %v4934, %v4933
        %v5004 = vsel %vm4991, %v4935, %v5003
        %v5005 = vsel %vm4993, %v4936, %v5004
        %v5006 = vsel %vm4995, %v4937, %v5005
        %v5007 = vsel %vm4997, %v4938, %v5006
        %v5008 = vsel %vm4999, %v4939, %v5007
        %v5009 = vsel %vm5001, %v4940, %v5008
        %v5010 = vsel %vm4989, %v4942, %v4941
        %v5011 = vsel %vm4991, %v4943, %v5010
        %v5012 = vsel %vm4993, %v4944, %v5011
        %v5013 = vsel %vm4995, %v4945, %v5012
        %v5014 = vsel %vm4997, %v4946, %v5013
        %v5015 = vsel %vm4999, %v4947, %v5014
        %v5016 = vsel %vm5001, %v4948, %v5015
        %v5017 = vsel %vm4989, %v4950, %v4949
        %v5018 = vsel %vm4991, %v4951, %v5017
        %v5019 = vsel %vm4993, %v4952, %v5018
        %v5020 = vsel %vm4995, %v4953, %v5019
        %v5021 = vsel %vm4997, %v4954, %v5020
        %v5022 = vsel %vm4999, %v4955, %v5021
        %v5023 = vsel %vm5001, %v4956, %v5022
        %v5024 = vsel %vm4989, %v4958, %v4957
        %v5025 = vsel %vm4991, %v4959, %v5024
        %v5026 = vsel %vm4993, %v4960, %v5025
        %v5027 = vsel %vm4995, %v4961, %v5026
        %v5028 = vsel %vm4997, %v4962, %v5027
        %v5029 = vsel %vm4999, %v4963, %v5028
        %v5030 = vsel %vm5001, %v4964, %v5029
        %v5031 = vsel %vm4989, %v4966, %v4965
        %v5032 = vsel %vm4991, %v4967, %v5031
        %v5033 = vsel %vm4993, %v4968, %v5032
        %v5034 = vsel %vm4995, %v4969, %v5033
        %v5035 = vsel %vm4997, %v4970, %v5034
        %v5036 = vsel %vm4999, %v4971, %v5035
        %v5037 = vsel %vm5001, %v4972, %v5036
        %v5038 = vsel %vm4989, %v4974, %v4973
        %v5039 = vsel %vm4991, %v4975, %v5038
        %v5040 = vsel %vm4993, %v4976, %v5039
        %v5041 = vsel %vm4995, %v4977, %v5040
        %v5042 = vsel %vm4997, %v4978, %v5041
        %v5043 = vsel %vm4999, %v4979, %v5042
        %v5044 = vsel %vm5001, %v4980, %v5043
        %v5045 = vsel %vm4989, %v4982, %v4981
        %v5046 = vsel %vm4991, %v4983, %v5045
        %v5047 = vsel %vm4993, %v4984, %v5046
        %v5048 = vsel %vm4995, %v4985, %v5047
        %v5049 = vsel %vm4997, %v4986, %v5048
        %v5050 = vsel %vm4999, %v4987, %v5049
        %v5051 = vsel %vm5001, %v4988, %v5050
        %5060 = vst [vmem:[%s234] sm:$0xff] %v5002
        %5061 = vst [vmem:[%s234 + $0x8] sm:$0xff] %v5009
        %5062 = vst [vmem:[%s234 + $0x10] sm:$0xff] %v5016
        %5063 = vst [vmem:[%s234 + $0x18] sm:$0xff] %v5023
        %5064 = vst [vmem:[%s234 + $0x20] sm:$0xff] %v5030
        %5065 = vst [vmem:[%s234 + $0x28] sm:$0xff] %v5037
        %5066 = vst [vmem:[%s234 + $0x30] sm:$0xff] %v5044
        %5067 = vst [vmem:[%s234 + $0x38] sm:$0xff] %v5051
        %s5068 = sand.u32 %s138, 1
        %s5069 = scalar_lea.sflag [#allocation6], %s5068
        %s5070 = sand.u32 %s138, 1
        %s5071 = smul.addr %s5070, 64
        %s5072 = scalar_lea.vmem [#allocation7], %s5071
        // Predicated region
        $region45: #{tpu_custom_call.1} parent=39 // pred_check
          %p5073 = pneg %p148
        $region46: #{tpu_custom_call.1} parent=39 // pred_check_branch
          %5075 = sbr.rel (%p5073) target = $region48
        $region47: #{tpu_custom_call.1} parent=39 // pred_region
          %5077 = vsyncadd %s5069, 0
          %s5078 = smul.addr %s20, 8
          %s5079 = smul.addr %s5078, 8
          %s5080 = scalar_lea.hbm %s5, %s5079
          %s5081 = sshll.u32 %s5072, 4
          %s5082 = int_to_ptr.vmem [resolvable:$true] %s5081
          %s5083 = sshll.u32 %s5080, 4
          %s5084 = int_to_ptr.hbm [resolvable:$true] %s5083
          %5089 = dma.vmem_to_hbm [thread:$0]  %s5082, 1024, %s5084, %s5069, 128, 128, 8
        $region48: #{tpu_custom_call.1} parent=39 // pred_fallthru
          _
      $region40: #{tpu_custom_call.1} parent=5 // pred_fallthru
        _
      %p5090 = scmp.le.s32.totalorder 2, %s15
      // Predicated region
      $region49: #{tpu_custom_call.1} parent=5 // pred_check
        %p5091 = pneg %p5090
      $region50: #{tpu_custom_call.1} parent=5 // pred_check_branch
        %5093 = sbr.rel (%p5091) target = $region52
      $region51: #{tpu_custom_call.1} parent=5 // pred_region
        %s5094 = ssub.s32 %s15, 2
        // Predicated region
        $region53: #{tpu_custom_call.1} parent=51 // pred_check
          %p5095 = pneg %p154
        $region54: #{tpu_custom_call.1} parent=51 // pred_check_branch
          %5097 = sbr.rel (%p5095) target = $region56
        $region55: #{tpu_custom_call.1} parent=51 // pred_region
          %s5098 = sand.u32 %s139, 1
          %s5099 = scalar_lea.sflag [#allocation6], %s5098
          %s5100 = sand.u32 %s139, 1
          %s5101 = smul.addr %s5100, 64
          %s5102 = scalar_lea.vmem [#allocation7], %s5101
          %5104 = dma.done %s5099, 1024
        $region56: #{tpu_custom_call.1} parent=51 // pred_fallthru
          _
      $region52: #{tpu_custom_call.1} parent=5 // pred_fallthru
        _
    $region6: #{tpu_custom_call.1} parent=1 // loop_footer
      %s19 = sadd.s32 1, %s15
    $region7: #{tpu_custom_call.1} parent=1 // loop_footer_branch
      %14 = sbr.rel target = $region3
    $region8: #{tpu_custom_call.1} parent=1 // loop_exit
      _
    %5105 = vsyncpa [#allocation5], 1
    %s5106 = scalar_lea.sflag [#allocation5], 1
    %5107 = vsyncpa %s5106, 1
    %5108 = vsyncpa [#allocation6], 1
    %s5109 = scalar_lea.sflag [#allocation6], 1
    %5110 = vsyncpa %s5109, 1

</llo_original>
